<compile_context>
chip_gen: v7x
topology: tpu7x:2x2x1
jax: 0.10.0
libtpu: 0.0.40
codegen_flags: <defaults>
</compile_context>

<pallas_src>
import functools

import jax
import jax.numpy as jnp
from jax import lax
from jax.experimental import pallas as pl
from jax.experimental.pallas import tpu as pltpu  # noqa: F401  (kept for TPU backend import)

# Constants implied by the reference module (yolov5 defaults).
NORMALIZATION_FACTOR = 255.0
DEFAULT_CONF_THRESHOLD = 0.25
DEFAULT_IOU_THRESHOLD = 0.45
DEFAULT_MAX_NUMBER_DETECTION = 20
NUM_CLASSES = 3
P_FIELDS = 5 + NUM_CLASSES  # x, y, w, h, obj, class scores...


def yolo_nms_kernel(x_ref, w_ref, b_ref, out_ref, *, conf_thres, iou_thres, max_det):
    """Fused head + decode + greedy class-agnostic NMS for image 0.

    x_ref: (C, N) raw pixels of image 0; w_ref: (P, C); b_ref: (P, 1)
    out_ref: (8, out_lanes) packed result tile
             rows 0..3 = y1, x1, y2, x2 ; row 4 = score ; row 5 = class (-1 pad).
    """
    # ---- Detection head: normalize, 1x1-conv (matmul), sigmoid. Stays on-chip. ----
    x = x_ref[...] * (1.0 / NORMALIZATION_FACTOR)                       # (C, N)
    logits = jnp.dot(w_ref[...], x, preferred_element_type=jnp.float32) + b_ref[...]
    pred = jax.nn.sigmoid(logits)                                       # (P, N)

    n = pred.shape[1]
    nc = pred.shape[0] - 5

    xc, yc = pred[0:1, :], pred[1:2, :]
    bw, bh = pred[2:3, :], pred[3:4, :]
    obj = pred[4:5, :]
    cls = pred[5:, :]                                                   # (nc, N)

    # scores = class_conf * objectness, then max / argmax over classes.
    scores_all = cls * obj
    best_score = jnp.max(scores_all, axis=0, keepdims=True)             # (1, N)
    cls_iota = lax.broadcasted_iota(jnp.int32, scores_all.shape, 0)
    best_class = jnp.min(
        jnp.where(scores_all == best_score, cls_iota, nc),
        axis=0, keepdims=True).astype(jnp.float32)                      # (1, N)

    # pt_xywh2yxyx_yolo: (x, y, w, h) -> (y1, x1, y2, x2)
    y1 = yc - 0.5 * bh
    x1 = xc - 0.5 * bw
    y2 = yc + 0.5 * bh
    x2 = xc + 0.5 * bw
    area = (y2 - y1) * (x2 - x1)

    # candidates = objectness > conf_thres ; dead entries marked -1.
    cand = obj > conf_thres
    live0 = jnp.where(cand, best_score, -1.0)                           # (1, N)

    # Stack all per-box attributes on sublanes so the per-iteration gather is a
    # single fused masked lane-reduction: rows y1,x1,y2,x2,score,class,area,pad.
    stacked = jnp.concatenate(
        [y1, x1, y2, x2, best_score, best_class, area, jnp.zeros_like(area)],
        axis=0)                                                         # (8, N)

    box_iota = lax.broadcasted_iota(jnp.int32, (1, n), 1)
    lane_iota = lax.broadcasted_iota(jnp.int32, out_ref.shape, 1)       # (8, out_lanes)
    row_iota = lax.broadcasted_iota(jnp.int32, out_ref.shape, 0)
    # Padded slots: boxes/scores = 0, class (row 5) = -1.
    out0 = jnp.where(row_iota == 5, -1.0, 0.0).astype(jnp.float32)

    def body(k, carry):
        live, out = carry
        # --- Selection: exact max + lowest-index tie-break (2 lane reductions). ---
        mx = jnp.max(live)
        sel_ok = mx > 0.0                                               # candidates left?
        is_max = (live == mx) & (live > 0.0)
        sel_idx = jnp.min(jnp.where(is_max, box_iota, n))
        onehot = box_iota == sel_idx                                    # (1, N) single-hot

        # --- Fused gather: one masked reduction for all 8 attribute rows. ---
        picked = jnp.sum(jnp.where(onehot, stacked, 0.0),
                         axis=1, keepdims=True)                         # (8, 1)
        by1, bx1 = picked[0:1, :], picked[1:2, :]
        by2, bx2 = picked[2:3, :], picked[3:4, :]
        bar = picked[6:7, :]

        # --- IoU of the selected box vs all boxes (VPU). ---
        iy1 = jnp.maximum(y1, by1)
        ix1 = jnp.maximum(x1, bx1)
        iy2 = jnp.minimum(y2, by2)
        ix2 = jnp.minimum(x2, bx2)
        inter = jnp.maximum(iy2 - iy1, 0.0) * jnp.maximum(ix2 - ix1, 0.0)
        iou = inter / jnp.maximum(area + bar - inter, 1e-9)

        suppressed = (iou > iou_thres) | onehot
        live = jnp.where(sel_ok & suppressed, -1.0, live)

        # --- Write detection k into the packed output tile (single vreg where). ---
        slot = (lane_iota == k) & sel_ok
        out = jnp.where(slot, picked, out)
        return live, out

    # Short fixed trip count -> fully unroll so the scheduler can overlap iterations.
    _, out = lax.fori_loop(0, max_det, body, (live0, out0), unroll=True)
    out_ref[...] = out


def yolo_nms_pallas(x, w_t, bias, *,
                    conf_thres=DEFAULT_CONF_THRESHOLD,
                    iou_thres=DEFAULT_IOU_THRESHOLD,
                    max_det=DEFAULT_MAX_NUMBER_DETECTION):
    B, C, H, W = x.shape
    N = H * W
    # Only image 0 is needed: the reference forward returns inside the first loop
    # iteration. Slice before the kernel so only C*N*4 bytes are DMA'd.
    x0 = x.reshape(B, C, N)[0]

    out_lanes = max(128, pl.cdiv(max_det, 128) * 128)   # lane-dense packed output tile

    kern = functools.partial(yolo_nms_kernel, conf_thres=conf_thres,
                             iou_thres=iou_thres, max_det=max_det)
    out = pl.pallas_call(
        kern,
        out_shape=jax.ShapeDtypeStruct((8, out_lanes), jnp.float32),
    )(x0, w_t, bias)

    # TODO(synk): torchvision.ops.nms returns a variable-length index list; here the
    # outputs are fixed max_det slots padded with score=0 / class=-1.
    boxes = out[0:4, :max_det].T[None, ...]   # (1, max_det, 4) in yxyx order
    classes = out[5:6, :max_det]              # (1, max_det) float
    scores = out[4:5, :max_det]               # (1, max_det)
    return boxes, classes, scores


if __name__ == "__main__":
    key = jax.random.PRNGKey(0)
    kx, kw, kb = jax.random.split(key, 3)

    B, C, H, W = 2, 4, 16, 16
    x = jax.random.uniform(kx, (B, C, H, W), jnp.float32, 0.0, 255.0)
    # Deterministic synthetic 1x1-conv detection-head parameters.
    w_t = jax.random.normal(kw, (P_FIELDS, C), jnp.float32) * 0.5   # (out_ch, in_ch)
    bias = jax.random.normal(kb, (P_FIELDS, 1), jnp.float32) * 0.1

    boxes, classes, scores = yolo_nms_pallas(x, w_t, bias)
    jax.block_until_ready((boxes, classes, scores))
    print("KERNEL_OK")
</pallas_src>

<mosaic_0001>
module attributes {stable_mosaic.version = 11 : i64} {
  func.func @yolo_nms_kernel(%arg0: memref<4x256xf32, #tpu.memory_space<vmem>>, %arg1: memref<8x4xf32, #tpu.memory_space<vmem>>, %arg2: memref<8x1xf32, #tpu.memory_space<vmem>>, %arg3: memref<8x128xf32, #tpu.memory_space<vmem>>) attributes {dimension_semantics = [], scalar_prefetch = 0 : i64, scratch_operands = 0 : i64, tpu.core_type = #tpu.core_type<tc>} {
    %c0 = arith.constant 0 : index
    %c0_0 = arith.constant 0 : index
    %0 = vector.load %arg0[%c0, %c0_0] : memref<4x256xf32, #tpu.memory_space<vmem>>, vector<4x256xf32>
    %cst = arith.constant 0.00392156886 : f32
    %1 = vector.broadcast %cst : f32 to vector<4x256xf32>
    %2 = arith.mulf %0, %1 : vector<4x256xf32>
    %c0_1 = arith.constant 0 : index
    %c0_2 = arith.constant 0 : index
    %3 = vector.load %arg1[%c0_1, %c0_2] : memref<8x4xf32, #tpu.memory_space<vmem>>, vector<8x4xf32>
    %cst_3 = arith.constant dense<0.000000e+00> : vector<8x256xf32>
    %4 = tpu.matmul %3, %2, %cst_3 {dimension_numbers = #tpu.dot_dimension_numbers<[1], [0], [0], [1], [0, 0, 1, 1], [], []>} : vector<8x4xf32>, vector<4x256xf32>, vector<8x256xf32> -> vector<8x256xf32>
    %c0_4 = arith.constant 0 : index
    %c0_5 = arith.constant 0 : index
    %5 = vector.load %arg2[%c0_4, %c0_5] : memref<8x1xf32, #tpu.memory_space<vmem>>, vector<8x1xf32>
    %6 = vector.broadcast %5 : vector<8x1xf32> to vector<8x256xf32>
    %7 = arith.addf %4, %6 : vector<8x256xf32>
    %8 = arith.negf %7 : vector<8x256xf32>
    %9 = math.exp %8 : vector<8x256xf32>
    %cst_6 = arith.constant 1.000000e+00 : f32
    %10 = vector.broadcast %cst_6 : f32 to vector<8x256xf32>
    %11 = arith.addf %10, %9 : vector<8x256xf32>
    %12 = arith.divf %10, %11 : vector<8x256xf32>
    %13 = vector.extract_strided_slice %12 {offsets = [0, 0], sizes = [1, 256], strides = [1, 1]} : vector<8x256xf32> to vector<1x256xf32>
    %14 = vector.extract_strided_slice %12 {offsets = [1, 0], sizes = [1, 256], strides = [1, 1]} : vector<8x256xf32> to vector<1x256xf32>
    %15 = vector.extract_strided_slice %12 {offsets = [2, 0], sizes = [1, 256], strides = [1, 1]} : vector<8x256xf32> to vector<1x256xf32>
    %16 = vector.extract_strided_slice %12 {offsets = [3, 0], sizes = [1, 256], strides = [1, 1]} : vector<8x256xf32> to vector<1x256xf32>
    %17 = vector.extract_strided_slice %12 {offsets = [4, 0], sizes = [1, 256], strides = [1, 1]} : vector<8x256xf32> to vector<1x256xf32>
    %18 = vector.extract_strided_slice %12 {offsets = [5, 0], sizes = [3, 256], strides = [1, 1]} : vector<8x256xf32> to vector<3x256xf32>
    %19 = vector.broadcast %17 : vector<1x256xf32> to vector<3x256xf32>
    %20 = arith.mulf %18, %19 : vector<3x256xf32>
    %cst_7 = arith.constant dense<0xFF800000> : vector<256xf32>
    %21 = vector.multi_reduction <maximumf>, %20, %cst_7 [0] : vector<3x256xf32> to vector<256xf32>
    %22 = vector.shape_cast %21 : vector<256xf32> to vector<1x256xf32>
    %23 = tpu.iota {dimensions = array<i32: 0>} : vector<3x256xi32>
    %24 = vector.broadcast %22 : vector<1x256xf32> to vector<3x256xf32>
    %25 = arith.cmpf oeq, %20, %24 : vector<3x256xf32>
    %c3_i32 = arith.constant 3 : i32
    %26 = vector.broadcast %c3_i32 : i32 to vector<3x256xi32>
    %27 = arith.select %25, %23, %26 : vector<3x256xi1>, vector<3x256xi32>
    %cst_8 = arith.constant dense<2147483647> : vector<256xi32>
    %28 = vector.multi_reduction <minsi>, %27, %cst_8 [0] : vector<3x256xi32> to vector<256xi32>
    %29 = vector.shape_cast %28 : vector<256xi32> to vector<1x256xi32>
    %30 = arith.sitofp %29 : vector<1x256xi32> to vector<1x256xf32>
    %cst_9 = arith.constant 5.000000e-01 : f32
    %31 = vector.broadcast %cst_9 : f32 to vector<1x256xf32>
    %32 = arith.mulf %31, %16 : vector<1x256xf32>
    %33 = arith.subf %14, %32 : vector<1x256xf32>
    %cst_10 = arith.constant 5.000000e-01 : f32
    %34 = vector.broadcast %cst_10 : f32 to vector<1x256xf32>
    %35 = arith.mulf %34, %15 : vector<1x256xf32>
    %36 = arith.subf %13, %35 : vector<1x256xf32>
    %cst_11 = arith.constant 5.000000e-01 : f32
    %37 = vector.broadcast %cst_11 : f32 to vector<1x256xf32>
    %38 = arith.mulf %37, %16 : vector<1x256xf32>
    %39 = arith.addf %14, %38 : vector<1x256xf32>
    %cst_12 = arith.constant 5.000000e-01 : f32
    %40 = vector.broadcast %cst_12 : f32 to vector<1x256xf32>
    %41 = arith.mulf %40, %15 : vector<1x256xf32>
    %42 = arith.addf %13, %41 : vector<1x256xf32>
    %43 = arith.subf %39, %33 : vector<1x256xf32>
    %44 = arith.subf %42, %36 : vector<1x256xf32>
    %45 = arith.mulf %43, %44 : vector<1x256xf32>
    %cst_13 = arith.constant 2.500000e-01 : f32
    %46 = vector.broadcast %cst_13 : f32 to vector<1x256xf32>
    %47 = arith.cmpf ogt, %17, %46 : vector<1x256xf32>
    %cst_14 = arith.constant -1.000000e+00 : f32
    %48 = vector.broadcast %cst_14 : f32 to vector<1x256xf32>
    %49 = arith.select %47, %22, %48 : vector<1x256xi1>, vector<1x256xf32>
    %cst_15 = arith.constant 0.000000e+00 : f32
    %50 = vector.broadcast %cst_15 : f32 to vector<1x256xf32>
    %51 = tpu.concatenate %33, %36, %39, %42, %22, %30, %45, %50 in 0 : vector<1x256xf32>, vector<1x256xf32>, vector<1x256xf32>, vector<1x256xf32>, vector<1x256xf32>, vector<1x256xf32>, vector<1x256xf32>, vector<1x256xf32> -> vector<8x256xf32>
    %52 = tpu.iota {dimensions = array<i32: 1>} : vector<1x256xi32>
    %53 = tpu.iota {dimensions = array<i32: 1>} : vector<8x128xi32>
    %54 = tpu.iota {dimensions = array<i32: 0>} : vector<8x128xi32>
    %c5_i32 = arith.constant 5 : i32
    %55 = vector.broadcast %c5_i32 : i32 to vector<8x128xi32>
    %56 = arith.cmpi eq, %54, %55 : vector<8x128xi32>
    %cst_16 = arith.constant -1.000000e+00 : f32
    %cst_17 = arith.constant 0.000000e+00 : f32
    %57 = vector.broadcast %cst_16 : f32 to vector<8x128xf32>
    %58 = vector.broadcast %cst_17 : f32 to vector<8x128xf32>
    %59 = arith.select %56, %57, %58 : vector<8x128xi1>, vector<8x128xf32>
    %c0_i32 = arith.constant 0 : i32
    %60 = vector.shape_cast %49 : vector<1x256xf32> to vector<1x1x256xf32>
    %cst_18 = arith.constant dense<0xFF800000> : vector<1xf32>
    %61 = vector.multi_reduction <maximumf>, %60, %cst_18 [1, 2] : vector<1x1x256xf32> to vector<1xf32>
    %62 = vector.shape_cast %61 : vector<1xf32> to vector<1x1x1xf32>
    %63 = vector.extract %62[0, 0, 0] : f32 from vector<1x1x1xf32>
    %cst_19 = arith.constant 0.000000e+00 : f32
    %64 = arith.cmpf ogt, %63, %cst_19 : f32
    %65 = vector.broadcast %63 : f32 to vector<1x256xf32>
    %66 = arith.cmpf oeq, %49, %65 : vector<1x256xf32>
    %cst_20 = arith.constant 0.000000e+00 : f32
    %67 = vector.broadcast %cst_20 : f32 to vector<1x256xf32>
    %68 = arith.cmpf ogt, %49, %67 : vector<1x256xf32>
    %69 = arith.andi %66, %68 : vector<1x256xi1>
    %c256_i32 = arith.constant 256 : i32
    %70 = vector.broadcast %c256_i32 : i32 to vector<1x256xi32>
    %71 = arith.select %69, %52, %70 : vector<1x256xi1>, vector<1x256xi32>
    %72 = vector.shape_cast %71 : vector<1x256xi32> to vector<1x1x256xi32>
    %cst_21 = arith.constant dense<2147483647> : vector<1xi32>
    %73 = vector.multi_reduction <minsi>, %72, %cst_21 [1, 2] : vector<1x1x256xi32> to vector<1xi32>
    %74 = vector.shape_cast %73 : vector<1xi32> to vector<1x1x1xi32>
    %75 = vector.extract %74[0, 0, 0] : i32 from vector<1x1x1xi32>
    %76 = vector.broadcast %75 : i32 to vector<1x256xi32>
    %77 = arith.cmpi eq, %52, %76 : vector<1x256xi32>
    %cst_22 = arith.constant 0.000000e+00 : f32
    %78 = vector.shape_cast %77 : vector<1x256xi1> to vector<1x256xi1>
    %79 = vector.broadcast %78 : vector<1x256xi1> to vector<8x256xi1>
    %80 = vector.broadcast %cst_22 : f32 to vector<8x256xf32>
    %81 = arith.select %79, %51, %80 : vector<8x256xi1>, vector<8x256xf32>
    %cst_23 = arith.constant dense<0.000000e+00> : vector<8xf32>
    %82 = vector.multi_reduction <add>, %81, %cst_23 [1] : vector<8x256xf32> to vector<8xf32>
    %83 = vector.shape_cast %82 : vector<8xf32> to vector<8x1xf32>
    %84 = vector.extract_strided_slice %83 {offsets = [0, 0], sizes = [1, 1], strides = [1, 1]} : vector<8x1xf32> to vector<1x1xf32>
    %85 = vector.extract_strided_slice %83 {offsets = [1, 0], sizes = [1, 1], strides = [1, 1]} : vector<8x1xf32> to vector<1x1xf32>
    %86 = vector.extract_strided_slice %83 {offsets = [2, 0], sizes = [1, 1], strides = [1, 1]} : vector<8x1xf32> to vector<1x1xf32>
    %87 = vector.extract_strided_slice %83 {offsets = [3, 0], sizes = [1, 1], strides = [1, 1]} : vector<8x1xf32> to vector<1x1xf32>
    %88 = vector.extract_strided_slice %83 {offsets = [6, 0], sizes = [1, 1], strides = [1, 1]} : vector<8x1xf32> to vector<1x1xf32>
    %89 = vector.broadcast %84 : vector<1x1xf32> to vector<1x256xf32>
    %90 = arith.maximumf %33, %89 : vector<1x256xf32>
    %91 = vector.broadcast %85 : vector<1x1xf32> to vector<1x256xf32>
    %92 = arith.maximumf %36, %91 : vector<1x256xf32>
    %93 = vector.broadcast %86 : vector<1x1xf32> to vector<1x256xf32>
    %94 = arith.minimumf %39, %93 : vector<1x256xf32>
    %95 = vector.broadcast %87 : vector<1x1xf32> to vector<1x256xf32>
    %96 = arith.minimumf %42, %95 : vector<1x256xf32>
    %97 = arith.subf %94, %90 : vector<1x256xf32>
    %cst_24 = arith.constant 0.000000e+00 : f32
    %98 = vector.broadcast %cst_24 : f32 to vector<1x256xf32>
    %99 = arith.maximumf %97, %98 : vector<1x256xf32>
    %100 = arith.subf %96, %92 : vector<1x256xf32>
    %cst_25 = arith.constant 0.000000e+00 : f32
    %101 = vector.broadcast %cst_25 : f32 to vector<1x256xf32>
    %102 = arith.maximumf %100, %101 : vector<1x256xf32>
    %103 = arith.mulf %99, %102 : vector<1x256xf32>
    %104 = vector.broadcast %88 : vector<1x1xf32> to vector<1x256xf32>
    %105 = arith.addf %45, %104 : vector<1x256xf32>
    %106 = arith.subf %105, %103 : vector<1x256xf32>
    %cst_26 = arith.constant 9.99999971E-10 : f32
    %107 = vector.broadcast %cst_26 : f32 to vector<1x256xf32>
    %108 = arith.maximumf %106, %107 : vector<1x256xf32>
    %109 = arith.divf %103, %108 : vector<1x256xf32>
    %cst_27 = arith.constant 4.500000e-01 : f32
    %110 = vector.broadcast %cst_27 : f32 to vector<1x256xf32>
    %111 = arith.cmpf ogt, %109, %110 : vector<1x256xf32>
    %112 = arith.ori %111, %77 : vector<1x256xi1>
    %113 = vector.broadcast %64 : i1 to vector<1x256xi1>
    %114 = arith.andi %113, %112 : vector<1x256xi1>
    %cst_28 = arith.constant -1.000000e+00 : f32
    %115 = vector.broadcast %cst_28 : f32 to vector<1x256xf32>
    %116 = arith.select %114, %115, %49 : vector<1x256xi1>, vector<1x256xf32>
    %117 = vector.broadcast %c0_i32 : i32 to vector<8x128xi32>
    %118 = arith.cmpi eq, %53, %117 : vector<8x128xi32>
    %119 = vector.broadcast %64 : i1 to vector<8x128xi1>
    %120 = arith.andi %118, %119 : vector<8x128xi1>
    %121 = vector.shape_cast %83 : vector<8x1xf32> to vector<8x1xf32>
    %122 = vector.broadcast %121 : vector<8x1xf32> to vector<8x128xf32>
    %123 = arith.select %120, %122, %59 : vector<8x128xi1>, vector<8x128xf32>
    %c1_i32 = arith.constant 1 : i32
    %124 = vector.shape_cast %116 : vector<1x256xf32> to vector<1x1x256xf32>
    %cst_29 = arith.constant dense<0xFF800000> : vector<1xf32>
    %125 = vector.multi_reduction <maximumf>, %124, %cst_29 [1, 2] : vector<1x1x256xf32> to vector<1xf32>
    %126 = vector.shape_cast %125 : vector<1xf32> to vector<1x1x1xf32>
    %127 = vector.extract %126[0, 0, 0] : f32 from vector<1x1x1xf32>
    %cst_30 = arith.constant 0.000000e+00 : f32
    %128 = arith.cmpf ogt, %127, %cst_30 : f32
    %129 = vector.broadcast %127 : f32 to vector<1x256xf32>
    %130 = arith.cmpf oeq, %116, %129 : vector<1x256xf32>
    %cst_31 = arith.constant 0.000000e+00 : f32
    %131 = vector.broadcast %cst_31 : f32 to vector<1x256xf32>
    %132 = arith.cmpf ogt, %116, %131 : vector<1x256xf32>
    %133 = arith.andi %130, %132 : vector<1x256xi1>
    %c256_i32_32 = arith.constant 256 : i32
    %134 = vector.broadcast %c256_i32_32 : i32 to vector<1x256xi32>
    %135 = arith.select %133, %52, %134 : vector<1x256xi1>, vector<1x256xi32>
    %136 = vector.shape_cast %135 : vector<1x256xi32> to vector<1x1x256xi32>
    %cst_33 = arith.constant dense<2147483647> : vector<1xi32>
    %137 = vector.multi_reduction <minsi>, %136, %cst_33 [1, 2] : vector<1x1x256xi32> to vector<1xi32>
    %138 = vector.shape_cast %137 : vector<1xi32> to vector<1x1x1xi32>
    %139 = vector.extract %138[0, 0, 0] : i32 from vector<1x1x1xi32>
    %140 = vector.broadcast %139 : i32 to vector<1x256xi32>
    %141 = arith.cmpi eq, %52, %140 : vector<1x256xi32>
    %cst_34 = arith.constant 0.000000e+00 : f32
    %142 = vector.shape_cast %141 : vector<1x256xi1> to vector<1x256xi1>
    %143 = vector.broadcast %142 : vector<1x256xi1> to vector<8x256xi1>
    %144 = vector.broadcast %cst_34 : f32 to vector<8x256xf32>
    %145 = arith.select %143, %51, %144 : vector<8x256xi1>, vector<8x256xf32>
    %cst_35 = arith.constant dense<0.000000e+00> : vector<8xf32>
    %146 = vector.multi_reduction <add>, %145, %cst_35 [1] : vector<8x256xf32> to vector<8xf32>
    %147 = vector.shape_cast %146 : vector<8xf32> to vector<8x1xf32>
    %148 = vector.extract_strided_slice %147 {offsets = [0, 0], sizes = [1, 1], strides = [1, 1]} : vector<8x1xf32> to vector<1x1xf32>
    %149 = vector.extract_strided_slice %147 {offsets = [1, 0], sizes = [1, 1], strides = [1, 1]} : vector<8x1xf32> to vector<1x1xf32>
    %150 = vector.extract_strided_slice %147 {offsets = [2, 0], sizes = [1, 1], strides = [1, 1]} : vector<8x1xf32> to vector<1x1xf32>
    %151 = vector.extract_strided_slice %147 {offsets = [3, 0], sizes = [1, 1], strides = [1, 1]} : vector<8x1xf32> to vector<1x1xf32>
    %152 = vector.extract_strided_slice %147 {offsets = [6, 0], sizes = [1, 1], strides = [1, 1]} : vector<8x1xf32> to vector<1x1xf32>
    %153 = vector.broadcast %148 : vector<1x1xf32> to vector<1x256xf32>
    %154 = arith.maximumf %33, %153 : vector<1x256xf32>
    %155 = vector.broadcast %149 : vector<1x1xf32> to vector<1x256xf32>
    %156 = arith.maximumf %36, %155 : vector<1x256xf32>
    %157 = vector.broadcast %150 : vector<1x1xf32> to vector<1x256xf32>
    %158 = arith.minimumf %39, %157 : vector<1x256xf32>
    %159 = vector.broadcast %151 : vector<1x1xf32> to vector<1x256xf32>
    %160 = arith.minimumf %42, %159 : vector<1x256xf32>
    %161 = arith.subf %158, %154 : vector<1x256xf32>
    %cst_36 = arith.constant 0.000000e+00 : f32
    %162 = vector.broadcast %cst_36 : f32 to vector<1x256xf32>
    %163 = arith.maximumf %161, %162 : vector<1x256xf32>
    %164 = arith.subf %160, %156 : vector<1x256xf32>
    %cst_37 = arith.constant 0.000000e+00 : f32
    %165 = vector.broadcast %cst_37 : f32 to vector<1x256xf32>
    %166 = arith.maximumf %164, %165 : vector<1x256xf32>
    %167 = arith.mulf %163, %166 : vector<1x256xf32>
    %168 = vector.broadcast %152 : vector<1x1xf32> to vector<1x256xf32>
    %169 = arith.addf %45, %168 : vector<1x256xf32>
    %170 = arith.subf %169, %167 : vector<1x256xf32>
    %cst_38 = arith.constant 9.99999971E-10 : f32
    %171 = vector.broadcast %cst_38 : f32 to vector<1x256xf32>
    %172 = arith.maximumf %170, %171 : vector<1x256xf32>
    %173 = arith.divf %167, %172 : vector<1x256xf32>
    %cst_39 = arith.constant 4.500000e-01 : f32
    %174 = vector.broadcast %cst_39 : f32 to vector<1x256xf32>
    %175 = arith.cmpf ogt, %173, %174 : vector<1x256xf32>
    %176 = arith.ori %175, %141 : vector<1x256xi1>
    %177 = vector.broadcast %128 : i1 to vector<1x256xi1>
    %178 = arith.andi %177, %176 : vector<1x256xi1>
    %cst_40 = arith.constant -1.000000e+00 : f32
    %179 = vector.broadcast %cst_40 : f32 to vector<1x256xf32>
    %180 = arith.select %178, %179, %116 : vector<1x256xi1>, vector<1x256xf32>
    %181 = vector.broadcast %c1_i32 : i32 to vector<8x128xi32>
    %182 = arith.cmpi eq, %53, %181 : vector<8x128xi32>
    %183 = vector.broadcast %128 : i1 to vector<8x128xi1>
    %184 = arith.andi %182, %183 : vector<8x128xi1>
    %185 = vector.shape_cast %147 : vector<8x1xf32> to vector<8x1xf32>
    %186 = vector.broadcast %185 : vector<8x1xf32> to vector<8x128xf32>
    %187 = arith.select %184, %186, %123 : vector<8x128xi1>, vector<8x128xf32>
    %c2_i32 = arith.constant 2 : i32
    %188 = vector.shape_cast %180 : vector<1x256xf32> to vector<1x1x256xf32>
    %cst_41 = arith.constant dense<0xFF800000> : vector<1xf32>
    %189 = vector.multi_reduction <maximumf>, %188, %cst_41 [1, 2] : vector<1x1x256xf32> to vector<1xf32>
    %190 = vector.shape_cast %189 : vector<1xf32> to vector<1x1x1xf32>
    %191 = vector.extract %190[0, 0, 0] : f32 from vector<1x1x1xf32>
    %cst_42 = arith.constant 0.000000e+00 : f32
    %192 = arith.cmpf ogt, %191, %cst_42 : f32
    %193 = vector.broadcast %191 : f32 to vector<1x256xf32>
    %194 = arith.cmpf oeq, %180, %193 : vector<1x256xf32>
    %cst_43 = arith.constant 0.000000e+00 : f32
    %195 = vector.broadcast %cst_43 : f32 to vector<1x256xf32>
    %196 = arith.cmpf ogt, %180, %195 : vector<1x256xf32>
    %197 = arith.andi %194, %196 : vector<1x256xi1>
    %c256_i32_44 = arith.constant 256 : i32
    %198 = vector.broadcast %c256_i32_44 : i32 to vector<1x256xi32>
    %199 = arith.select %197, %52, %198 : vector<1x256xi1>, vector<1x256xi32>
    %200 = vector.shape_cast %199 : vector<1x256xi32> to vector<1x1x256xi32>
    %cst_45 = arith.constant dense<2147483647> : vector<1xi32>
    %201 = vector.multi_reduction <minsi>, %200, %cst_45 [1, 2] : vector<1x1x256xi32> to vector<1xi32>
    %202 = vector.shape_cast %201 : vector<1xi32> to vector<1x1x1xi32>
    %203 = vector.extract %202[0, 0, 0] : i32 from vector<1x1x1xi32>
    %204 = vector.broadcast %203 : i32 to vector<1x256xi32>
    %205 = arith.cmpi eq, %52, %204 : vector<1x256xi32>
    %cst_46 = arith.constant 0.000000e+00 : f32
    %206 = vector.shape_cast %205 : vector<1x256xi1> to vector<1x256xi1>
    %207 = vector.broadcast %206 : vector<1x256xi1> to vector<8x256xi1>
    %208 = vector.broadcast %cst_46 : f32 to vector<8x256xf32>
    %209 = arith.select %207, %51, %208 : vector<8x256xi1>, vector<8x256xf32>
    %cst_47 = arith.constant dense<0.000000e+00> : vector<8xf32>
    %210 = vector.multi_reduction <add>, %209, %cst_47 [1] : vector<8x256xf32> to vector<8xf32>
    %211 = vector.shape_cast %210 : vector<8xf32> to vector<8x1xf32>
    %212 = vector.extract_strided_slice %211 {offsets = [0, 0], sizes = [1, 1], strides = [1, 1]} : vector<8x1xf32> to vector<1x1xf32>
    %213 = vector.extract_strided_slice %211 {offsets = [1, 0], sizes = [1, 1], strides = [1, 1]} : vector<8x1xf32> to vector<1x1xf32>
    %214 = vector.extract_strided_slice %211 {offsets = [2, 0], sizes = [1, 1], strides = [1, 1]} : vector<8x1xf32> to vector<1x1xf32>
    %215 = vector.extract_strided_slice %211 {offsets = [3, 0], sizes = [1, 1], strides = [1, 1]} : vector<8x1xf32> to vector<1x1xf32>
    %216 = vector.extract_strided_slice %211 {offsets = [6, 0], sizes = [1, 1], strides = [1, 1]} : vector<8x1xf32> to vector<1x1xf32>
    %217 = vector.broadcast %212 : vector<1x1xf32> to vector<1x256xf32>
    %218 = arith.maximumf %33, %217 : vector<1x256xf32>
    %219 = vector.broadcast %213 : vector<1x1xf32> to vector<1x256xf32>
    %220 = arith.maximumf %36, %219 : vector<1x256xf32>
    %221 = vector.broadcast %214 : vector<1x1xf32> to vector<1x256xf32>
    %222 = arith.minimumf %39, %221 : vector<1x256xf32>
    %223 = vector.broadcast %215 : vector<1x1xf32> to vector<1x256xf32>
    %224 = arith.minimumf %42, %223 : vector<1x256xf32>
    %225 = arith.subf %222, %218 : vector<1x256xf32>
    %cst_48 = arith.constant 0.000000e+00 : f32
    %226 = vector.broadcast %cst_48 : f32 to vector<1x256xf32>
    %227 = arith.maximumf %225, %226 : vector<1x256xf32>
    %228 = arith.subf %224, %220 : vector<1x256xf32>
    %cst_49 = arith.constant 0.000000e+00 : f32
    %229 = vector.broadcast %cst_49 : f32 to vector<1x256xf32>
    %230 = arith.maximumf %228, %229 : vector<1x256xf32>
    %231 = arith.mulf %227, %230 : vector<1x256xf32>
    %232 = vector.broadcast %216 : vector<1x1xf32> to vector<1x256xf32>
    %233 = arith.addf %45, %232 : vector<1x256xf32>
    %234 = arith.subf %233, %231 : vector<1x256xf32>
    %cst_50 = arith.constant 9.99999971E-10 : f32
    %235 = vector.broadcast %cst_50 : f32 to vector<1x256xf32>
    %236 = arith.maximumf %234, %235 : vector<1x256xf32>
    %237 = arith.divf %231, %236 : vector<1x256xf32>
    %cst_51 = arith.constant 4.500000e-01 : f32
    %238 = vector.broadcast %cst_51 : f32 to vector<1x256xf32>
    %239 = arith.cmpf ogt, %237, %238 : vector<1x256xf32>
    %240 = arith.ori %239, %205 : vector<1x256xi1>
    %241 = vector.broadcast %192 : i1 to vector<1x256xi1>
    %242 = arith.andi %241, %240 : vector<1x256xi1>
    %cst_52 = arith.constant -1.000000e+00 : f32
    %243 = vector.broadcast %cst_52 : f32 to vector<1x256xf32>
    %244 = arith.select %242, %243, %180 : vector<1x256xi1>, vector<1x256xf32>
    %245 = vector.broadcast %c2_i32 : i32 to vector<8x128xi32>
    %246 = arith.cmpi eq, %53, %245 : vector<8x128xi32>
    %247 = vector.broadcast %192 : i1 to vector<8x128xi1>
    %248 = arith.andi %246, %247 : vector<8x128xi1>
    %249 = vector.shape_cast %211 : vector<8x1xf32> to vector<8x1xf32>
    %250 = vector.broadcast %249 : vector<8x1xf32> to vector<8x128xf32>
    %251 = arith.select %248, %250, %187 : vector<8x128xi1>, vector<8x128xf32>
    %c3_i32_53 = arith.constant 3 : i32
    %252 = vector.shape_cast %244 : vector<1x256xf32> to vector<1x1x256xf32>
    %cst_54 = arith.constant dense<0xFF800000> : vector<1xf32>
    %253 = vector.multi_reduction <maximumf>, %252, %cst_54 [1, 2] : vector<1x1x256xf32> to vector<1xf32>
    %254 = vector.shape_cast %253 : vector<1xf32> to vector<1x1x1xf32>
    %255 = vector.extract %254[0, 0, 0] : f32 from vector<1x1x1xf32>
    %cst_55 = arith.constant 0.000000e+00 : f32
    %256 = arith.cmpf ogt, %255, %cst_55 : f32
    %257 = vector.broadcast %255 : f32 to vector<1x256xf32>
    %258 = arith.cmpf oeq, %244, %257 : vector<1x256xf32>
    %cst_56 = arith.constant 0.000000e+00 : f32
    %259 = vector.broadcast %cst_56 : f32 to vector<1x256xf32>
    %260 = arith.cmpf ogt, %244, %259 : vector<1x256xf32>
    %261 = arith.andi %258, %260 : vector<1x256xi1>
    %c256_i32_57 = arith.constant 256 : i32
    %262 = vector.broadcast %c256_i32_57 : i32 to vector<1x256xi32>
    %263 = arith.select %261, %52, %262 : vector<1x256xi1>, vector<1x256xi32>
    %264 = vector.shape_cast %263 : vector<1x256xi32> to vector<1x1x256xi32>
    %cst_58 = arith.constant dense<2147483647> : vector<1xi32>
    %265 = vector.multi_reduction <minsi>, %264, %cst_58 [1, 2] : vector<1x1x256xi32> to vector<1xi32>
    %266 = vector.shape_cast %265 : vector<1xi32> to vector<1x1x1xi32>
    %267 = vector.extract %266[0, 0, 0] : i32 from vector<1x1x1xi32>
    %268 = vector.broadcast %267 : i32 to vector<1x256xi32>
    %269 = arith.cmpi eq, %52, %268 : vector<1x256xi32>
    %cst_59 = arith.constant 0.000000e+00 : f32
    %270 = vector.shape_cast %269 : vector<1x256xi1> to vector<1x256xi1>
    %271 = vector.broadcast %270 : vector<1x256xi1> to vector<8x256xi1>
    %272 = vector.broadcast %cst_59 : f32 to vector<8x256xf32>
    %273 = arith.select %271, %51, %272 : vector<8x256xi1>, vector<8x256xf32>
    %cst_60 = arith.constant dense<0.000000e+00> : vector<8xf32>
    %274 = vector.multi_reduction <add>, %273, %cst_60 [1] : vector<8x256xf32> to vector<8xf32>
    %275 = vector.shape_cast %274 : vector<8xf32> to vector<8x1xf32>
    %276 = vector.extract_strided_slice %275 {offsets = [0, 0], sizes = [1, 1], strides = [1, 1]} : vector<8x1xf32> to vector<1x1xf32>
    %277 = vector.extract_strided_slice %275 {offsets = [1, 0], sizes = [1, 1], strides = [1, 1]} : vector<8x1xf32> to vector<1x1xf32>
    %278 = vector.extract_strided_slice %275 {offsets = [2, 0], sizes = [1, 1], strides = [1, 1]} : vector<8x1xf32> to vector<1x1xf32>
    %279 = vector.extract_strided_slice %275 {offsets = [3, 0], sizes = [1, 1], strides = [1, 1]} : vector<8x1xf32> to vector<1x1xf32>
    %280 = vector.extract_strided_slice %275 {offsets = [6, 0], sizes = [1, 1], strides = [1, 1]} : vector<8x1xf32> to vector<1x1xf32>
    %281 = vector.broadcast %276 : vector<1x1xf32> to vector<1x256xf32>
    %282 = arith.maximumf %33, %281 : vector<1x256xf32>
    %283 = vector.broadcast %277 : vector<1x1xf32> to vector<1x256xf32>
    %284 = arith.maximumf %36, %283 : vector<1x256xf32>
    %285 = vector.broadcast %278 : vector<1x1xf32> to vector<1x256xf32>
    %286 = arith.minimumf %39, %285 : vector<1x256xf32>
    %287 = vector.broadcast %279 : vector<1x1xf32> to vector<1x256xf32>
    %288 = arith.minimumf %42, %287 : vector<1x256xf32>
    %289 = arith.subf %286, %282 : vector<1x256xf32>
    %cst_61 = arith.constant 0.000000e+00 : f32
    %290 = vector.broadcast %cst_61 : f32 to vector<1x256xf32>
    %291 = arith.maximumf %289, %290 : vector<1x256xf32>
    %292 = arith.subf %288, %284 : vector<1x256xf32>
    %cst_62 = arith.constant 0.000000e+00 : f32
    %293 = vector.broadcast %cst_62 : f32 to vector<1x256xf32>
    %294 = arith.maximumf %292, %293 : vector<1x256xf32>
    %295 = arith.mulf %291, %294 : vector<1x256xf32>
    %296 = vector.broadcast %280 : vector<1x1xf32> to vector<1x256xf32>
    %297 = arith.addf %45, %296 : vector<1x256xf32>
    %298 = arith.subf %297, %295 : vector<1x256xf32>
    %cst_63 = arith.constant 9.99999971E-10 : f32
    %299 = vector.broadcast %cst_63 : f32 to vector<1x256xf32>
    %300 = arith.maximumf %298, %299 : vector<1x256xf32>
    %301 = arith.divf %295, %300 : vector<1x256xf32>
    %cst_64 = arith.constant 4.500000e-01 : f32
    %302 = vector.broadcast %cst_64 : f32 to vector<1x256xf32>
    %303 = arith.cmpf ogt, %301, %302 : vector<1x256xf32>
    %304 = arith.ori %303, %269 : vector<1x256xi1>
    %305 = vector.broadcast %256 : i1 to vector<1x256xi1>
    %306 = arith.andi %305, %304 : vector<1x256xi1>
    %cst_65 = arith.constant -1.000000e+00 : f32
    %307 = vector.broadcast %cst_65 : f32 to vector<1x256xf32>
    %308 = arith.select %306, %307, %244 : vector<1x256xi1>, vector<1x256xf32>
    %309 = vector.broadcast %c3_i32_53 : i32 to vector<8x128xi32>
    %310 = arith.cmpi eq, %53, %309 : vector<8x128xi32>
    %311 = vector.broadcast %256 : i1 to vector<8x128xi1>
    %312 = arith.andi %310, %311 : vector<8x128xi1>
    %313 = vector.shape_cast %275 : vector<8x1xf32> to vector<8x1xf32>
    %314 = vector.broadcast %313 : vector<8x1xf32> to vector<8x128xf32>
    %315 = arith.select %312, %314, %251 : vector<8x128xi1>, vector<8x128xf32>
    %c4_i32 = arith.constant 4 : i32
    %316 = vector.shape_cast %308 : vector<1x256xf32> to vector<1x1x256xf32>
    %cst_66 = arith.constant dense<0xFF800000> : vector<1xf32>
    %317 = vector.multi_reduction <maximumf>, %316, %cst_66 [1, 2] : vector<1x1x256xf32> to vector<1xf32>
    %318 = vector.shape_cast %317 : vector<1xf32> to vector<1x1x1xf32>
    %319 = vector.extract %318[0, 0, 0] : f32 from vector<1x1x1xf32>
    %cst_67 = arith.constant 0.000000e+00 : f32
    %320 = arith.cmpf ogt, %319, %cst_67 : f32
    %321 = vector.broadcast %319 : f32 to vector<1x256xf32>
    %322 = arith.cmpf oeq, %308, %321 : vector<1x256xf32>
    %cst_68 = arith.constant 0.000000e+00 : f32
    %323 = vector.broadcast %cst_68 : f32 to vector<1x256xf32>
    %324 = arith.cmpf ogt, %308, %323 : vector<1x256xf32>
    %325 = arith.andi %322, %324 : vector<1x256xi1>
    %c256_i32_69 = arith.constant 256 : i32
    %326 = vector.broadcast %c256_i32_69 : i32 to vector<1x256xi32>
    %327 = arith.select %325, %52, %326 : vector<1x256xi1>, vector<1x256xi32>
    %328 = vector.shape_cast %327 : vector<1x256xi32> to vector<1x1x256xi32>
    %cst_70 = arith.constant dense<2147483647> : vector<1xi32>
    %329 = vector.multi_reduction <minsi>, %328, %cst_70 [1, 2] : vector<1x1x256xi32> to vector<1xi32>
    %330 = vector.shape_cast %329 : vector<1xi32> to vector<1x1x1xi32>
    %331 = vector.extract %330[0, 0, 0] : i32 from vector<1x1x1xi32>
    %332 = vector.broadcast %331 : i32 to vector<1x256xi32>
    %333 = arith.cmpi eq, %52, %332 : vector<1x256xi32>
    %cst_71 = arith.constant 0.000000e+00 : f32
    %334 = vector.shape_cast %333 : vector<1x256xi1> to vector<1x256xi1>
    %335 = vector.broadcast %334 : vector<1x256xi1> to vector<8x256xi1>
    %336 = vector.broadcast %cst_71 : f32 to vector<8x256xf32>
    %337 = arith.select %335, %51, %336 : vector<8x256xi1>, vector<8x256xf32>
    %cst_72 = arith.constant dense<0.000000e+00> : vector<8xf32>
    %338 = vector.multi_reduction <add>, %337, %cst_72 [1] : vector<8x256xf32> to vector<8xf32>
    %339 = vector.shape_cast %338 : vector<8xf32> to vector<8x1xf32>
    %340 = vector.extract_strided_slice %339 {offsets = [0, 0], sizes = [1, 1], strides = [1, 1]} : vector<8x1xf32> to vector<1x1xf32>
    %341 = vector.extract_strided_slice %339 {offsets = [1, 0], sizes = [1, 1], strides = [1, 1]} : vector<8x1xf32> to vector<1x1xf32>
    %342 = vector.extract_strided_slice %339 {offsets = [2, 0], sizes = [1, 1], strides = [1, 1]} : vector<8x1xf32> to vector<1x1xf32>
    %343 = vector.extract_strided_slice %339 {offsets = [3, 0], sizes = [1, 1], strides = [1, 1]} : vector<8x1xf32> to vector<1x1xf32>
    %344 = vector.extract_strided_slice %339 {offsets = [6, 0], sizes = [1, 1], strides = [1, 1]} : vector<8x1xf32> to vector<1x1xf32>
    %345 = vector.broadcast %340 : vector<1x1xf32> to vector<1x256xf32>
    %346 = arith.maximumf %33, %345 : vector<1x256xf32>
    %347 = vector.broadcast %341 : vector<1x1xf32> to vector<1x256xf32>
    %348 = arith.maximumf %36, %347 : vector<1x256xf32>
    %349 = vector.broadcast %342 : vector<1x1xf32> to vector<1x256xf32>
    %350 = arith.minimumf %39, %349 : vector<1x256xf32>
    %351 = vector.broadcast %343 : vector<1x1xf32> to vector<1x256xf32>
    %352 = arith.minimumf %42, %351 : vector<1x256xf32>
    %353 = arith.subf %350, %346 : vector<1x256xf32>
    %cst_73 = arith.constant 0.000000e+00 : f32
    %354 = vector.broadcast %cst_73 : f32 to vector<1x256xf32>
    %355 = arith.maximumf %353, %354 : vector<1x256xf32>
    %356 = arith.subf %352, %348 : vector<1x256xf32>
    %cst_74 = arith.constant 0.000000e+00 : f32
    %357 = vector.broadcast %cst_74 : f32 to vector<1x256xf32>
    %358 = arith.maximumf %356, %357 : vector<1x256xf32>
    %359 = arith.mulf %355, %358 : vector<1x256xf32>
    %360 = vector.broadcast %344 : vector<1x1xf32> to vector<1x256xf32>
    %361 = arith.addf %45, %360 : vector<1x256xf32>
    %362 = arith.subf %361, %359 : vector<1x256xf32>
    %cst_75 = arith.constant 9.99999971E-10 : f32
    %363 = vector.broadcast %cst_75 : f32 to vector<1x256xf32>
    %364 = arith.maximumf %362, %363 : vector<1x256xf32>
    %365 = arith.divf %359, %364 : vector<1x256xf32>
    %cst_76 = arith.constant 4.500000e-01 : f32
    %366 = vector.broadcast %cst_76 : f32 to vector<1x256xf32>
    %367 = arith.cmpf ogt, %365, %366 : vector<1x256xf32>
    %368 = arith.ori %367, %333 : vector<1x256xi1>
    %369 = vector.broadcast %320 : i1 to vector<1x256xi1>
    %370 = arith.andi %369, %368 : vector<1x256xi1>
    %cst_77 = arith.constant -1.000000e+00 : f32
    %371 = vector.broadcast %cst_77 : f32 to vector<1x256xf32>
    %372 = arith.select %370, %371, %308 : vector<1x256xi1>, vector<1x256xf32>
    %373 = vector.broadcast %c4_i32 : i32 to vector<8x128xi32>
    %374 = arith.cmpi eq, %53, %373 : vector<8x128xi32>
    %375 = vector.broadcast %320 : i1 to vector<8x128xi1>
    %376 = arith.andi %374, %375 : vector<8x128xi1>
    %377 = vector.shape_cast %339 : vector<8x1xf32> to vector<8x1xf32>
    %378 = vector.broadcast %377 : vector<8x1xf32> to vector<8x128xf32>
    %379 = arith.select %376, %378, %315 : vector<8x128xi1>, vector<8x128xf32>
    %c5_i32_78 = arith.constant 5 : i32
    %380 = vector.shape_cast %372 : vector<1x256xf32> to vector<1x1x256xf32>
    %cst_79 = arith.constant dense<0xFF800000> : vector<1xf32>
    %381 = vector.multi_reduction <maximumf>, %380, %cst_79 [1, 2] : vector<1x1x256xf32> to vector<1xf32>
    %382 = vector.shape_cast %381 : vector<1xf32> to vector<1x1x1xf32>
    %383 = vector.extract %382[0, 0, 0] : f32 from vector<1x1x1xf32>
    %cst_80 = arith.constant 0.000000e+00 : f32
    %384 = arith.cmpf ogt, %383, %cst_80 : f32
    %385 = vector.broadcast %383 : f32 to vector<1x256xf32>
    %386 = arith.cmpf oeq, %372, %385 : vector<1x256xf32>
    %cst_81 = arith.constant 0.000000e+00 : f32
    %387 = vector.broadcast %cst_81 : f32 to vector<1x256xf32>
    %388 = arith.cmpf ogt, %372, %387 : vector<1x256xf32>
    %389 = arith.andi %386, %388 : vector<1x256xi1>
    %c256_i32_82 = arith.constant 256 : i32
    %390 = vector.broadcast %c256_i32_82 : i32 to vector<1x256xi32>
    %391 = arith.select %389, %52, %390 : vector<1x256xi1>, vector<1x256xi32>
    %392 = vector.shape_cast %391 : vector<1x256xi32> to vector<1x1x256xi32>
    %cst_83 = arith.constant dense<2147483647> : vector<1xi32>
    %393 = vector.multi_reduction <minsi>, %392, %cst_83 [1, 2] : vector<1x1x256xi32> to vector<1xi32>
    %394 = vector.shape_cast %393 : vector<1xi32> to vector<1x1x1xi32>
    %395 = vector.extract %394[0, 0, 0] : i32 from vector<1x1x1xi32>
    %396 = vector.broadcast %395 : i32 to vector<1x256xi32>
    %397 = arith.cmpi eq, %52, %396 : vector<1x256xi32>
    %cst_84 = arith.constant 0.000000e+00 : f32
    %398 = vector.shape_cast %397 : vector<1x256xi1> to vector<1x256xi1>
    %399 = vector.broadcast %398 : vector<1x256xi1> to vector<8x256xi1>
    %400 = vector.broadcast %cst_84 : f32 to vector<8x256xf32>
    %401 = arith.select %399, %51, %400 : vector<8x256xi1>, vector<8x256xf32>
    %cst_85 = arith.constant dense<0.000000e+00> : vector<8xf32>
    %402 = vector.multi_reduction <add>, %401, %cst_85 [1] : vector<8x256xf32> to vector<8xf32>
    %403 = vector.shape_cast %402 : vector<8xf32> to vector<8x1xf32>
    %404 = vector.extract_strided_slice %403 {offsets = [0, 0], sizes = [1, 1], strides = [1, 1]} : vector<8x1xf32> to vector<1x1xf32>
    %405 = vector.extract_strided_slice %403 {offsets = [1, 0], sizes = [1, 1], strides = [1, 1]} : vector<8x1xf32> to vector<1x1xf32>
    %406 = vector.extract_strided_slice %403 {offsets = [2, 0], sizes = [1, 1], strides = [1, 1]} : vector<8x1xf32> to vector<1x1xf32>
    %407 = vector.extract_strided_slice %403 {offsets = [3, 0], sizes = [1, 1], strides = [1, 1]} : vector<8x1xf32> to vector<1x1xf32>
    %408 = vector.extract_strided_slice %403 {offsets = [6, 0], sizes = [1, 1], strides = [1, 1]} : vector<8x1xf32> to vector<1x1xf32>
    %409 = vector.broadcast %404 : vector<1x1xf32> to vector<1x256xf32>
    %410 = arith.maximumf %33, %409 : vector<1x256xf32>
    %411 = vector.broadcast %405 : vector<1x1xf32> to vector<1x256xf32>
    %412 = arith.maximumf %36, %411 : vector<1x256xf32>
    %413 = vector.broadcast %406 : vector<1x1xf32> to vector<1x256xf32>
    %414 = arith.minimumf %39, %413 : vector<1x256xf32>
    %415 = vector.broadcast %407 : vector<1x1xf32> to vector<1x256xf32>
    %416 = arith.minimumf %42, %415 : vector<1x256xf32>
    %417 = arith.subf %414, %410 : vector<1x256xf32>
    %cst_86 = arith.constant 0.000000e+00 : f32
    %418 = vector.broadcast %cst_86 : f32 to vector<1x256xf32>
    %419 = arith.maximumf %417, %418 : vector<1x256xf32>
    %420 = arith.subf %416, %412 : vector<1x256xf32>
    %cst_87 = arith.constant 0.000000e+00 : f32
    %421 = vector.broadcast %cst_87 : f32 to vector<1x256xf32>
    %422 = arith.maximumf %420, %421 : vector<1x256xf32>
    %423 = arith.mulf %419, %422 : vector<1x256xf32>
    %424 = vector.broadcast %408 : vector<1x1xf32> to vector<1x256xf32>
    %425 = arith.addf %45, %424 : vector<1x256xf32>
    %426 = arith.subf %425, %423 : vector<1x256xf32>
    %cst_88 = arith.constant 9.99999971E-10 : f32
    %427 = vector.broadcast %cst_88 : f32 to vector<1x256xf32>
    %428 = arith.maximumf %426, %427 : vector<1x256xf32>
    %429 = arith.divf %423, %428 : vector<1x256xf32>
    %cst_89 = arith.constant 4.500000e-01 : f32
    %430 = vector.broadcast %cst_89 : f32 to vector<1x256xf32>
    %431 = arith.cmpf ogt, %429, %430 : vector<1x256xf32>
    %432 = arith.ori %431, %397 : vector<1x256xi1>
    %433 = vector.broadcast %384 : i1 to vector<1x256xi1>
    %434 = arith.andi %433, %432 : vector<1x256xi1>
    %cst_90 = arith.constant -1.000000e+00 : f32
    %435 = vector.broadcast %cst_90 : f32 to vector<1x256xf32>
    %436 = arith.select %434, %435, %372 : vector<1x256xi1>, vector<1x256xf32>
    %437 = vector.broadcast %c5_i32_78 : i32 to vector<8x128xi32>
    %438 = arith.cmpi eq, %53, %437 : vector<8x128xi32>
    %439 = vector.broadcast %384 : i1 to vector<8x128xi1>
    %440 = arith.andi %438, %439 : vector<8x128xi1>
    %441 = vector.shape_cast %403 : vector<8x1xf32> to vector<8x1xf32>
    %442 = vector.broadcast %441 : vector<8x1xf32> to vector<8x128xf32>
    %443 = arith.select %440, %442, %379 : vector<8x128xi1>, vector<8x128xf32>
    %c6_i32 = arith.constant 6 : i32
    %444 = vector.shape_cast %436 : vector<1x256xf32> to vector<1x1x256xf32>
    %cst_91 = arith.constant dense<0xFF800000> : vector<1xf32>
    %445 = vector.multi_reduction <maximumf>, %444, %cst_91 [1, 2] : vector<1x1x256xf32> to vector<1xf32>
    %446 = vector.shape_cast %445 : vector<1xf32> to vector<1x1x1xf32>
    %447 = vector.extract %446[0, 0, 0] : f32 from vector<1x1x1xf32>
    %cst_92 = arith.constant 0.000000e+00 : f32
    %448 = arith.cmpf ogt, %447, %cst_92 : f32
    %449 = vector.broadcast %447 : f32 to vector<1x256xf32>
    %450 = arith.cmpf oeq, %436, %449 : vector<1x256xf32>
    %cst_93 = arith.constant 0.000000e+00 : f32
    %451 = vector.broadcast %cst_93 : f32 to vector<1x256xf32>
    %452 = arith.cmpf ogt, %436, %451 : vector<1x256xf32>
    %453 = arith.andi %450, %452 : vector<1x256xi1>
    %c256_i32_94 = arith.constant 256 : i32
    %454 = vector.broadcast %c256_i32_94 : i32 to vector<1x256xi32>
    %455 = arith.select %453, %52, %454 : vector<1x256xi1>, vector<1x256xi32>
    %456 = vector.shape_cast %455 : vector<1x256xi32> to vector<1x1x256xi32>
    %cst_95 = arith.constant dense<2147483647> : vector<1xi32>
    %457 = vector.multi_reduction <minsi>, %456, %cst_95 [1, 2] : vector<1x1x256xi32> to vector<1xi32>
    %458 = vector.shape_cast %457 : vector<1xi32> to vector<1x1x1xi32>
    %459 = vector.extract %458[0, 0, 0] : i32 from vector<1x1x1xi32>
    %460 = vector.broadcast %459 : i32 to vector<1x256xi32>
    %461 = arith.cmpi eq, %52, %460 : vector<1x256xi32>
    %cst_96 = arith.constant 0.000000e+00 : f32
    %462 = vector.shape_cast %461 : vector<1x256xi1> to vector<1x256xi1>
    %463 = vector.broadcast %462 : vector<1x256xi1> to vector<8x256xi1>
    %464 = vector.broadcast %cst_96 : f32 to vector<8x256xf32>
    %465 = arith.select %463, %51, %464 : vector<8x256xi1>, vector<8x256xf32>
    %cst_97 = arith.constant dense<0.000000e+00> : vector<8xf32>
    %466 = vector.multi_reduction <add>, %465, %cst_97 [1] : vector<8x256xf32> to vector<8xf32>
    %467 = vector.shape_cast %466 : vector<8xf32> to vector<8x1xf32>
    %468 = vector.extract_strided_slice %467 {offsets = [0, 0], sizes = [1, 1], strides = [1, 1]} : vector<8x1xf32> to vector<1x1xf32>
    %469 = vector.extract_strided_slice %467 {offsets = [1, 0], sizes = [1, 1], strides = [1, 1]} : vector<8x1xf32> to vector<1x1xf32>
    %470 = vector.extract_strided_slice %467 {offsets = [2, 0], sizes = [1, 1], strides = [1, 1]} : vector<8x1xf32> to vector<1x1xf32>
    %471 = vector.extract_strided_slice %467 {offsets = [3, 0], sizes = [1, 1], strides = [1, 1]} : vector<8x1xf32> to vector<1x1xf32>
    %472 = vector.extract_strided_slice %467 {offsets = [6, 0], sizes = [1, 1], strides = [1, 1]} : vector<8x1xf32> to vector<1x1xf32>
    %473 = vector.broadcast %468 : vector<1x1xf32> to vector<1x256xf32>
    %474 = arith.maximumf %33, %473 : vector<1x256xf32>
    %475 = vector.broadcast %469 : vector<1x1xf32> to vector<1x256xf32>
    %476 = arith.maximumf %36, %475 : vector<1x256xf32>
    %477 = vector.broadcast %470 : vector<1x1xf32> to vector<1x256xf32>
    %478 = arith.minimumf %39, %477 : vector<1x256xf32>
    %479 = vector.broadcast %471 : vector<1x1xf32> to vector<1x256xf32>
    %480 = arith.minimumf %42, %479 : vector<1x256xf32>
    %481 = arith.subf %478, %474 : vector<1x256xf32>
    %cst_98 = arith.constant 0.000000e+00 : f32
    %482 = vector.broadcast %cst_98 : f32 to vector<1x256xf32>
    %483 = arith.maximumf %481, %482 : vector<1x256xf32>
    %484 = arith.subf %480, %476 : vector<1x256xf32>
    %cst_99 = arith.constant 0.000000e+00 : f32
    %485 = vector.broadcast %cst_99 : f32 to vector<1x256xf32>
    %486 = arith.maximumf %484, %485 : vector<1x256xf32>
    %487 = arith.mulf %483, %486 : vector<1x256xf32>
    %488 = vector.broadcast %472 : vector<1x1xf32> to vector<1x256xf32>
    %489 = arith.addf %45, %488 : vector<1x256xf32>
    %490 = arith.subf %489, %487 : vector<1x256xf32>
    %cst_100 = arith.constant 9.99999971E-10 : f32
    %491 = vector.broadcast %cst_100 : f32 to vector<1x256xf32>
    %492 = arith.maximumf %490, %491 : vector<1x256xf32>
    %493 = arith.divf %487, %492 : vector<1x256xf32>
    %cst_101 = arith.constant 4.500000e-01 : f32
    %494 = vector.broadcast %cst_101 : f32 to vector<1x256xf32>
    %495 = arith.cmpf ogt, %493, %494 : vector<1x256xf32>
    %496 = arith.ori %495, %461 : vector<1x256xi1>
    %497 = vector.broadcast %448 : i1 to vector<1x256xi1>
    %498 = arith.andi %497, %496 : vector<1x256xi1>
    %cst_102 = arith.constant -1.000000e+00 : f32
    %499 = vector.broadcast %cst_102 : f32 to vector<1x256xf32>
    %500 = arith.select %498, %499, %436 : vector<1x256xi1>, vector<1x256xf32>
    %501 = vector.broadcast %c6_i32 : i32 to vector<8x128xi32>
    %502 = arith.cmpi eq, %53, %501 : vector<8x128xi32>
    %503 = vector.broadcast %448 : i1 to vector<8x128xi1>
    %504 = arith.andi %502, %503 : vector<8x128xi1>
    %505 = vector.shape_cast %467 : vector<8x1xf32> to vector<8x1xf32>
    %506 = vector.broadcast %505 : vector<8x1xf32> to vector<8x128xf32>
    %507 = arith.select %504, %506, %443 : vector<8x128xi1>, vector<8x128xf32>
    %c7_i32 = arith.constant 7 : i32
    %508 = vector.shape_cast %500 : vector<1x256xf32> to vector<1x1x256xf32>
    %cst_103 = arith.constant dense<0xFF800000> : vector<1xf32>
    %509 = vector.multi_reduction <maximumf>, %508, %cst_103 [1, 2] : vector<1x1x256xf32> to vector<1xf32>
    %510 = vector.shape_cast %509 : vector<1xf32> to vector<1x1x1xf32>
    %511 = vector.extract %510[0, 0, 0] : f32 from vector<1x1x1xf32>
    %cst_104 = arith.constant 0.000000e+00 : f32
    %512 = arith.cmpf ogt, %511, %cst_104 : f32
    %513 = vector.broadcast %511 : f32 to vector<1x256xf32>
    %514 = arith.cmpf oeq, %500, %513 : vector<1x256xf32>
    %cst_105 = arith.constant 0.000000e+00 : f32
    %515 = vector.broadcast %cst_105 : f32 to vector<1x256xf32>
    %516 = arith.cmpf ogt, %500, %515 : vector<1x256xf32>
    %517 = arith.andi %514, %516 : vector<1x256xi1>
    %c256_i32_106 = arith.constant 256 : i32
    %518 = vector.broadcast %c256_i32_106 : i32 to vector<1x256xi32>
    %519 = arith.select %517, %52, %518 : vector<1x256xi1>, vector<1x256xi32>
    %520 = vector.shape_cast %519 : vector<1x256xi32> to vector<1x1x256xi32>
    %cst_107 = arith.constant dense<2147483647> : vector<1xi32>
    %521 = vector.multi_reduction <minsi>, %520, %cst_107 [1, 2] : vector<1x1x256xi32> to vector<1xi32>
    %522 = vector.shape_cast %521 : vector<1xi32> to vector<1x1x1xi32>
    %523 = vector.extract %522[0, 0, 0] : i32 from vector<1x1x1xi32>
    %524 = vector.broadcast %523 : i32 to vector<1x256xi32>
    %525 = arith.cmpi eq, %52, %524 : vector<1x256xi32>
    %cst_108 = arith.constant 0.000000e+00 : f32
    %526 = vector.shape_cast %525 : vector<1x256xi1> to vector<1x256xi1>
    %527 = vector.broadcast %526 : vector<1x256xi1> to vector<8x256xi1>
    %528 = vector.broadcast %cst_108 : f32 to vector<8x256xf32>
    %529 = arith.select %527, %51, %528 : vector<8x256xi1>, vector<8x256xf32>
    %cst_109 = arith.constant dense<0.000000e+00> : vector<8xf32>
    %530 = vector.multi_reduction <add>, %529, %cst_109 [1] : vector<8x256xf32> to vector<8xf32>
    %531 = vector.shape_cast %530 : vector<8xf32> to vector<8x1xf32>
    %532 = vector.extract_strided_slice %531 {offsets = [0, 0], sizes = [1, 1], strides = [1, 1]} : vector<8x1xf32> to vector<1x1xf32>
    %533 = vector.extract_strided_slice %531 {offsets = [1, 0], sizes = [1, 1], strides = [1, 1]} : vector<8x1xf32> to vector<1x1xf32>
    %534 = vector.extract_strided_slice %531 {offsets = [2, 0], sizes = [1, 1], strides = [1, 1]} : vector<8x1xf32> to vector<1x1xf32>
    %535 = vector.extract_strided_slice %531 {offsets = [3, 0], sizes = [1, 1], strides = [1, 1]} : vector<8x1xf32> to vector<1x1xf32>
    %536 = vector.extract_strided_slice %531 {offsets = [6, 0], sizes = [1, 1], strides = [1, 1]} : vector<8x1xf32> to vector<1x1xf32>
    %537 = vector.broadcast %532 : vector<1x1xf32> to vector<1x256xf32>
    %538 = arith.maximumf %33, %537 : vector<1x256xf32>
    %539 = vector.broadcast %533 : vector<1x1xf32> to vector<1x256xf32>
    %540 = arith.maximumf %36, %539 : vector<1x256xf32>
    %541 = vector.broadcast %534 : vector<1x1xf32> to vector<1x256xf32>
    %542 = arith.minimumf %39, %541 : vector<1x256xf32>
    %543 = vector.broadcast %535 : vector<1x1xf32> to vector<1x256xf32>
    %544 = arith.minimumf %42, %543 : vector<1x256xf32>
    %545 = arith.subf %542, %538 : vector<1x256xf32>
    %cst_110 = arith.constant 0.000000e+00 : f32
    %546 = vector.broadcast %cst_110 : f32 to vector<1x256xf32>
    %547 = arith.maximumf %545, %546 : vector<1x256xf32>
    %548 = arith.subf %544, %540 : vector<1x256xf32>
    %cst_111 = arith.constant 0.000000e+00 : f32
    %549 = vector.broadcast %cst_111 : f32 to vector<1x256xf32>
    %550 = arith.maximumf %548, %549 : vector<1x256xf32>
    %551 = arith.mulf %547, %550 : vector<1x256xf32>
    %552 = vector.broadcast %536 : vector<1x1xf32> to vector<1x256xf32>
    %553 = arith.addf %45, %552 : vector<1x256xf32>
    %554 = arith.subf %553, %551 : vector<1x256xf32>
    %cst_112 = arith.constant 9.99999971E-10 : f32
    %555 = vector.broadcast %cst_112 : f32 to vector<1x256xf32>
    %556 = arith.maximumf %554, %555 : vector<1x256xf32>
    %557 = arith.divf %551, %556 : vector<1x256xf32>
    %cst_113 = arith.constant 4.500000e-01 : f32
    %558 = vector.broadcast %cst_113 : f32 to vector<1x256xf32>
    %559 = arith.cmpf ogt, %557, %558 : vector<1x256xf32>
    %560 = arith.ori %559, %525 : vector<1x256xi1>
    %561 = vector.broadcast %512 : i1 to vector<1x256xi1>
    %562 = arith.andi %561, %560 : vector<1x256xi1>
    %cst_114 = arith.constant -1.000000e+00 : f32
    %563 = vector.broadcast %cst_114 : f32 to vector<1x256xf32>
    %564 = arith.select %562, %563, %500 : vector<1x256xi1>, vector<1x256xf32>
    %565 = vector.broadcast %c7_i32 : i32 to vector<8x128xi32>
    %566 = arith.cmpi eq, %53, %565 : vector<8x128xi32>
    %567 = vector.broadcast %512 : i1 to vector<8x128xi1>
    %568 = arith.andi %566, %567 : vector<8x128xi1>
    %569 = vector.shape_cast %531 : vector<8x1xf32> to vector<8x1xf32>
    %570 = vector.broadcast %569 : vector<8x1xf32> to vector<8x128xf32>
    %571 = arith.select %568, %570, %507 : vector<8x128xi1>, vector<8x128xf32>
    %c8_i32 = arith.constant 8 : i32
    %572 = vector.shape_cast %564 : vector<1x256xf32> to vector<1x1x256xf32>
    %cst_115 = arith.constant dense<0xFF800000> : vector<1xf32>
    %573 = vector.multi_reduction <maximumf>, %572, %cst_115 [1, 2] : vector<1x1x256xf32> to vector<1xf32>
    %574 = vector.shape_cast %573 : vector<1xf32> to vector<1x1x1xf32>
    %575 = vector.extract %574[0, 0, 0] : f32 from vector<1x1x1xf32>
    %cst_116 = arith.constant 0.000000e+00 : f32
    %576 = arith.cmpf ogt, %575, %cst_116 : f32
    %577 = vector.broadcast %575 : f32 to vector<1x256xf32>
    %578 = arith.cmpf oeq, %564, %577 : vector<1x256xf32>
    %cst_117 = arith.constant 0.000000e+00 : f32
    %579 = vector.broadcast %cst_117 : f32 to vector<1x256xf32>
    %580 = arith.cmpf ogt, %564, %579 : vector<1x256xf32>
    %581 = arith.andi %578, %580 : vector<1x256xi1>
    %c256_i32_118 = arith.constant 256 : i32
    %582 = vector.broadcast %c256_i32_118 : i32 to vector<1x256xi32>
    %583 = arith.select %581, %52, %582 : vector<1x256xi1>, vector<1x256xi32>
    %584 = vector.shape_cast %583 : vector<1x256xi32> to vector<1x1x256xi32>
    %cst_119 = arith.constant dense<2147483647> : vector<1xi32>
    %585 = vector.multi_reduction <minsi>, %584, %cst_119 [1, 2] : vector<1x1x256xi32> to vector<1xi32>
    %586 = vector.shape_cast %585 : vector<1xi32> to vector<1x1x1xi32>
    %587 = vector.extract %586[0, 0, 0] : i32 from vector<1x1x1xi32>
    %588 = vector.broadcast %587 : i32 to vector<1x256xi32>
    %589 = arith.cmpi eq, %52, %588 : vector<1x256xi32>
    %cst_120 = arith.constant 0.000000e+00 : f32
    %590 = vector.shape_cast %589 : vector<1x256xi1> to vector<1x256xi1>
    %591 = vector.broadcast %590 : vector<1x256xi1> to vector<8x256xi1>
    %592 = vector.broadcast %cst_120 : f32 to vector<8x256xf32>
    %593 = arith.select %591, %51, %592 : vector<8x256xi1>, vector<8x256xf32>
    %cst_121 = arith.constant dense<0.000000e+00> : vector<8xf32>
    %594 = vector.multi_reduction <add>, %593, %cst_121 [1] : vector<8x256xf32> to vector<8xf32>
    %595 = vector.shape_cast %594 : vector<8xf32> to vector<8x1xf32>
    %596 = vector.extract_strided_slice %595 {offsets = [0, 0], sizes = [1, 1], strides = [1, 1]} : vector<8x1xf32> to vector<1x1xf32>
    %597 = vector.extract_strided_slice %595 {offsets = [1, 0], sizes = [1, 1], strides = [1, 1]} : vector<8x1xf32> to vector<1x1xf32>
    %598 = vector.extract_strided_slice %595 {offsets = [2, 0], sizes = [1, 1], strides = [1, 1]} : vector<8x1xf32> to vector<1x1xf32>
    %599 = vector.extract_strided_slice %595 {offsets = [3, 0], sizes = [1, 1], strides = [1, 1]} : vector<8x1xf32> to vector<1x1xf32>
    %600 = vector.extract_strided_slice %595 {offsets = [6, 0], sizes = [1, 1], strides = [1, 1]} : vector<8x1xf32> to vector<1x1xf32>
    %601 = vector.broadcast %596 : vector<1x1xf32> to vector<1x256xf32>
    %602 = arith.maximumf %33, %601 : vector<1x256xf32>
    %603 = vector.broadcast %597 : vector<1x1xf32> to vector<1x256xf32>
    %604 = arith.maximumf %36, %603 : vector<1x256xf32>
    %605 = vector.broadcast %598 : vector<1x1xf32> to vector<1x256xf32>
    %606 = arith.minimumf %39, %605 : vector<1x256xf32>
    %607 = vector.broadcast %599 : vector<1x1xf32> to vector<1x256xf32>
    %608 = arith.minimumf %42, %607 : vector<1x256xf32>
    %609 = arith.subf %606, %602 : vector<1x256xf32>
    %cst_122 = arith.constant 0.000000e+00 : f32
    %610 = vector.broadcast %cst_122 : f32 to vector<1x256xf32>
    %611 = arith.maximumf %609, %610 : vector<1x256xf32>
    %612 = arith.subf %608, %604 : vector<1x256xf32>
    %cst_123 = arith.constant 0.000000e+00 : f32
    %613 = vector.broadcast %cst_123 : f32 to vector<1x256xf32>
    %614 = arith.maximumf %612, %613 : vector<1x256xf32>
    %615 = arith.mulf %611, %614 : vector<1x256xf32>
    %616 = vector.broadcast %600 : vector<1x1xf32> to vector<1x256xf32>
    %617 = arith.addf %45, %616 : vector<1x256xf32>
    %618 = arith.subf %617, %615 : vector<1x256xf32>
    %cst_124 = arith.constant 9.99999971E-10 : f32
    %619 = vector.broadcast %cst_124 : f32 to vector<1x256xf32>
    %620 = arith.maximumf %618, %619 : vector<1x256xf32>
    %621 = arith.divf %615, %620 : vector<1x256xf32>
    %cst_125 = arith.constant 4.500000e-01 : f32
    %622 = vector.broadcast %cst_125 : f32 to vector<1x256xf32>
    %623 = arith.cmpf ogt, %621, %622 : vector<1x256xf32>
    %624 = arith.ori %623, %589 : vector<1x256xi1>
    %625 = vector.broadcast %576 : i1 to vector<1x256xi1>
    %626 = arith.andi %625, %624 : vector<1x256xi1>
    %cst_126 = arith.constant -1.000000e+00 : f32
    %627 = vector.broadcast %cst_126 : f32 to vector<1x256xf32>
    %628 = arith.select %626, %627, %564 : vector<1x256xi1>, vector<1x256xf32>
    %629 = vector.broadcast %c8_i32 : i32 to vector<8x128xi32>
    %630 = arith.cmpi eq, %53, %629 : vector<8x128xi32>
    %631 = vector.broadcast %576 : i1 to vector<8x128xi1>
    %632 = arith.andi %630, %631 : vector<8x128xi1>
    %633 = vector.shape_cast %595 : vector<8x1xf32> to vector<8x1xf32>
    %634 = vector.broadcast %633 : vector<8x1xf32> to vector<8x128xf32>
    %635 = arith.select %632, %634, %571 : vector<8x128xi1>, vector<8x128xf32>
    %c9_i32 = arith.constant 9 : i32
    %636 = vector.shape_cast %628 : vector<1x256xf32> to vector<1x1x256xf32>
    %cst_127 = arith.constant dense<0xFF800000> : vector<1xf32>
    %637 = vector.multi_reduction <maximumf>, %636, %cst_127 [1, 2] : vector<1x1x256xf32> to vector<1xf32>
    %638 = vector.shape_cast %637 : vector<1xf32> to vector<1x1x1xf32>
    %639 = vector.extract %638[0, 0, 0] : f32 from vector<1x1x1xf32>
    %cst_128 = arith.constant 0.000000e+00 : f32
    %640 = arith.cmpf ogt, %639, %cst_128 : f32
    %641 = vector.broadcast %639 : f32 to vector<1x256xf32>
    %642 = arith.cmpf oeq, %628, %641 : vector<1x256xf32>
    %cst_129 = arith.constant 0.000000e+00 : f32
    %643 = vector.broadcast %cst_129 : f32 to vector<1x256xf32>
    %644 = arith.cmpf ogt, %628, %643 : vector<1x256xf32>
    %645 = arith.andi %642, %644 : vector<1x256xi1>
    %c256_i32_130 = arith.constant 256 : i32
    %646 = vector.broadcast %c256_i32_130 : i32 to vector<1x256xi32>
    %647 = arith.select %645, %52, %646 : vector<1x256xi1>, vector<1x256xi32>
    %648 = vector.shape_cast %647 : vector<1x256xi32> to vector<1x1x256xi32>
    %cst_131 = arith.constant dense<2147483647> : vector<1xi32>
    %649 = vector.multi_reduction <minsi>, %648, %cst_131 [1, 2] : vector<1x1x256xi32> to vector<1xi32>
    %650 = vector.shape_cast %649 : vector<1xi32> to vector<1x1x1xi32>
    %651 = vector.extract %650[0, 0, 0] : i32 from vector<1x1x1xi32>
    %652 = vector.broadcast %651 : i32 to vector<1x256xi32>
    %653 = arith.cmpi eq, %52, %652 : vector<1x256xi32>
    %cst_132 = arith.constant 0.000000e+00 : f32
    %654 = vector.shape_cast %653 : vector<1x256xi1> to vector<1x256xi1>
    %655 = vector.broadcast %654 : vector<1x256xi1> to vector<8x256xi1>
    %656 = vector.broadcast %cst_132 : f32 to vector<8x256xf32>
    %657 = arith.select %655, %51, %656 : vector<8x256xi1>, vector<8x256xf32>
    %cst_133 = arith.constant dense<0.000000e+00> : vector<8xf32>
    %658 = vector.multi_reduction <add>, %657, %cst_133 [1] : vector<8x256xf32> to vector<8xf32>
    %659 = vector.shape_cast %658 : vector<8xf32> to vector<8x1xf32>
    %660 = vector.extract_strided_slice %659 {offsets = [0, 0], sizes = [1, 1], strides = [1, 1]} : vector<8x1xf32> to vector<1x1xf32>
    %661 = vector.extract_strided_slice %659 {offsets = [1, 0], sizes = [1, 1], strides = [1, 1]} : vector<8x1xf32> to vector<1x1xf32>
    %662 = vector.extract_strided_slice %659 {offsets = [2, 0], sizes = [1, 1], strides = [1, 1]} : vector<8x1xf32> to vector<1x1xf32>
    %663 = vector.extract_strided_slice %659 {offsets = [3, 0], sizes = [1, 1], strides = [1, 1]} : vector<8x1xf32> to vector<1x1xf32>
    %664 = vector.extract_strided_slice %659 {offsets = [6, 0], sizes = [1, 1], strides = [1, 1]} : vector<8x1xf32> to vector<1x1xf32>
    %665 = vector.broadcast %660 : vector<1x1xf32> to vector<1x256xf32>
    %666 = arith.maximumf %33, %665 : vector<1x256xf32>
    %667 = vector.broadcast %661 : vector<1x1xf32> to vector<1x256xf32>
    %668 = arith.maximumf %36, %667 : vector<1x256xf32>
    %669 = vector.broadcast %662 : vector<1x1xf32> to vector<1x256xf32>
    %670 = arith.minimumf %39, %669 : vector<1x256xf32>
    %671 = vector.broadcast %663 : vector<1x1xf32> to vector<1x256xf32>
    %672 = arith.minimumf %42, %671 : vector<1x256xf32>
    %673 = arith.subf %670, %666 : vector<1x256xf32>
    %cst_134 = arith.constant 0.000000e+00 : f32
    %674 = vector.broadcast %cst_134 : f32 to vector<1x256xf32>
    %675 = arith.maximumf %673, %674 : vector<1x256xf32>
    %676 = arith.subf %672, %668 : vector<1x256xf32>
    %cst_135 = arith.constant 0.000000e+00 : f32
    %677 = vector.broadcast %cst_135 : f32 to vector<1x256xf32>
    %678 = arith.maximumf %676, %677 : vector<1x256xf32>
    %679 = arith.mulf %675, %678 : vector<1x256xf32>
    %680 = vector.broadcast %664 : vector<1x1xf32> to vector<1x256xf32>
    %681 = arith.addf %45, %680 : vector<1x256xf32>
    %682 = arith.subf %681, %679 : vector<1x256xf32>
    %cst_136 = arith.constant 9.99999971E-10 : f32
    %683 = vector.broadcast %cst_136 : f32 to vector<1x256xf32>
    %684 = arith.maximumf %682, %683 : vector<1x256xf32>
    %685 = arith.divf %679, %684 : vector<1x256xf32>
    %cst_137 = arith.constant 4.500000e-01 : f32
    %686 = vector.broadcast %cst_137 : f32 to vector<1x256xf32>
    %687 = arith.cmpf ogt, %685, %686 : vector<1x256xf32>
    %688 = arith.ori %687, %653 : vector<1x256xi1>
    %689 = vector.broadcast %640 : i1 to vector<1x256xi1>
    %690 = arith.andi %689, %688 : vector<1x256xi1>
    %cst_138 = arith.constant -1.000000e+00 : f32
    %691 = vector.broadcast %cst_138 : f32 to vector<1x256xf32>
    %692 = arith.select %690, %691, %628 : vector<1x256xi1>, vector<1x256xf32>
    %693 = vector.broadcast %c9_i32 : i32 to vector<8x128xi32>
    %694 = arith.cmpi eq, %53, %693 : vector<8x128xi32>
    %695 = vector.broadcast %640 : i1 to vector<8x128xi1>
    %696 = arith.andi %694, %695 : vector<8x128xi1>
    %697 = vector.shape_cast %659 : vector<8x1xf32> to vector<8x1xf32>
    %698 = vector.broadcast %697 : vector<8x1xf32> to vector<8x128xf32>
    %699 = arith.select %696, %698, %635 : vector<8x128xi1>, vector<8x128xf32>
    %c10_i32 = arith.constant 10 : i32
    %700 = vector.shape_cast %692 : vector<1x256xf32> to vector<1x1x256xf32>
    %cst_139 = arith.constant dense<0xFF800000> : vector<1xf32>
    %701 = vector.multi_reduction <maximumf>, %700, %cst_139 [1, 2] : vector<1x1x256xf32> to vector<1xf32>
    %702 = vector.shape_cast %701 : vector<1xf32> to vector<1x1x1xf32>
    %703 = vector.extract %702[0, 0, 0] : f32 from vector<1x1x1xf32>
    %cst_140 = arith.constant 0.000000e+00 : f32
    %704 = arith.cmpf ogt, %703, %cst_140 : f32
    %705 = vector.broadcast %703 : f32 to vector<1x256xf32>
    %706 = arith.cmpf oeq, %692, %705 : vector<1x256xf32>
    %cst_141 = arith.constant 0.000000e+00 : f32
    %707 = vector.broadcast %cst_141 : f32 to vector<1x256xf32>
    %708 = arith.cmpf ogt, %692, %707 : vector<1x256xf32>
    %709 = arith.andi %706, %708 : vector<1x256xi1>
    %c256_i32_142 = arith.constant 256 : i32
    %710 = vector.broadcast %c256_i32_142 : i32 to vector<1x256xi32>
    %711 = arith.select %709, %52, %710 : vector<1x256xi1>, vector<1x256xi32>
    %712 = vector.shape_cast %711 : vector<1x256xi32> to vector<1x1x256xi32>
    %cst_143 = arith.constant dense<2147483647> : vector<1xi32>
    %713 = vector.multi_reduction <minsi>, %712, %cst_143 [1, 2] : vector<1x1x256xi32> to vector<1xi32>
    %714 = vector.shape_cast %713 : vector<1xi32> to vector<1x1x1xi32>
    %715 = vector.extract %714[0, 0, 0] : i32 from vector<1x1x1xi32>
    %716 = vector.broadcast %715 : i32 to vector<1x256xi32>
    %717 = arith.cmpi eq, %52, %716 : vector<1x256xi32>
    %cst_144 = arith.constant 0.000000e+00 : f32
    %718 = vector.shape_cast %717 : vector<1x256xi1> to vector<1x256xi1>
    %719 = vector.broadcast %718 : vector<1x256xi1> to vector<8x256xi1>
    %720 = vector.broadcast %cst_144 : f32 to vector<8x256xf32>
    %721 = arith.select %719, %51, %720 : vector<8x256xi1>, vector<8x256xf32>
    %cst_145 = arith.constant dense<0.000000e+00> : vector<8xf32>
    %722 = vector.multi_reduction <add>, %721, %cst_145 [1] : vector<8x256xf32> to vector<8xf32>
    %723 = vector.shape_cast %722 : vector<8xf32> to vector<8x1xf32>
    %724 = vector.extract_strided_slice %723 {offsets = [0, 0], sizes = [1, 1], strides = [1, 1]} : vector<8x1xf32> to vector<1x1xf32>
    %725 = vector.extract_strided_slice %723 {offsets = [1, 0], sizes = [1, 1], strides = [1, 1]} : vector<8x1xf32> to vector<1x1xf32>
    %726 = vector.extract_strided_slice %723 {offsets = [2, 0], sizes = [1, 1], strides = [1, 1]} : vector<8x1xf32> to vector<1x1xf32>
    %727 = vector.extract_strided_slice %723 {offsets = [3, 0], sizes = [1, 1], strides = [1, 1]} : vector<8x1xf32> to vector<1x1xf32>
    %728 = vector.extract_strided_slice %723 {offsets = [6, 0], sizes = [1, 1], strides = [1, 1]} : vector<8x1xf32> to vector<1x1xf32>
    %729 = vector.broadcast %724 : vector<1x1xf32> to vector<1x256xf32>
    %730 = arith.maximumf %33, %729 : vector<1x256xf32>
    %731 = vector.broadcast %725 : vector<1x1xf32> to vector<1x256xf32>
    %732 = arith.maximumf %36, %731 : vector<1x256xf32>
    %733 = vector.broadcast %726 : vector<1x1xf32> to vector<1x256xf32>
    %734 = arith.minimumf %39, %733 : vector<1x256xf32>
    %735 = vector.broadcast %727 : vector<1x1xf32> to vector<1x256xf32>
    %736 = arith.minimumf %42, %735 : vector<1x256xf32>
    %737 = arith.subf %734, %730 : vector<1x256xf32>
    %cst_146 = arith.constant 0.000000e+00 : f32
    %738 = vector.broadcast %cst_146 : f32 to vector<1x256xf32>
    %739 = arith.maximumf %737, %738 : vector<1x256xf32>
    %740 = arith.subf %736, %732 : vector<1x256xf32>
    %cst_147 = arith.constant 0.000000e+00 : f32
    %741 = vector.broadcast %cst_147 : f32 to vector<1x256xf32>
    %742 = arith.maximumf %740, %741 : vector<1x256xf32>
    %743 = arith.mulf %739, %742 : vector<1x256xf32>
    %744 = vector.broadcast %728 : vector<1x1xf32> to vector<1x256xf32>
    %745 = arith.addf %45, %744 : vector<1x256xf32>
    %746 = arith.subf %745, %743 : vector<1x256xf32>
    %cst_148 = arith.constant 9.99999971E-10 : f32
    %747 = vector.broadcast %cst_148 : f32 to vector<1x256xf32>
    %748 = arith.maximumf %746, %747 : vector<1x256xf32>
    %749 = arith.divf %743, %748 : vector<1x256xf32>
    %cst_149 = arith.constant 4.500000e-01 : f32
    %750 = vector.broadcast %cst_149 : f32 to vector<1x256xf32>
    %751 = arith.cmpf ogt, %749, %750 : vector<1x256xf32>
    %752 = arith.ori %751, %717 : vector<1x256xi1>
    %753 = vector.broadcast %704 : i1 to vector<1x256xi1>
    %754 = arith.andi %753, %752 : vector<1x256xi1>
    %cst_150 = arith.constant -1.000000e+00 : f32
    %755 = vector.broadcast %cst_150 : f32 to vector<1x256xf32>
    %756 = arith.select %754, %755, %692 : vector<1x256xi1>, vector<1x256xf32>
    %757 = vector.broadcast %c10_i32 : i32 to vector<8x128xi32>
    %758 = arith.cmpi eq, %53, %757 : vector<8x128xi32>
    %759 = vector.broadcast %704 : i1 to vector<8x128xi1>
    %760 = arith.andi %758, %759 : vector<8x128xi1>
    %761 = vector.shape_cast %723 : vector<8x1xf32> to vector<8x1xf32>
    %762 = vector.broadcast %761 : vector<8x1xf32> to vector<8x128xf32>
    %763 = arith.select %760, %762, %699 : vector<8x128xi1>, vector<8x128xf32>
    %c11_i32 = arith.constant 11 : i32
    %764 = vector.shape_cast %756 : vector<1x256xf32> to vector<1x1x256xf32>
    %cst_151 = arith.constant dense<0xFF800000> : vector<1xf32>
    %765 = vector.multi_reduction <maximumf>, %764, %cst_151 [1, 2] : vector<1x1x256xf32> to vector<1xf32>
    %766 = vector.shape_cast %765 : vector<1xf32> to vector<1x1x1xf32>
    %767 = vector.extract %766[0, 0, 0] : f32 from vector<1x1x1xf32>
    %cst_152 = arith.constant 0.000000e+00 : f32
    %768 = arith.cmpf ogt, %767, %cst_152 : f32
    %769 = vector.broadcast %767 : f32 to vector<1x256xf32>
    %770 = arith.cmpf oeq, %756, %769 : vector<1x256xf32>
    %cst_153 = arith.constant 0.000000e+00 : f32
    %771 = vector.broadcast %cst_153 : f32 to vector<1x256xf32>
    %772 = arith.cmpf ogt, %756, %771 : vector<1x256xf32>
    %773 = arith.andi %770, %772 : vector<1x256xi1>
    %c256_i32_154 = arith.constant 256 : i32
    %774 = vector.broadcast %c256_i32_154 : i32 to vector<1x256xi32>
    %775 = arith.select %773, %52, %774 : vector<1x256xi1>, vector<1x256xi32>
    %776 = vector.shape_cast %775 : vector<1x256xi32> to vector<1x1x256xi32>
    %cst_155 = arith.constant dense<2147483647> : vector<1xi32>
    %777 = vector.multi_reduction <minsi>, %776, %cst_155 [1, 2] : vector<1x1x256xi32> to vector<1xi32>
    %778 = vector.shape_cast %777 : vector<1xi32> to vector<1x1x1xi32>
    %779 = vector.extract %778[0, 0, 0] : i32 from vector<1x1x1xi32>
    %780 = vector.broadcast %779 : i32 to vector<1x256xi32>
    %781 = arith.cmpi eq, %52, %780 : vector<1x256xi32>
    %cst_156 = arith.constant 0.000000e+00 : f32
    %782 = vector.shape_cast %781 : vector<1x256xi1> to vector<1x256xi1>
    %783 = vector.broadcast %782 : vector<1x256xi1> to vector<8x256xi1>
    %784 = vector.broadcast %cst_156 : f32 to vector<8x256xf32>
    %785 = arith.select %783, %51, %784 : vector<8x256xi1>, vector<8x256xf32>
    %cst_157 = arith.constant dense<0.000000e+00> : vector<8xf32>
    %786 = vector.multi_reduction <add>, %785, %cst_157 [1] : vector<8x256xf32> to vector<8xf32>
    %787 = vector.shape_cast %786 : vector<8xf32> to vector<8x1xf32>
    %788 = vector.extract_strided_slice %787 {offsets = [0, 0], sizes = [1, 1], strides = [1, 1]} : vector<8x1xf32> to vector<1x1xf32>
    %789 = vector.extract_strided_slice %787 {offsets = [1, 0], sizes = [1, 1], strides = [1, 1]} : vector<8x1xf32> to vector<1x1xf32>
    %790 = vector.extract_strided_slice %787 {offsets = [2, 0], sizes = [1, 1], strides = [1, 1]} : vector<8x1xf32> to vector<1x1xf32>
    %791 = vector.extract_strided_slice %787 {offsets = [3, 0], sizes = [1, 1], strides = [1, 1]} : vector<8x1xf32> to vector<1x1xf32>
    %792 = vector.extract_strided_slice %787 {offsets = [6, 0], sizes = [1, 1], strides = [1, 1]} : vector<8x1xf32> to vector<1x1xf32>
    %793 = vector.broadcast %788 : vector<1x1xf32> to vector<1x256xf32>
    %794 = arith.maximumf %33, %793 : vector<1x256xf32>
    %795 = vector.broadcast %789 : vector<1x1xf32> to vector<1x256xf32>
    %796 = arith.maximumf %36, %795 : vector<1x256xf32>
    %797 = vector.broadcast %790 : vector<1x1xf32> to vector<1x256xf32>
    %798 = arith.minimumf %39, %797 : vector<1x256xf32>
    %799 = vector.broadcast %791 : vector<1x1xf32> to vector<1x256xf32>
    %800 = arith.minimumf %42, %799 : vector<1x256xf32>
    %801 = arith.subf %798, %794 : vector<1x256xf32>
    %cst_158 = arith.constant 0.000000e+00 : f32
    %802 = vector.broadcast %cst_158 : f32 to vector<1x256xf32>
    %803 = arith.maximumf %801, %802 : vector<1x256xf32>
    %804 = arith.subf %800, %796 : vector<1x256xf32>
    %cst_159 = arith.constant 0.000000e+00 : f32
    %805 = vector.broadcast %cst_159 : f32 to vector<1x256xf32>
    %806 = arith.maximumf %804, %805 : vector<1x256xf32>
    %807 = arith.mulf %803, %806 : vector<1x256xf32>
    %808 = vector.broadcast %792 : vector<1x1xf32> to vector<1x256xf32>
    %809 = arith.addf %45, %808 : vector<1x256xf32>
    %810 = arith.subf %809, %807 : vector<1x256xf32>
    %cst_160 = arith.constant 9.99999971E-10 : f32
    %811 = vector.broadcast %cst_160 : f32 to vector<1x256xf32>
    %812 = arith.maximumf %810, %811 : vector<1x256xf32>
    %813 = arith.divf %807, %812 : vector<1x256xf32>
    %cst_161 = arith.constant 4.500000e-01 : f32
    %814 = vector.broadcast %cst_161 : f32 to vector<1x256xf32>
    %815 = arith.cmpf ogt, %813, %814 : vector<1x256xf32>
    %816 = arith.ori %815, %781 : vector<1x256xi1>
    %817 = vector.broadcast %768 : i1 to vector<1x256xi1>
    %818 = arith.andi %817, %816 : vector<1x256xi1>
    %cst_162 = arith.constant -1.000000e+00 : f32
    %819 = vector.broadcast %cst_162 : f32 to vector<1x256xf32>
    %820 = arith.select %818, %819, %756 : vector<1x256xi1>, vector<1x256xf32>
    %821 = vector.broadcast %c11_i32 : i32 to vector<8x128xi32>
    %822 = arith.cmpi eq, %53, %821 : vector<8x128xi32>
    %823 = vector.broadcast %768 : i1 to vector<8x128xi1>
    %824 = arith.andi %822, %823 : vector<8x128xi1>
    %825 = vector.shape_cast %787 : vector<8x1xf32> to vector<8x1xf32>
    %826 = vector.broadcast %825 : vector<8x1xf32> to vector<8x128xf32>
    %827 = arith.select %824, %826, %763 : vector<8x128xi1>, vector<8x128xf32>
    %c12_i32 = arith.constant 12 : i32
    %828 = vector.shape_cast %820 : vector<1x256xf32> to vector<1x1x256xf32>
    %cst_163 = arith.constant dense<0xFF800000> : vector<1xf32>
    %829 = vector.multi_reduction <maximumf>, %828, %cst_163 [1, 2] : vector<1x1x256xf32> to vector<1xf32>
    %830 = vector.shape_cast %829 : vector<1xf32> to vector<1x1x1xf32>
    %831 = vector.extract %830[0, 0, 0] : f32 from vector<1x1x1xf32>
    %cst_164 = arith.constant 0.000000e+00 : f32
    %832 = arith.cmpf ogt, %831, %cst_164 : f32
    %833 = vector.broadcast %831 : f32 to vector<1x256xf32>
    %834 = arith.cmpf oeq, %820, %833 : vector<1x256xf32>
    %cst_165 = arith.constant 0.000000e+00 : f32
    %835 = vector.broadcast %cst_165 : f32 to vector<1x256xf32>
    %836 = arith.cmpf ogt, %820, %835 : vector<1x256xf32>
    %837 = arith.andi %834, %836 : vector<1x256xi1>
    %c256_i32_166 = arith.constant 256 : i32
    %838 = vector.broadcast %c256_i32_166 : i32 to vector<1x256xi32>
    %839 = arith.select %837, %52, %838 : vector<1x256xi1>, vector<1x256xi32>
    %840 = vector.shape_cast %839 : vector<1x256xi32> to vector<1x1x256xi32>
    %cst_167 = arith.constant dense<2147483647> : vector<1xi32>
    %841 = vector.multi_reduction <minsi>, %840, %cst_167 [1, 2] : vector<1x1x256xi32> to vector<1xi32>
    %842 = vector.shape_cast %841 : vector<1xi32> to vector<1x1x1xi32>
    %843 = vector.extract %842[0, 0, 0] : i32 from vector<1x1x1xi32>
    %844 = vector.broadcast %843 : i32 to vector<1x256xi32>
    %845 = arith.cmpi eq, %52, %844 : vector<1x256xi32>
    %cst_168 = arith.constant 0.000000e+00 : f32
    %846 = vector.shape_cast %845 : vector<1x256xi1> to vector<1x256xi1>
    %847 = vector.broadcast %846 : vector<1x256xi1> to vector<8x256xi1>
    %848 = vector.broadcast %cst_168 : f32 to vector<8x256xf32>
    %849 = arith.select %847, %51, %848 : vector<8x256xi1>, vector<8x256xf32>
    %cst_169 = arith.constant dense<0.000000e+00> : vector<8xf32>
    %850 = vector.multi_reduction <add>, %849, %cst_169 [1] : vector<8x256xf32> to vector<8xf32>
    %851 = vector.shape_cast %850 : vector<8xf32> to vector<8x1xf32>
    %852 = vector.extract_strided_slice %851 {offsets = [0, 0], sizes = [1, 1], strides = [1, 1]} : vector<8x1xf32> to vector<1x1xf32>
    %853 = vector.extract_strided_slice %851 {offsets = [1, 0], sizes = [1, 1], strides = [1, 1]} : vector<8x1xf32> to vector<1x1xf32>
    %854 = vector.extract_strided_slice %851 {offsets = [2, 0], sizes = [1, 1], strides = [1, 1]} : vector<8x1xf32> to vector<1x1xf32>
    %855 = vector.extract_strided_slice %851 {offsets = [3, 0], sizes = [1, 1], strides = [1, 1]} : vector<8x1xf32> to vector<1x1xf32>
    %856 = vector.extract_strided_slice %851 {offsets = [6, 0], sizes = [1, 1], strides = [1, 1]} : vector<8x1xf32> to vector<1x1xf32>
    %857 = vector.broadcast %852 : vector<1x1xf32> to vector<1x256xf32>
    %858 = arith.maximumf %33, %857 : vector<1x256xf32>
    %859 = vector.broadcast %853 : vector<1x1xf32> to vector<1x256xf32>
    %860 = arith.maximumf %36, %859 : vector<1x256xf32>
    %861 = vector.broadcast %854 : vector<1x1xf32> to vector<1x256xf32>
    %862 = arith.minimumf %39, %861 : vector<1x256xf32>
    %863 = vector.broadcast %855 : vector<1x1xf32> to vector<1x256xf32>
    %864 = arith.minimumf %42, %863 : vector<1x256xf32>
    %865 = arith.subf %862, %858 : vector<1x256xf32>
    %cst_170 = arith.constant 0.000000e+00 : f32
    %866 = vector.broadcast %cst_170 : f32 to vector<1x256xf32>
    %867 = arith.maximumf %865, %866 : vector<1x256xf32>
    %868 = arith.subf %864, %860 : vector<1x256xf32>
    %cst_171 = arith.constant 0.000000e+00 : f32
    %869 = vector.broadcast %cst_171 : f32 to vector<1x256xf32>
    %870 = arith.maximumf %868, %869 : vector<1x256xf32>
    %871 = arith.mulf %867, %870 : vector<1x256xf32>
    %872 = vector.broadcast %856 : vector<1x1xf32> to vector<1x256xf32>
    %873 = arith.addf %45, %872 : vector<1x256xf32>
    %874 = arith.subf %873, %871 : vector<1x256xf32>
    %cst_172 = arith.constant 9.99999971E-10 : f32
    %875 = vector.broadcast %cst_172 : f32 to vector<1x256xf32>
    %876 = arith.maximumf %874, %875 : vector<1x256xf32>
    %877 = arith.divf %871, %876 : vector<1x256xf32>
    %cst_173 = arith.constant 4.500000e-01 : f32
    %878 = vector.broadcast %cst_173 : f32 to vector<1x256xf32>
    %879 = arith.cmpf ogt, %877, %878 : vector<1x256xf32>
    %880 = arith.ori %879, %845 : vector<1x256xi1>
    %881 = vector.broadcast %832 : i1 to vector<1x256xi1>
    %882 = arith.andi %881, %880 : vector<1x256xi1>
    %cst_174 = arith.constant -1.000000e+00 : f32
    %883 = vector.broadcast %cst_174 : f32 to vector<1x256xf32>
    %884 = arith.select %882, %883, %820 : vector<1x256xi1>, vector<1x256xf32>
    %885 = vector.broadcast %c12_i32 : i32 to vector<8x128xi32>
    %886 = arith.cmpi eq, %53, %885 : vector<8x128xi32>
    %887 = vector.broadcast %832 : i1 to vector<8x128xi1>
    %888 = arith.andi %886, %887 : vector<8x128xi1>
    %889 = vector.shape_cast %851 : vector<8x1xf32> to vector<8x1xf32>
    %890 = vector.broadcast %889 : vector<8x1xf32> to vector<8x128xf32>
    %891 = arith.select %888, %890, %827 : vector<8x128xi1>, vector<8x128xf32>
    %c13_i32 = arith.constant 13 : i32
    %892 = vector.shape_cast %884 : vector<1x256xf32> to vector<1x1x256xf32>
    %cst_175 = arith.constant dense<0xFF800000> : vector<1xf32>
    %893 = vector.multi_reduction <maximumf>, %892, %cst_175 [1, 2] : vector<1x1x256xf32> to vector<1xf32>
    %894 = vector.shape_cast %893 : vector<1xf32> to vector<1x1x1xf32>
    %895 = vector.extract %894[0, 0, 0] : f32 from vector<1x1x1xf32>
    %cst_176 = arith.constant 0.000000e+00 : f32
    %896 = arith.cmpf ogt, %895, %cst_176 : f32
    %897 = vector.broadcast %895 : f32 to vector<1x256xf32>
    %898 = arith.cmpf oeq, %884, %897 : vector<1x256xf32>
    %cst_177 = arith.constant 0.000000e+00 : f32
    %899 = vector.broadcast %cst_177 : f32 to vector<1x256xf32>
    %900 = arith.cmpf ogt, %884, %899 : vector<1x256xf32>
    %901 = arith.andi %898, %900 : vector<1x256xi1>
    %c256_i32_178 = arith.constant 256 : i32
    %902 = vector.broadcast %c256_i32_178 : i32 to vector<1x256xi32>
    %903 = arith.select %901, %52, %902 : vector<1x256xi1>, vector<1x256xi32>
    %904 = vector.shape_cast %903 : vector<1x256xi32> to vector<1x1x256xi32>
    %cst_179 = arith.constant dense<2147483647> : vector<1xi32>
    %905 = vector.multi_reduction <minsi>, %904, %cst_179 [1, 2] : vector<1x1x256xi32> to vector<1xi32>
    %906 = vector.shape_cast %905 : vector<1xi32> to vector<1x1x1xi32>
    %907 = vector.extract %906[0, 0, 0] : i32 from vector<1x1x1xi32>
    %908 = vector.broadcast %907 : i32 to vector<1x256xi32>
    %909 = arith.cmpi eq, %52, %908 : vector<1x256xi32>
    %cst_180 = arith.constant 0.000000e+00 : f32
    %910 = vector.shape_cast %909 : vector<1x256xi1> to vector<1x256xi1>
    %911 = vector.broadcast %910 : vector<1x256xi1> to vector<8x256xi1>
    %912 = vector.broadcast %cst_180 : f32 to vector<8x256xf32>
    %913 = arith.select %911, %51, %912 : vector<8x256xi1>, vector<8x256xf32>
    %cst_181 = arith.constant dense<0.000000e+00> : vector<8xf32>
    %914 = vector.multi_reduction <add>, %913, %cst_181 [1] : vector<8x256xf32> to vector<8xf32>
    %915 = vector.shape_cast %914 : vector<8xf32> to vector<8x1xf32>
    %916 = vector.extract_strided_slice %915 {offsets = [0, 0], sizes = [1, 1], strides = [1, 1]} : vector<8x1xf32> to vector<1x1xf32>
    %917 = vector.extract_strided_slice %915 {offsets = [1, 0], sizes = [1, 1], strides = [1, 1]} : vector<8x1xf32> to vector<1x1xf32>
    %918 = vector.extract_strided_slice %915 {offsets = [2, 0], sizes = [1, 1], strides = [1, 1]} : vector<8x1xf32> to vector<1x1xf32>
    %919 = vector.extract_strided_slice %915 {offsets = [3, 0], sizes = [1, 1], strides = [1, 1]} : vector<8x1xf32> to vector<1x1xf32>
    %920 = vector.extract_strided_slice %915 {offsets = [6, 0], sizes = [1, 1], strides = [1, 1]} : vector<8x1xf32> to vector<1x1xf32>
    %921 = vector.broadcast %916 : vector<1x1xf32> to vector<1x256xf32>
    %922 = arith.maximumf %33, %921 : vector<1x256xf32>
    %923 = vector.broadcast %917 : vector<1x1xf32> to vector<1x256xf32>
    %924 = arith.maximumf %36, %923 : vector<1x256xf32>
    %925 = vector.broadcast %918 : vector<1x1xf32> to vector<1x256xf32>
    %926 = arith.minimumf %39, %925 : vector<1x256xf32>
    %927 = vector.broadcast %919 : vector<1x1xf32> to vector<1x256xf32>
    %928 = arith.minimumf %42, %927 : vector<1x256xf32>
    %929 = arith.subf %926, %922 : vector<1x256xf32>
    %cst_182 = arith.constant 0.000000e+00 : f32
    %930 = vector.broadcast %cst_182 : f32 to vector<1x256xf32>
    %931 = arith.maximumf %929, %930 : vector<1x256xf32>
    %932 = arith.subf %928, %924 : vector<1x256xf32>
    %cst_183 = arith.constant 0.000000e+00 : f32
    %933 = vector.broadcast %cst_183 : f32 to vector<1x256xf32>
    %934 = arith.maximumf %932, %933 : vector<1x256xf32>
    %935 = arith.mulf %931, %934 : vector<1x256xf32>
    %936 = vector.broadcast %920 : vector<1x1xf32> to vector<1x256xf32>
    %937 = arith.addf %45, %936 : vector<1x256xf32>
    %938 = arith.subf %937, %935 : vector<1x256xf32>
    %cst_184 = arith.constant 9.99999971E-10 : f32
    %939 = vector.broadcast %cst_184 : f32 to vector<1x256xf32>
    %940 = arith.maximumf %938, %939 : vector<1x256xf32>
    %941 = arith.divf %935, %940 : vector<1x256xf32>
    %cst_185 = arith.constant 4.500000e-01 : f32
    %942 = vector.broadcast %cst_185 : f32 to vector<1x256xf32>
    %943 = arith.cmpf ogt, %941, %942 : vector<1x256xf32>
    %944 = arith.ori %943, %909 : vector<1x256xi1>
    %945 = vector.broadcast %896 : i1 to vector<1x256xi1>
    %946 = arith.andi %945, %944 : vector<1x256xi1>
    %cst_186 = arith.constant -1.000000e+00 : f32
    %947 = vector.broadcast %cst_186 : f32 to vector<1x256xf32>
    %948 = arith.select %946, %947, %884 : vector<1x256xi1>, vector<1x256xf32>
    %949 = vector.broadcast %c13_i32 : i32 to vector<8x128xi32>
    %950 = arith.cmpi eq, %53, %949 : vector<8x128xi32>
    %951 = vector.broadcast %896 : i1 to vector<8x128xi1>
    %952 = arith.andi %950, %951 : vector<8x128xi1>
    %953 = vector.shape_cast %915 : vector<8x1xf32> to vector<8x1xf32>
    %954 = vector.broadcast %953 : vector<8x1xf32> to vector<8x128xf32>
    %955 = arith.select %952, %954, %891 : vector<8x128xi1>, vector<8x128xf32>
    %c14_i32 = arith.constant 14 : i32
    %956 = vector.shape_cast %948 : vector<1x256xf32> to vector<1x1x256xf32>
    %cst_187 = arith.constant dense<0xFF800000> : vector<1xf32>
    %957 = vector.multi_reduction <maximumf>, %956, %cst_187 [1, 2] : vector<1x1x256xf32> to vector<1xf32>
    %958 = vector.shape_cast %957 : vector<1xf32> to vector<1x1x1xf32>
    %959 = vector.extract %958[0, 0, 0] : f32 from vector<1x1x1xf32>
    %cst_188 = arith.constant 0.000000e+00 : f32
    %960 = arith.cmpf ogt, %959, %cst_188 : f32
    %961 = vector.broadcast %959 : f32 to vector<1x256xf32>
    %962 = arith.cmpf oeq, %948, %961 : vector<1x256xf32>
    %cst_189 = arith.constant 0.000000e+00 : f32
    %963 = vector.broadcast %cst_189 : f32 to vector<1x256xf32>
    %964 = arith.cmpf ogt, %948, %963 : vector<1x256xf32>
    %965 = arith.andi %962, %964 : vector<1x256xi1>
    %c256_i32_190 = arith.constant 256 : i32
    %966 = vector.broadcast %c256_i32_190 : i32 to vector<1x256xi32>
    %967 = arith.select %965, %52, %966 : vector<1x256xi1>, vector<1x256xi32>
    %968 = vector.shape_cast %967 : vector<1x256xi32> to vector<1x1x256xi32>
    %cst_191 = arith.constant dense<2147483647> : vector<1xi32>
    %969 = vector.multi_reduction <minsi>, %968, %cst_191 [1, 2] : vector<1x1x256xi32> to vector<1xi32>
    %970 = vector.shape_cast %969 : vector<1xi32> to vector<1x1x1xi32>
    %971 = vector.extract %970[0, 0, 0] : i32 from vector<1x1x1xi32>
    %972 = vector.broadcast %971 : i32 to vector<1x256xi32>
    %973 = arith.cmpi eq, %52, %972 : vector<1x256xi32>
    %cst_192 = arith.constant 0.000000e+00 : f32
    %974 = vector.shape_cast %973 : vector<1x256xi1> to vector<1x256xi1>
    %975 = vector.broadcast %974 : vector<1x256xi1> to vector<8x256xi1>
    %976 = vector.broadcast %cst_192 : f32 to vector<8x256xf32>
    %977 = arith.select %975, %51, %976 : vector<8x256xi1>, vector<8x256xf32>
    %cst_193 = arith.constant dense<0.000000e+00> : vector<8xf32>
    %978 = vector.multi_reduction <add>, %977, %cst_193 [1] : vector<8x256xf32> to vector<8xf32>
    %979 = vector.shape_cast %978 : vector<8xf32> to vector<8x1xf32>
    %980 = vector.extract_strided_slice %979 {offsets = [0, 0], sizes = [1, 1], strides = [1, 1]} : vector<8x1xf32> to vector<1x1xf32>
    %981 = vector.extract_strided_slice %979 {offsets = [1, 0], sizes = [1, 1], strides = [1, 1]} : vector<8x1xf32> to vector<1x1xf32>
    %982 = vector.extract_strided_slice %979 {offsets = [2, 0], sizes = [1, 1], strides = [1, 1]} : vector<8x1xf32> to vector<1x1xf32>
    %983 = vector.extract_strided_slice %979 {offsets = [3, 0], sizes = [1, 1], strides = [1, 1]} : vector<8x1xf32> to vector<1x1xf32>
    %984 = vector.extract_strided_slice %979 {offsets = [6, 0], sizes = [1, 1], strides = [1, 1]} : vector<8x1xf32> to vector<1x1xf32>
    %985 = vector.broadcast %980 : vector<1x1xf32> to vector<1x256xf32>
    %986 = arith.maximumf %33, %985 : vector<1x256xf32>
    %987 = vector.broadcast %981 : vector<1x1xf32> to vector<1x256xf32>
    %988 = arith.maximumf %36, %987 : vector<1x256xf32>
    %989 = vector.broadcast %982 : vector<1x1xf32> to vector<1x256xf32>
    %990 = arith.minimumf %39, %989 : vector<1x256xf32>
    %991 = vector.broadcast %983 : vector<1x1xf32> to vector<1x256xf32>
    %992 = arith.minimumf %42, %991 : vector<1x256xf32>
    %993 = arith.subf %990, %986 : vector<1x256xf32>
    %cst_194 = arith.constant 0.000000e+00 : f32
    %994 = vector.broadcast %cst_194 : f32 to vector<1x256xf32>
    %995 = arith.maximumf %993, %994 : vector<1x256xf32>
    %996 = arith.subf %992, %988 : vector<1x256xf32>
    %cst_195 = arith.constant 0.000000e+00 : f32
    %997 = vector.broadcast %cst_195 : f32 to vector<1x256xf32>
    %998 = arith.maximumf %996, %997 : vector<1x256xf32>
    %999 = arith.mulf %995, %998 : vector<1x256xf32>
    %1000 = vector.broadcast %984 : vector<1x1xf32> to vector<1x256xf32>
    %1001 = arith.addf %45, %1000 : vector<1x256xf32>
    %1002 = arith.subf %1001, %999 : vector<1x256xf32>
    %cst_196 = arith.constant 9.99999971E-10 : f32
    %1003 = vector.broadcast %cst_196 : f32 to vector<1x256xf32>
    %1004 = arith.maximumf %1002, %1003 : vector<1x256xf32>
    %1005 = arith.divf %999, %1004 : vector<1x256xf32>
    %cst_197 = arith.constant 4.500000e-01 : f32
    %1006 = vector.broadcast %cst_197 : f32 to vector<1x256xf32>
    %1007 = arith.cmpf ogt, %1005, %1006 : vector<1x256xf32>
    %1008 = arith.ori %1007, %973 : vector<1x256xi1>
    %1009 = vector.broadcast %960 : i1 to vector<1x256xi1>
    %1010 = arith.andi %1009, %1008 : vector<1x256xi1>
    %cst_198 = arith.constant -1.000000e+00 : f32
    %1011 = vector.broadcast %cst_198 : f32 to vector<1x256xf32>
    %1012 = arith.select %1010, %1011, %948 : vector<1x256xi1>, vector<1x256xf32>
    %1013 = vector.broadcast %c14_i32 : i32 to vector<8x128xi32>
    %1014 = arith.cmpi eq, %53, %1013 : vector<8x128xi32>
    %1015 = vector.broadcast %960 : i1 to vector<8x128xi1>
    %1016 = arith.andi %1014, %1015 : vector<8x128xi1>
    %1017 = vector.shape_cast %979 : vector<8x1xf32> to vector<8x1xf32>
    %1018 = vector.broadcast %1017 : vector<8x1xf32> to vector<8x128xf32>
    %1019 = arith.select %1016, %1018, %955 : vector<8x128xi1>, vector<8x128xf32>
    %c15_i32 = arith.constant 15 : i32
    %1020 = vector.shape_cast %1012 : vector<1x256xf32> to vector<1x1x256xf32>
    %cst_199 = arith.constant dense<0xFF800000> : vector<1xf32>
    %1021 = vector.multi_reduction <maximumf>, %1020, %cst_199 [1, 2] : vector<1x1x256xf32> to vector<1xf32>
    %1022 = vector.shape_cast %1021 : vector<1xf32> to vector<1x1x1xf32>
    %1023 = vector.extract %1022[0, 0, 0] : f32 from vector<1x1x1xf32>
    %cst_200 = arith.constant 0.000000e+00 : f32
    %1024 = arith.cmpf ogt, %1023, %cst_200 : f32
    %1025 = vector.broadcast %1023 : f32 to vector<1x256xf32>
    %1026 = arith.cmpf oeq, %1012, %1025 : vector<1x256xf32>
    %cst_201 = arith.constant 0.000000e+00 : f32
    %1027 = vector.broadcast %cst_201 : f32 to vector<1x256xf32>
    %1028 = arith.cmpf ogt, %1012, %1027 : vector<1x256xf32>
    %1029 = arith.andi %1026, %1028 : vector<1x256xi1>
    %c256_i32_202 = arith.constant 256 : i32
    %1030 = vector.broadcast %c256_i32_202 : i32 to vector<1x256xi32>
    %1031 = arith.select %1029, %52, %1030 : vector<1x256xi1>, vector<1x256xi32>
    %1032 = vector.shape_cast %1031 : vector<1x256xi32> to vector<1x1x256xi32>
    %cst_203 = arith.constant dense<2147483647> : vector<1xi32>
    %1033 = vector.multi_reduction <minsi>, %1032, %cst_203 [1, 2] : vector<1x1x256xi32> to vector<1xi32>
    %1034 = vector.shape_cast %1033 : vector<1xi32> to vector<1x1x1xi32>
    %1035 = vector.extract %1034[0, 0, 0] : i32 from vector<1x1x1xi32>
    %1036 = vector.broadcast %1035 : i32 to vector<1x256xi32>
    %1037 = arith.cmpi eq, %52, %1036 : vector<1x256xi32>
    %cst_204 = arith.constant 0.000000e+00 : f32
    %1038 = vector.shape_cast %1037 : vector<1x256xi1> to vector<1x256xi1>
    %1039 = vector.broadcast %1038 : vector<1x256xi1> to vector<8x256xi1>
    %1040 = vector.broadcast %cst_204 : f32 to vector<8x256xf32>
    %1041 = arith.select %1039, %51, %1040 : vector<8x256xi1>, vector<8x256xf32>
    %cst_205 = arith.constant dense<0.000000e+00> : vector<8xf32>
    %1042 = vector.multi_reduction <add>, %1041, %cst_205 [1] : vector<8x256xf32> to vector<8xf32>
    %1043 = vector.shape_cast %1042 : vector<8xf32> to vector<8x1xf32>
    %1044 = vector.extract_strided_slice %1043 {offsets = [0, 0], sizes = [1, 1], strides = [1, 1]} : vector<8x1xf32> to vector<1x1xf32>
    %1045 = vector.extract_strided_slice %1043 {offsets = [1, 0], sizes = [1, 1], strides = [1, 1]} : vector<8x1xf32> to vector<1x1xf32>
    %1046 = vector.extract_strided_slice %1043 {offsets = [2, 0], sizes = [1, 1], strides = [1, 1]} : vector<8x1xf32> to vector<1x1xf32>
    %1047 = vector.extract_strided_slice %1043 {offsets = [3, 0], sizes = [1, 1], strides = [1, 1]} : vector<8x1xf32> to vector<1x1xf32>
    %1048 = vector.extract_strided_slice %1043 {offsets = [6, 0], sizes = [1, 1], strides = [1, 1]} : vector<8x1xf32> to vector<1x1xf32>
    %1049 = vector.broadcast %1044 : vector<1x1xf32> to vector<1x256xf32>
    %1050 = arith.maximumf %33, %1049 : vector<1x256xf32>
    %1051 = vector.broadcast %1045 : vector<1x1xf32> to vector<1x256xf32>
    %1052 = arith.maximumf %36, %1051 : vector<1x256xf32>
    %1053 = vector.broadcast %1046 : vector<1x1xf32> to vector<1x256xf32>
    %1054 = arith.minimumf %39, %1053 : vector<1x256xf32>
    %1055 = vector.broadcast %1047 : vector<1x1xf32> to vector<1x256xf32>
    %1056 = arith.minimumf %42, %1055 : vector<1x256xf32>
    %1057 = arith.subf %1054, %1050 : vector<1x256xf32>
    %cst_206 = arith.constant 0.000000e+00 : f32
    %1058 = vector.broadcast %cst_206 : f32 to vector<1x256xf32>
    %1059 = arith.maximumf %1057, %1058 : vector<1x256xf32>
    %1060 = arith.subf %1056, %1052 : vector<1x256xf32>
    %cst_207 = arith.constant 0.000000e+00 : f32
    %1061 = vector.broadcast %cst_207 : f32 to vector<1x256xf32>
    %1062 = arith.maximumf %1060, %1061 : vector<1x256xf32>
    %1063 = arith.mulf %1059, %1062 : vector<1x256xf32>
    %1064 = vector.broadcast %1048 : vector<1x1xf32> to vector<1x256xf32>
    %1065 = arith.addf %45, %1064 : vector<1x256xf32>
    %1066 = arith.subf %1065, %1063 : vector<1x256xf32>
    %cst_208 = arith.constant 9.99999971E-10 : f32
    %1067 = vector.broadcast %cst_208 : f32 to vector<1x256xf32>
    %1068 = arith.maximumf %1066, %1067 : vector<1x256xf32>
    %1069 = arith.divf %1063, %1068 : vector<1x256xf32>
    %cst_209 = arith.constant 4.500000e-01 : f32
    %1070 = vector.broadcast %cst_209 : f32 to vector<1x256xf32>
    %1071 = arith.cmpf ogt, %1069, %1070 : vector<1x256xf32>
    %1072 = arith.ori %1071, %1037 : vector<1x256xi1>
    %1073 = vector.broadcast %1024 : i1 to vector<1x256xi1>
    %1074 = arith.andi %1073, %1072 : vector<1x256xi1>
    %cst_210 = arith.constant -1.000000e+00 : f32
    %1075 = vector.broadcast %cst_210 : f32 to vector<1x256xf32>
    %1076 = arith.select %1074, %1075, %1012 : vector<1x256xi1>, vector<1x256xf32>
    %1077 = vector.broadcast %c15_i32 : i32 to vector<8x128xi32>
    %1078 = arith.cmpi eq, %53, %1077 : vector<8x128xi32>
    %1079 = vector.broadcast %1024 : i1 to vector<8x128xi1>
    %1080 = arith.andi %1078, %1079 : vector<8x128xi1>
    %1081 = vector.shape_cast %1043 : vector<8x1xf32> to vector<8x1xf32>
    %1082 = vector.broadcast %1081 : vector<8x1xf32> to vector<8x128xf32>
    %1083 = arith.select %1080, %1082, %1019 : vector<8x128xi1>, vector<8x128xf32>
    %c16_i32 = arith.constant 16 : i32
    %1084 = vector.shape_cast %1076 : vector<1x256xf32> to vector<1x1x256xf32>
    %cst_211 = arith.constant dense<0xFF800000> : vector<1xf32>
    %1085 = vector.multi_reduction <maximumf>, %1084, %cst_211 [1, 2] : vector<1x1x256xf32> to vector<1xf32>
    %1086 = vector.shape_cast %1085 : vector<1xf32> to vector<1x1x1xf32>
    %1087 = vector.extract %1086[0, 0, 0] : f32 from vector<1x1x1xf32>
    %cst_212 = arith.constant 0.000000e+00 : f32
    %1088 = arith.cmpf ogt, %1087, %cst_212 : f32
    %1089 = vector.broadcast %1087 : f32 to vector<1x256xf32>
    %1090 = arith.cmpf oeq, %1076, %1089 : vector<1x256xf32>
    %cst_213 = arith.constant 0.000000e+00 : f32
    %1091 = vector.broadcast %cst_213 : f32 to vector<1x256xf32>
    %1092 = arith.cmpf ogt, %1076, %1091 : vector<1x256xf32>
    %1093 = arith.andi %1090, %1092 : vector<1x256xi1>
    %c256_i32_214 = arith.constant 256 : i32
    %1094 = vector.broadcast %c256_i32_214 : i32 to vector<1x256xi32>
    %1095 = arith.select %1093, %52, %1094 : vector<1x256xi1>, vector<1x256xi32>
    %1096 = vector.shape_cast %1095 : vector<1x256xi32> to vector<1x1x256xi32>
    %cst_215 = arith.constant dense<2147483647> : vector<1xi32>
    %1097 = vector.multi_reduction <minsi>, %1096, %cst_215 [1, 2] : vector<1x1x256xi32> to vector<1xi32>
    %1098 = vector.shape_cast %1097 : vector<1xi32> to vector<1x1x1xi32>
    %1099 = vector.extract %1098[0, 0, 0] : i32 from vector<1x1x1xi32>
    %1100 = vector.broadcast %1099 : i32 to vector<1x256xi32>
    %1101 = arith.cmpi eq, %52, %1100 : vector<1x256xi32>
    %cst_216 = arith.constant 0.000000e+00 : f32
    %1102 = vector.shape_cast %1101 : vector<1x256xi1> to vector<1x256xi1>
    %1103 = vector.broadcast %1102 : vector<1x256xi1> to vector<8x256xi1>
    %1104 = vector.broadcast %cst_216 : f32 to vector<8x256xf32>
    %1105 = arith.select %1103, %51, %1104 : vector<8x256xi1>, vector<8x256xf32>
    %cst_217 = arith.constant dense<0.000000e+00> : vector<8xf32>
    %1106 = vector.multi_reduction <add>, %1105, %cst_217 [1] : vector<8x256xf32> to vector<8xf32>
    %1107 = vector.shape_cast %1106 : vector<8xf32> to vector<8x1xf32>
    %1108 = vector.extract_strided_slice %1107 {offsets = [0, 0], sizes = [1, 1], strides = [1, 1]} : vector<8x1xf32> to vector<1x1xf32>
    %1109 = vector.extract_strided_slice %1107 {offsets = [1, 0], sizes = [1, 1], strides = [1, 1]} : vector<8x1xf32> to vector<1x1xf32>
    %1110 = vector.extract_strided_slice %1107 {offsets = [2, 0], sizes = [1, 1], strides = [1, 1]} : vector<8x1xf32> to vector<1x1xf32>
    %1111 = vector.extract_strided_slice %1107 {offsets = [3, 0], sizes = [1, 1], strides = [1, 1]} : vector<8x1xf32> to vector<1x1xf32>
    %1112 = vector.extract_strided_slice %1107 {offsets = [6, 0], sizes = [1, 1], strides = [1, 1]} : vector<8x1xf32> to vector<1x1xf32>
    %1113 = vector.broadcast %1108 : vector<1x1xf32> to vector<1x256xf32>
    %1114 = arith.maximumf %33, %1113 : vector<1x256xf32>
    %1115 = vector.broadcast %1109 : vector<1x1xf32> to vector<1x256xf32>
    %1116 = arith.maximumf %36, %1115 : vector<1x256xf32>
    %1117 = vector.broadcast %1110 : vector<1x1xf32> to vector<1x256xf32>
    %1118 = arith.minimumf %39, %1117 : vector<1x256xf32>
    %1119 = vector.broadcast %1111 : vector<1x1xf32> to vector<1x256xf32>
    %1120 = arith.minimumf %42, %1119 : vector<1x256xf32>
    %1121 = arith.subf %1118, %1114 : vector<1x256xf32>
    %cst_218 = arith.constant 0.000000e+00 : f32
    %1122 = vector.broadcast %cst_218 : f32 to vector<1x256xf32>
    %1123 = arith.maximumf %1121, %1122 : vector<1x256xf32>
    %1124 = arith.subf %1120, %1116 : vector<1x256xf32>
    %cst_219 = arith.constant 0.000000e+00 : f32
    %1125 = vector.broadcast %cst_219 : f32 to vector<1x256xf32>
    %1126 = arith.maximumf %1124, %1125 : vector<1x256xf32>
    %1127 = arith.mulf %1123, %1126 : vector<1x256xf32>
    %1128 = vector.broadcast %1112 : vector<1x1xf32> to vector<1x256xf32>
    %1129 = arith.addf %45, %1128 : vector<1x256xf32>
    %1130 = arith.subf %1129, %1127 : vector<1x256xf32>
    %cst_220 = arith.constant 9.99999971E-10 : f32
    %1131 = vector.broadcast %cst_220 : f32 to vector<1x256xf32>
    %1132 = arith.maximumf %1130, %1131 : vector<1x256xf32>
    %1133 = arith.divf %1127, %1132 : vector<1x256xf32>
    %cst_221 = arith.constant 4.500000e-01 : f32
    %1134 = vector.broadcast %cst_221 : f32 to vector<1x256xf32>
    %1135 = arith.cmpf ogt, %1133, %1134 : vector<1x256xf32>
    %1136 = arith.ori %1135, %1101 : vector<1x256xi1>
    %1137 = vector.broadcast %1088 : i1 to vector<1x256xi1>
    %1138 = arith.andi %1137, %1136 : vector<1x256xi1>
    %cst_222 = arith.constant -1.000000e+00 : f32
    %1139 = vector.broadcast %cst_222 : f32 to vector<1x256xf32>
    %1140 = arith.select %1138, %1139, %1076 : vector<1x256xi1>, vector<1x256xf32>
    %1141 = vector.broadcast %c16_i32 : i32 to vector<8x128xi32>
    %1142 = arith.cmpi eq, %53, %1141 : vector<8x128xi32>
    %1143 = vector.broadcast %1088 : i1 to vector<8x128xi1>
    %1144 = arith.andi %1142, %1143 : vector<8x128xi1>
    %1145 = vector.shape_cast %1107 : vector<8x1xf32> to vector<8x1xf32>
    %1146 = vector.broadcast %1145 : vector<8x1xf32> to vector<8x128xf32>
    %1147 = arith.select %1144, %1146, %1083 : vector<8x128xi1>, vector<8x128xf32>
    %c17_i32 = arith.constant 17 : i32
    %1148 = vector.shape_cast %1140 : vector<1x256xf32> to vector<1x1x256xf32>
    %cst_223 = arith.constant dense<0xFF800000> : vector<1xf32>
    %1149 = vector.multi_reduction <maximumf>, %1148, %cst_223 [1, 2] : vector<1x1x256xf32> to vector<1xf32>
    %1150 = vector.shape_cast %1149 : vector<1xf32> to vector<1x1x1xf32>
    %1151 = vector.extract %1150[0, 0, 0] : f32 from vector<1x1x1xf32>
    %cst_224 = arith.constant 0.000000e+00 : f32
    %1152 = arith.cmpf ogt, %1151, %cst_224 : f32
    %1153 = vector.broadcast %1151 : f32 to vector<1x256xf32>
    %1154 = arith.cmpf oeq, %1140, %1153 : vector<1x256xf32>
    %cst_225 = arith.constant 0.000000e+00 : f32
    %1155 = vector.broadcast %cst_225 : f32 to vector<1x256xf32>
    %1156 = arith.cmpf ogt, %1140, %1155 : vector<1x256xf32>
    %1157 = arith.andi %1154, %1156 : vector<1x256xi1>
    %c256_i32_226 = arith.constant 256 : i32
    %1158 = vector.broadcast %c256_i32_226 : i32 to vector<1x256xi32>
    %1159 = arith.select %1157, %52, %1158 : vector<1x256xi1>, vector<1x256xi32>
    %1160 = vector.shape_cast %1159 : vector<1x256xi32> to vector<1x1x256xi32>
    %cst_227 = arith.constant dense<2147483647> : vector<1xi32>
    %1161 = vector.multi_reduction <minsi>, %1160, %cst_227 [1, 2] : vector<1x1x256xi32> to vector<1xi32>
    %1162 = vector.shape_cast %1161 : vector<1xi32> to vector<1x1x1xi32>
    %1163 = vector.extract %1162[0, 0, 0] : i32 from vector<1x1x1xi32>
    %1164 = vector.broadcast %1163 : i32 to vector<1x256xi32>
    %1165 = arith.cmpi eq, %52, %1164 : vector<1x256xi32>
    %cst_228 = arith.constant 0.000000e+00 : f32
    %1166 = vector.shape_cast %1165 : vector<1x256xi1> to vector<1x256xi1>
    %1167 = vector.broadcast %1166 : vector<1x256xi1> to vector<8x256xi1>
    %1168 = vector.broadcast %cst_228 : f32 to vector<8x256xf32>
    %1169 = arith.select %1167, %51, %1168 : vector<8x256xi1>, vector<8x256xf32>
    %cst_229 = arith.constant dense<0.000000e+00> : vector<8xf32>
    %1170 = vector.multi_reduction <add>, %1169, %cst_229 [1] : vector<8x256xf32> to vector<8xf32>
    %1171 = vector.shape_cast %1170 : vector<8xf32> to vector<8x1xf32>
    %1172 = vector.extract_strided_slice %1171 {offsets = [0, 0], sizes = [1, 1], strides = [1, 1]} : vector<8x1xf32> to vector<1x1xf32>
    %1173 = vector.extract_strided_slice %1171 {offsets = [1, 0], sizes = [1, 1], strides = [1, 1]} : vector<8x1xf32> to vector<1x1xf32>
    %1174 = vector.extract_strided_slice %1171 {offsets = [2, 0], sizes = [1, 1], strides = [1, 1]} : vector<8x1xf32> to vector<1x1xf32>
    %1175 = vector.extract_strided_slice %1171 {offsets = [3, 0], sizes = [1, 1], strides = [1, 1]} : vector<8x1xf32> to vector<1x1xf32>
    %1176 = vector.extract_strided_slice %1171 {offsets = [6, 0], sizes = [1, 1], strides = [1, 1]} : vector<8x1xf32> to vector<1x1xf32>
    %1177 = vector.broadcast %1172 : vector<1x1xf32> to vector<1x256xf32>
    %1178 = arith.maximumf %33, %1177 : vector<1x256xf32>
    %1179 = vector.broadcast %1173 : vector<1x1xf32> to vector<1x256xf32>
    %1180 = arith.maximumf %36, %1179 : vector<1x256xf32>
    %1181 = vector.broadcast %1174 : vector<1x1xf32> to vector<1x256xf32>
    %1182 = arith.minimumf %39, %1181 : vector<1x256xf32>
    %1183 = vector.broadcast %1175 : vector<1x1xf32> to vector<1x256xf32>
    %1184 = arith.minimumf %42, %1183 : vector<1x256xf32>
    %1185 = arith.subf %1182, %1178 : vector<1x256xf32>
    %cst_230 = arith.constant 0.000000e+00 : f32
    %1186 = vector.broadcast %cst_230 : f32 to vector<1x256xf32>
    %1187 = arith.maximumf %1185, %1186 : vector<1x256xf32>
    %1188 = arith.subf %1184, %1180 : vector<1x256xf32>
    %cst_231 = arith.constant 0.000000e+00 : f32
    %1189 = vector.broadcast %cst_231 : f32 to vector<1x256xf32>
    %1190 = arith.maximumf %1188, %1189 : vector<1x256xf32>
    %1191 = arith.mulf %1187, %1190 : vector<1x256xf32>
    %1192 = vector.broadcast %1176 : vector<1x1xf32> to vector<1x256xf32>
    %1193 = arith.addf %45, %1192 : vector<1x256xf32>
    %1194 = arith.subf %1193, %1191 : vector<1x256xf32>
    %cst_232 = arith.constant 9.99999971E-10 : f32
    %1195 = vector.broadcast %cst_232 : f32 to vector<1x256xf32>
    %1196 = arith.maximumf %1194, %1195 : vector<1x256xf32>
    %1197 = arith.divf %1191, %1196 : vector<1x256xf32>
    %cst_233 = arith.constant 4.500000e-01 : f32
    %1198 = vector.broadcast %cst_233 : f32 to vector<1x256xf32>
    %1199 = arith.cmpf ogt, %1197, %1198 : vector<1x256xf32>
    %1200 = arith.ori %1199, %1165 : vector<1x256xi1>
    %1201 = vector.broadcast %1152 : i1 to vector<1x256xi1>
    %1202 = arith.andi %1201, %1200 : vector<1x256xi1>
    %cst_234 = arith.constant -1.000000e+00 : f32
    %1203 = vector.broadcast %cst_234 : f32 to vector<1x256xf32>
    %1204 = arith.select %1202, %1203, %1140 : vector<1x256xi1>, vector<1x256xf32>
    %1205 = vector.broadcast %c17_i32 : i32 to vector<8x128xi32>
    %1206 = arith.cmpi eq, %53, %1205 : vector<8x128xi32>
    %1207 = vector.broadcast %1152 : i1 to vector<8x128xi1>
    %1208 = arith.andi %1206, %1207 : vector<8x128xi1>
    %1209 = vector.shape_cast %1171 : vector<8x1xf32> to vector<8x1xf32>
    %1210 = vector.broadcast %1209 : vector<8x1xf32> to vector<8x128xf32>
    %1211 = arith.select %1208, %1210, %1147 : vector<8x128xi1>, vector<8x128xf32>
    %c18_i32 = arith.constant 18 : i32
    %1212 = vector.shape_cast %1204 : vector<1x256xf32> to vector<1x1x256xf32>
    %cst_235 = arith.constant dense<0xFF800000> : vector<1xf32>
    %1213 = vector.multi_reduction <maximumf>, %1212, %cst_235 [1, 2] : vector<1x1x256xf32> to vector<1xf32>
    %1214 = vector.shape_cast %1213 : vector<1xf32> to vector<1x1x1xf32>
    %1215 = vector.extract %1214[0, 0, 0] : f32 from vector<1x1x1xf32>
    %cst_236 = arith.constant 0.000000e+00 : f32
    %1216 = arith.cmpf ogt, %1215, %cst_236 : f32
    %1217 = vector.broadcast %1215 : f32 to vector<1x256xf32>
    %1218 = arith.cmpf oeq, %1204, %1217 : vector<1x256xf32>
    %cst_237 = arith.constant 0.000000e+00 : f32
    %1219 = vector.broadcast %cst_237 : f32 to vector<1x256xf32>
    %1220 = arith.cmpf ogt, %1204, %1219 : vector<1x256xf32>
    %1221 = arith.andi %1218, %1220 : vector<1x256xi1>
    %c256_i32_238 = arith.constant 256 : i32
    %1222 = vector.broadcast %c256_i32_238 : i32 to vector<1x256xi32>
    %1223 = arith.select %1221, %52, %1222 : vector<1x256xi1>, vector<1x256xi32>
    %1224 = vector.shape_cast %1223 : vector<1x256xi32> to vector<1x1x256xi32>
    %cst_239 = arith.constant dense<2147483647> : vector<1xi32>
    %1225 = vector.multi_reduction <minsi>, %1224, %cst_239 [1, 2] : vector<1x1x256xi32> to vector<1xi32>
    %1226 = vector.shape_cast %1225 : vector<1xi32> to vector<1x1x1xi32>
    %1227 = vector.extract %1226[0, 0, 0] : i32 from vector<1x1x1xi32>
    %1228 = vector.broadcast %1227 : i32 to vector<1x256xi32>
    %1229 = arith.cmpi eq, %52, %1228 : vector<1x256xi32>
    %cst_240 = arith.constant 0.000000e+00 : f32
    %1230 = vector.shape_cast %1229 : vector<1x256xi1> to vector<1x256xi1>
    %1231 = vector.broadcast %1230 : vector<1x256xi1> to vector<8x256xi1>
    %1232 = vector.broadcast %cst_240 : f32 to vector<8x256xf32>
    %1233 = arith.select %1231, %51, %1232 : vector<8x256xi1>, vector<8x256xf32>
    %cst_241 = arith.constant dense<0.000000e+00> : vector<8xf32>
    %1234 = vector.multi_reduction <add>, %1233, %cst_241 [1] : vector<8x256xf32> to vector<8xf32>
    %1235 = vector.shape_cast %1234 : vector<8xf32> to vector<8x1xf32>
    %1236 = vector.extract_strided_slice %1235 {offsets = [0, 0], sizes = [1, 1], strides = [1, 1]} : vector<8x1xf32> to vector<1x1xf32>
    %1237 = vector.extract_strided_slice %1235 {offsets = [1, 0], sizes = [1, 1], strides = [1, 1]} : vector<8x1xf32> to vector<1x1xf32>
    %1238 = vector.extract_strided_slice %1235 {offsets = [2, 0], sizes = [1, 1], strides = [1, 1]} : vector<8x1xf32> to vector<1x1xf32>
    %1239 = vector.extract_strided_slice %1235 {offsets = [3, 0], sizes = [1, 1], strides = [1, 1]} : vector<8x1xf32> to vector<1x1xf32>
    %1240 = vector.extract_strided_slice %1235 {offsets = [6, 0], sizes = [1, 1], strides = [1, 1]} : vector<8x1xf32> to vector<1x1xf32>
    %1241 = vector.broadcast %1236 : vector<1x1xf32> to vector<1x256xf32>
    %1242 = arith.maximumf %33, %1241 : vector<1x256xf32>
    %1243 = vector.broadcast %1237 : vector<1x1xf32> to vector<1x256xf32>
    %1244 = arith.maximumf %36, %1243 : vector<1x256xf32>
    %1245 = vector.broadcast %1238 : vector<1x1xf32> to vector<1x256xf32>
    %1246 = arith.minimumf %39, %1245 : vector<1x256xf32>
    %1247 = vector.broadcast %1239 : vector<1x1xf32> to vector<1x256xf32>
    %1248 = arith.minimumf %42, %1247 : vector<1x256xf32>
    %1249 = arith.subf %1246, %1242 : vector<1x256xf32>
    %cst_242 = arith.constant 0.000000e+00 : f32
    %1250 = vector.broadcast %cst_242 : f32 to vector<1x256xf32>
    %1251 = arith.maximumf %1249, %1250 : vector<1x256xf32>
    %1252 = arith.subf %1248, %1244 : vector<1x256xf32>
    %cst_243 = arith.constant 0.000000e+00 : f32
    %1253 = vector.broadcast %cst_243 : f32 to vector<1x256xf32>
    %1254 = arith.maximumf %1252, %1253 : vector<1x256xf32>
    %1255 = arith.mulf %1251, %1254 : vector<1x256xf32>
    %1256 = vector.broadcast %1240 : vector<1x1xf32> to vector<1x256xf32>
    %1257 = arith.addf %45, %1256 : vector<1x256xf32>
    %1258 = arith.subf %1257, %1255 : vector<1x256xf32>
    %cst_244 = arith.constant 9.99999971E-10 : f32
    %1259 = vector.broadcast %cst_244 : f32 to vector<1x256xf32>
    %1260 = arith.maximumf %1258, %1259 : vector<1x256xf32>
    %1261 = arith.divf %1255, %1260 : vector<1x256xf32>
    %cst_245 = arith.constant 4.500000e-01 : f32
    %1262 = vector.broadcast %cst_245 : f32 to vector<1x256xf32>
    %1263 = arith.cmpf ogt, %1261, %1262 : vector<1x256xf32>
    %1264 = arith.ori %1263, %1229 : vector<1x256xi1>
    %1265 = vector.broadcast %1216 : i1 to vector<1x256xi1>
    %1266 = arith.andi %1265, %1264 : vector<1x256xi1>
    %cst_246 = arith.constant -1.000000e+00 : f32
    %1267 = vector.broadcast %cst_246 : f32 to vector<1x256xf32>
    %1268 = arith.select %1266, %1267, %1204 : vector<1x256xi1>, vector<1x256xf32>
    %1269 = vector.broadcast %c18_i32 : i32 to vector<8x128xi32>
    %1270 = arith.cmpi eq, %53, %1269 : vector<8x128xi32>
    %1271 = vector.broadcast %1216 : i1 to vector<8x128xi1>
    %1272 = arith.andi %1270, %1271 : vector<8x128xi1>
    %1273 = vector.shape_cast %1235 : vector<8x1xf32> to vector<8x1xf32>
    %1274 = vector.broadcast %1273 : vector<8x1xf32> to vector<8x128xf32>
    %1275 = arith.select %1272, %1274, %1211 : vector<8x128xi1>, vector<8x128xf32>
    %c19_i32 = arith.constant 19 : i32
    %1276 = vector.shape_cast %1268 : vector<1x256xf32> to vector<1x1x256xf32>
    %cst_247 = arith.constant dense<0xFF800000> : vector<1xf32>
    %1277 = vector.multi_reduction <maximumf>, %1276, %cst_247 [1, 2] : vector<1x1x256xf32> to vector<1xf32>
    %1278 = vector.shape_cast %1277 : vector<1xf32> to vector<1x1x1xf32>
    %1279 = vector.extract %1278[0, 0, 0] : f32 from vector<1x1x1xf32>
    %cst_248 = arith.constant 0.000000e+00 : f32
    %1280 = arith.cmpf ogt, %1279, %cst_248 : f32
    %1281 = vector.broadcast %1279 : f32 to vector<1x256xf32>
    %1282 = arith.cmpf oeq, %1268, %1281 : vector<1x256xf32>
    %cst_249 = arith.constant 0.000000e+00 : f32
    %1283 = vector.broadcast %cst_249 : f32 to vector<1x256xf32>
    %1284 = arith.cmpf ogt, %1268, %1283 : vector<1x256xf32>
    %1285 = arith.andi %1282, %1284 : vector<1x256xi1>
    %c256_i32_250 = arith.constant 256 : i32
    %1286 = vector.broadcast %c256_i32_250 : i32 to vector<1x256xi32>
    %1287 = arith.select %1285, %52, %1286 : vector<1x256xi1>, vector<1x256xi32>
    %1288 = vector.shape_cast %1287 : vector<1x256xi32> to vector<1x1x256xi32>
    %cst_251 = arith.constant dense<2147483647> : vector<1xi32>
    %1289 = vector.multi_reduction <minsi>, %1288, %cst_251 [1, 2] : vector<1x1x256xi32> to vector<1xi32>
    %1290 = vector.shape_cast %1289 : vector<1xi32> to vector<1x1x1xi32>
    %1291 = vector.extract %1290[0, 0, 0] : i32 from vector<1x1x1xi32>
    %1292 = vector.broadcast %1291 : i32 to vector<1x256xi32>
    %1293 = arith.cmpi eq, %52, %1292 : vector<1x256xi32>
    %cst_252 = arith.constant 0.000000e+00 : f32
    %1294 = vector.shape_cast %1293 : vector<1x256xi1> to vector<1x256xi1>
    %1295 = vector.broadcast %1294 : vector<1x256xi1> to vector<8x256xi1>
    %1296 = vector.broadcast %cst_252 : f32 to vector<8x256xf32>
    %1297 = arith.select %1295, %51, %1296 : vector<8x256xi1>, vector<8x256xf32>
    %cst_253 = arith.constant dense<0.000000e+00> : vector<8xf32>
    %1298 = vector.multi_reduction <add>, %1297, %cst_253 [1] : vector<8x256xf32> to vector<8xf32>
    %1299 = vector.shape_cast %1298 : vector<8xf32> to vector<8x1xf32>
    %1300 = vector.extract_strided_slice %1299 {offsets = [0, 0], sizes = [1, 1], strides = [1, 1]} : vector<8x1xf32> to vector<1x1xf32>
    %1301 = vector.extract_strided_slice %1299 {offsets = [1, 0], sizes = [1, 1], strides = [1, 1]} : vector<8x1xf32> to vector<1x1xf32>
    %1302 = vector.extract_strided_slice %1299 {offsets = [2, 0], sizes = [1, 1], strides = [1, 1]} : vector<8x1xf32> to vector<1x1xf32>
    %1303 = vector.extract_strided_slice %1299 {offsets = [3, 0], sizes = [1, 1], strides = [1, 1]} : vector<8x1xf32> to vector<1x1xf32>
    %1304 = vector.extract_strided_slice %1299 {offsets = [6, 0], sizes = [1, 1], strides = [1, 1]} : vector<8x1xf32> to vector<1x1xf32>
    %1305 = vector.broadcast %1300 : vector<1x1xf32> to vector<1x256xf32>
    %1306 = arith.maximumf %33, %1305 : vector<1x256xf32>
    %1307 = vector.broadcast %1301 : vector<1x1xf32> to vector<1x256xf32>
    %1308 = arith.maximumf %36, %1307 : vector<1x256xf32>
    %1309 = vector.broadcast %1302 : vector<1x1xf32> to vector<1x256xf32>
    %1310 = arith.minimumf %39, %1309 : vector<1x256xf32>
    %1311 = vector.broadcast %1303 : vector<1x1xf32> to vector<1x256xf32>
    %1312 = arith.minimumf %42, %1311 : vector<1x256xf32>
    %1313 = arith.subf %1310, %1306 : vector<1x256xf32>
    %cst_254 = arith.constant 0.000000e+00 : f32
    %1314 = vector.broadcast %cst_254 : f32 to vector<1x256xf32>
    %1315 = arith.maximumf %1313, %1314 : vector<1x256xf32>
    %1316 = arith.subf %1312, %1308 : vector<1x256xf32>
    %cst_255 = arith.constant 0.000000e+00 : f32
    %1317 = vector.broadcast %cst_255 : f32 to vector<1x256xf32>
    %1318 = arith.maximumf %1316, %1317 : vector<1x256xf32>
    %1319 = arith.mulf %1315, %1318 : vector<1x256xf32>
    %1320 = vector.broadcast %1304 : vector<1x1xf32> to vector<1x256xf32>
    %1321 = arith.addf %45, %1320 : vector<1x256xf32>
    %1322 = arith.subf %1321, %1319 : vector<1x256xf32>
    %cst_256 = arith.constant 9.99999971E-10 : f32
    %1323 = vector.broadcast %cst_256 : f32 to vector<1x256xf32>
    %1324 = arith.maximumf %1322, %1323 : vector<1x256xf32>
    %1325 = arith.divf %1319, %1324 : vector<1x256xf32>
    %cst_257 = arith.constant 4.500000e-01 : f32
    %1326 = vector.broadcast %cst_257 : f32 to vector<1x256xf32>
    %1327 = arith.cmpf ogt, %1325, %1326 : vector<1x256xf32>
    %1328 = arith.ori %1327, %1293 : vector<1x256xi1>
    %1329 = vector.broadcast %1280 : i1 to vector<1x256xi1>
    %1330 = arith.andi %1329, %1328 : vector<1x256xi1>
    %cst_258 = arith.constant -1.000000e+00 : f32
    %1331 = vector.broadcast %cst_258 : f32 to vector<1x256xf32>
    %1332 = arith.select %1330, %1331, %1268 : vector<1x256xi1>, vector<1x256xf32>
    %1333 = vector.broadcast %c19_i32 : i32 to vector<8x128xi32>
    %1334 = arith.cmpi eq, %53, %1333 : vector<8x128xi32>
    %1335 = vector.broadcast %1280 : i1 to vector<8x128xi1>
    %1336 = arith.andi %1334, %1335 : vector<8x128xi1>
    %1337 = vector.shape_cast %1299 : vector<8x1xf32> to vector<8x1xf32>
    %1338 = vector.broadcast %1337 : vector<8x1xf32> to vector<8x128xf32>
    %1339 = arith.select %1336, %1338, %1275 : vector<8x128xi1>, vector<8x128xf32>
    %c20_i32 = arith.constant 20 : i32
    %c0_259 = arith.constant 0 : index
    %c0_260 = arith.constant 0 : index
    %1340 = vector.load %arg3[%c0_259, %c0_260] : memref<8x128xf32, #tpu.memory_space<vmem>>, vector<8x128xf32>
    tpu.vector_store %arg3[%c0_259, %c0_260], %1339 {strides = array<i32>} : memref<8x128xf32, #tpu.memory_space<vmem>>, vector<8x128xf32>,
    return
  }
}

</mosaic_0001>

<llo_original>
// kernel: tpu_custom_call.1
$region0: #{tpu_custom_call.1}
  #allocation0 [shape = 'u32[]', space=smem, size = 0x4, offset = 0x4, fixed_abs, tag = 'smem constant byte address 0x4 - core index']
  #allocation1 [shape = 'u32[144,128]{1,0:T(1,128)}', space=vmem, size = 0x12000, scoped, tag = 'internal scratch']
  %s0 = inlined_call_operand.vmem [shape: f32[4,256], index: 0, kind: input, shape index: {}]
  %s1 = inlined_call_operand.vmem [shape: f32[8,4], index: 1, kind: input, shape index: {}]
  %s2 = inlined_call_operand.vmem [shape: f32[8,1], index: 2, kind: input, shape index: {}]
  %s3 = inlined_call_operand.hbm [shape: f32[8,128], index: 3, kind: output, shape index: {}]
  %s4 = sld [smem:[#allocation0]]
  $region22: #{tpu_custom_call.1} parent=0
    _
  %s6 = ssub.s32 1, %s4
  %s7 = scalar_select 0, %s6, %s4
  $region1: #{tpu_custom_call.1} parent=0
    #allocation2 [shape = 'u8[4096]{0}', space=vmem, size = 0x1000, scoped, tag = 'output window, operand 0, single buffered']
    #allocation3 [shape = 's32[1]{0}', space=sflag, size = 0x4, scoped, tag = 'scoped memory for tpu_custom_call.1']
    %8 = vsyncpa [#allocation3], 0
    // Predicated region
    $region2: #{tpu_custom_call.1} parent=1 // pred_check
      _
    $region3: #{tpu_custom_call.1} parent=1 // pred_check_branch
      %10 = sbr.rel (0) target = $region5
    $region4: #{tpu_custom_call.1} parent=1 // pred_region
      _
    $region5: #{tpu_custom_call.1} parent=1 // pred_fallthru
      _
    // Predicated region
    $region6: #{tpu_custom_call.1} parent=1 // pred_check
      _
    $region7: #{tpu_custom_call.1} parent=1 // pred_check_branch
      %12 = sbr.rel (0) target = $region9
    $region8: #{tpu_custom_call.1} parent=1 // pred_region
      _
    $region9: #{tpu_custom_call.1} parent=1 // pred_fallthru
      _
    // Predicated region
    $region10: #{tpu_custom_call.1} parent=1 // pred_check
      _
    $region11: #{tpu_custom_call.1} parent=1 // pred_check_branch
      %14 = sbr.rel (0) target = $region13
    $region12: #{tpu_custom_call.1} parent=1 // pred_region
      _
    $region13: #{tpu_custom_call.1} parent=1 // pred_fallthru
      _
    %v15 = vld [vmem:[%s0] sm:$0xff]
    %v16 = vmul.f32 %v15, 0.003921569
    %v17 = vld [vmem:[%s1] sm:$0xff]
    %v18 = vld [vmem:[%s2] sm:$0xff]
    %20 = vset.pattern.permute.xlu0 0
    %21 = vperm.xlu0 %20, %v18
    %v22 = vpop.permute.xlu0 %21
    %v25 = vcombine.high %v16, %v16
    %vm26 = vcmask 31744
    %v28 = vsel %vm26, %v17, 0
    %vm30 = vcmask 1043456
    %v31 = vsel %vm30, %v16, 0
    %v33 = vsel %vm30, %v25, 0
    %35 = vmatprep.subr.mxu0 %v33
    %36 = vmatpush1.msra.mxu0 %v31
    %37 = vmatprep.subr.mxu0 0.0
    %38 = vmatpush1.msra.mxu0 0.0
    %39 = vmatprep.subr.mxu0 0.0
    %40 = vmatpush1.msra.mxu0 0.0
    %41 = vmatprep.subr.mxu0 0.0
    %42 = vmatpush1.msra.mxu0 0.0
    %43 = vmatprep.subr.mxu0 0.0
    %44 = vmatpush1.msra.mxu0 0.0
    %45 = vmatprep.subr.mxu0 0.0
    %46 = vmatpush1.msra.mxu0 0.0
    %47 = vmatprep.subr.mxu0 0.0
    %48 = vmatpush1.msra.mxu0 0.0
    %49 = vmatprep.subr.mxu0 0.0
    %50 = vmatpush1.msra.mxu0 0.0
    %51 = vmatprep.subr.mxu0 0.0
    %52 = vmatpush1.msra.mxu0 0.0
    %53 = vmatprep.subr.mxu0 0.0
    %54 = vmatpush1.msra.mxu0 0.0
    %55 = vmatprep.subr.mxu0 0.0
    %56 = vmatpush1.msra.mxu0 0.0
    %57 = vmatprep.subr.mxu0 0.0
    %58 = vmatpush1.msra.mxu0 0.0
    %59 = vmatprep.subr.mxu0 0.0
    %60 = vmatpush1.msra.mxu0 0.0
    %61 = vmatprep.subr.mxu0 0.0
    %62 = vmatpush1.msra.mxu0 0.0
    %63 = vmatprep.subr.mxu0 0.0
    %64 = vmatpush1.msra.mxu0 0.0
    %65 = vmatprep.subr.mxu0 0.0
    %66 = vmatpush1.msra.mxu0 0.0
    %67 = vmatprep.subr.mxu0 0.0
    %68 = vmatpush1.msra.mxu0 0.0
    %69 = vmatprep.subr.mxu0 0.0
    %70 = vmatpush1.msra.mxu0 0.0
    %71 = vmatprep.subr.mxu0 0.0
    %72 = vmatpush1.msra.mxu0 0.0
    %73 = vmatprep.subr.mxu0 0.0
    %74 = vmatpush1.msra.mxu0 0.0
    %75 = vmatprep.subr.mxu0 0.0
    %76 = vmatpush1.msra.mxu0 0.0
    %77 = vmatprep.subr.mxu0 0.0
    %78 = vmatpush1.msra.mxu0 0.0
    %79 = vmatprep.subr.mxu0 0.0
    %80 = vmatpush1.msra.mxu0 0.0
    %81 = vmatprep.subr.mxu0 0.0
    %82 = vmatpush1.msra.mxu0 0.0
    %83 = vmatprep.subr.mxu0 0.0
    %84 = vmatpush1.msra.mxu0 0.0
    %85 = vmatprep.subr.mxu0 0.0
    %86 = vmatpush1.msra.mxu0 0.0
    %87 = vmatprep.subr.mxu0 0.0
    %88 = vmatpush1.msra.mxu0 0.0
    %89 = vmatprep.subr.mxu0 0.0
    %90 = vmatpush1.msra.mxu0 0.0
    %91 = vmatprep.subr.mxu0 0.0
    %92 = vmatpush1.msra.mxu0 0.0
    %93 = vmatprep.subr.mxu0 0.0
    %94 = vmatpush1.msra.mxu0 0.0
    %95 = vmatprep.subr.mxu0 0.0
    %96 = vmatpush1.msra.mxu0 0.0
    %97 = vmatprep.subr.mxu0 0.0
    %98 = vmatpush1.msra.mxu0 0.0
    %99 = vmatprep.mubr.f32.mxu0 0.0
    %100 = vmatmul.mubr.f32.gmra.mrb[0].mxu0 %v28
    %v101 = vpop.f32.mrb[0].mxu0
    %v102 = vadd.f32 %v22, %v101
    %v103 = vpop.f32.mrb[0].mxu0
    %v104 = vadd.f32 %v22, %v103
    %105 = vdwg.mxu0
    %v106 = vxor.u32 %v102, 2147483648
    %v107 = vxor.u32 %v104, 2147483648
    %v108 = vmul.f32 %v106, 1.442695
    %v109 = vpow.pop %v108
    %v110 = vmul.f32 %v107, 1.442695
    %v111 = vpow.pop %v110
    %v112 = vadd.f32 %v109, 1.0
    %v113 = vadd.f32 %v111, 1.0
    %v114 = vrcp.pop %v112
    %v115 = vmul.f32 1.0, %v114
    %v116 = vrcp.pop %v113
    %v117 = vmul.f32 1.0, %v116
    %v118 = vlaneseq
    %v119 = vshrl.u32 %v118, 7
    %v120 = vsub.s32 4, %v119
    %v121 = vrot.slane %v115, %v120
    %v122 = vlaneseq
    %v123 = vshrl.u32 %v122, 7
    %v124 = vsub.s32 4, %v123
    %v125 = vrot.slane %v117, %v124
    %v126 = vmul.f32 %v115, %v121
    %v127 = vmul.f32 %v117, %v125
    %vm128 = vcmask 1047557
    %v129 = vsel %vm128, %v126, -inf
    %v130 = vrot.slane %v129, 4
    %v131 = vmax.f32 %v129, %v130
    %v132 = vrot.slane %v131, 2
    %v133 = vmax.f32 %v131, %v132
    %v134 = vrot.slane %v133, 1
    %v135 = vmax.f32 %v133, %v134
    %v136 = vsel %vm128, %v127, -inf
    %v137 = vrot.slane %v136, 4
    %v138 = vmax.f32 %v136, %v137
    %v139 = vrot.slane %v138, 2
    %v140 = vmax.f32 %v138, %v139
    %v141 = vrot.slane %v140, 1
    %v142 = vmax.f32 %v140, %v141
    %v143 = vlaneseq
    %v144 = vshrl.u32 %v143, 7
    %vm145 = vcmp.eq.f32.partialorder %v126, %v135
    %vm146 = vcmp.eq.f32.partialorder %v127, %v142
    %v147 = vrot.slane %v144, 3
    %v148 = vsel %vm145, %v147, 3
    %v149 = vsel %vm146, %v147, 3
    %v150 = vsel %vm128, %v148, 2147483647
    %v151 = vrot.slane %v150, 4
    %vm152 = vcmp.lt.s32.totalorder %v150, %v151
    %v153 = vsel %vm152, %v150, %v151
    %v154 = vrot.slane %v153, 2
    %vm155 = vcmp.lt.s32.totalorder %v153, %v154
    %v156 = vsel %vm155, %v153, %v154
    %v157 = vrot.slane %v156, 1
    %vm158 = vcmp.lt.s32.totalorder %v156, %v157
    %v159 = vsel %vm158, %v156, %v157
    %v160 = vsel %vm128, %v149, 2147483647
    %v161 = vrot.slane %v160, 4
    %vm162 = vcmp.lt.s32.totalorder %v160, %v161
    %v163 = vsel %vm162, %v160, %v161
    %v164 = vrot.slane %v163, 2
    %vm165 = vcmp.lt.s32.totalorder %v163, %v164
    %v166 = vsel %vm165, %v163, %v164
    %v167 = vrot.slane %v166, 1
    %vm168 = vcmp.lt.s32.totalorder %v166, %v167
    %v169 = vsel %vm168, %v166, %v167
    %v170 = vcvt.s32.f32 %v159
    %v171 = vcvt.s32.f32 %v169
    %v172 = vmul.f32 %v115, 0.5
    %v173 = vmul.f32 %v117, 0.5
    %v176 = vrot.slane %v172, 2
    %v177 = vrot.slane %v173, 2
    %v180 = vsub.f32 %v115, %v176
    %v181 = vsub.f32 %v117, %v177
    %v182 = vadd.f32 %v115, %v176
    %v183 = vadd.f32 %v117, %v177
    %v184 = vsub.f32 %v182, %v180
    %v185 = vsub.f32 %v183, %v181
    %v188 = vrot.slane %v184, 7
    %v189 = vrot.slane %v185, 7
    %v192 = vmul.f32 %v184, %v188
    %v193 = vmul.f32 %v185, %v189
    %vm194 = vcmp.gt.f32.partialorder %v115, 0.25
    %vm195 = vcmp.gt.f32.partialorder %v117, 0.25
    %v196 = vsel %vm194, %v135, -1.0
    %v197 = vsel %vm195, %v142, -1.0
    %v200 = vrot.slane %v180, 1
    %v201 = vrot.slane %v181, 1
    %v204 = vrot.slane %v180, 7
    %v205 = vrot.slane %v181, 7
    %v210 = vrot.slane %v182, 7
    %v211 = vrot.slane %v183, 7
    %v214 = vrot.slane %v182, 5
    %v215 = vrot.slane %v183, 5
    %v220 = vrot.slane %v192, 3
    %v221 = vrot.slane %v193, 3
    %vm224 = vcmask 1040384
    %v225 = vsel %vm224, %v200, %v204
    %v226 = vsel %vm224, %v201, %v205
    %vm227 = vcmask 1041408
    %v228 = vsel %vm227, %v225, %v210
    %v229 = vsel %vm227, %v226, %v211
    %vm230 = vcmask 1042432
    %v231 = vsel %vm230, %v228, %v214
    %v232 = vsel %vm230, %v229, %v215
    %v233 = vsel %vm30, %v231, %v135
    %v234 = vsel %vm30, %v232, %v142
    %vm235 = vcmask 1044480
    %v236 = vsel %vm235, %v233, %v170
    %v237 = vsel %vm235, %v234, %v171
    %vm238 = vcmask 1045504
    %v239 = vsel %vm238, %v236, %v220
    %v240 = vsel %vm238, %v237, %v221
    %vm241 = vcmask 1046528
    %v242 = vsel %vm241, %v239, 0.0
    %v243 = vsel %vm241, %v240, 0.0
    %v244 = vlaneseq
    %v245 = vand.u32 %v244, 127
    %v246 = vadd.s32 %v245, 128
    %vm247 = vcmp.eq.s32.totalorder %v144, 5
    %v248 = vsel %vm247, -1.0, 0.0
    %vm249 = vcmask 1044484
    %v250 = vsel %vm249, %v196, -inf
    %v251 = vsel %vm249, %v197, -inf
    %v252 = vmax.f32 %v250, %v251
    %253 = vmax.xlane.f32.xlu0 %v252
    %v254 = vpop.xlane.xlu0 %253
    %v255 = vrot.slane %v254, 4
    %v256 = vmax.f32 %v254, %v255
    %v257 = vrot.slane %v256, 2
    %v258 = vmax.f32 %v256, %v257
    %v259 = vrot.slane %v258, 1
    %v260 = vmax.f32 %v258, %v259
    %s261 = vtos %v260
    %p262 = scmp.gt.f32.partialorder %s261, 0.0
    %v263 = vstv %s261
    %vm264 = vcmp.eq.f32.partialorder %v196, %v263
    %vm265 = vcmp.eq.f32.partialorder %v197, %v263
    %vm266 = vcmp.gt.f32.partialorder %v196, 0.0
    %vm267 = vcmp.gt.f32.partialorder %v197, 0.0
    %vm268 = vmand %vm264, %vm266
    %vm269 = vmand %vm265, %vm267
    %v270 = vsel %vm268, %v245, 256
    %v271 = vsel %vm269, %v246, 256
    %v272 = vsel %vm249, %v270, 2147483647
    %v273 = vsel %vm249, %v271, 2147483647
    %vm274 = vcmp.lt.s32.totalorder %v272, %v273
    %v275 = vsel %vm274, %v272, %v273
    %v276 = vand.u32 %v275, 65535
    %v277 = vshra.s32 %v275, 16
    %v278 = vcvt.s32.f32 %v276
    %v279 = vcvt.s32.f32 %v277
    %280 = vmin.xlane.f32.xlu0 %v279
    %v281 = vpop.xlane.xlu0 %280
    %vm282 = vcmp.eq.f32.partialorder %v279, %v281
    %v283 = vsel %vm282, %v278, inf
    %284 = vmin.xlane.f32.xlu0 %v283
    %v285 = vpop.xlane.xlu0 %284
    %v286 = vcvt.f32.s32 %v285
    %v287 = vcvt.f32.s32 %v281
    %v288 = vshll.u32 %v287, 16
    %v289 = vadd.s32 %v288, %v286
    %v290 = vrot.slane %v289, 4
    %vm291 = vcmp.lt.s32.totalorder %v289, %v290
    %v292 = vsel %vm291, %v289, %v290
    %v293 = vrot.slane %v292, 2
    %vm294 = vcmp.lt.s32.totalorder %v292, %v293
    %v295 = vsel %vm294, %v292, %v293
    %v296 = vrot.slane %v295, 1
    %vm297 = vcmp.lt.s32.totalorder %v295, %v296
    %v298 = vsel %vm297, %v295, %v296
    %s299 = vtos %v298
    %v300 = vstv %s299
    %vm301 = vcmp.eq.s32.totalorder %v245, %v300
    %vm302 = vcmp.eq.s32.totalorder %v246, %v300
    %v303 = vsel %vm301, 1, 0
    %v304 = vsel %vm302, 1, 0
    %vm305 = vcmp.eq.s32.totalorder %v303, 1
    %vm306 = vcmp.eq.s32.totalorder %v304, 1
    %v307 = vsel %vm305, %v242, 0.0
    %v308 = vsel %vm306, %v243, 0.0
    %v309 = vadd.f32 %v307, %v308
    %310 = vadd.xlane.f32.xlu0 %v309
    %v311 = vpop.xlane.xlu0 %310
    %v313 = vrot.slane %v311, 7
    %v315 = vmax.f32 %v180, %v313
    %v316 = vmax.f32 %v181, %v313
    %v317 = vrot.slane %v311, 1
    %v319 = vmax.f32 %v180, %v317
    %v320 = vmax.f32 %v181, %v317
    %v321 = vmin.f32 %v182, %v317
    %v322 = vmin.f32 %v183, %v317
    %v323 = vrot.slane %v311, 3
    %v325 = vmin.f32 %v182, %v323
    %v326 = vmin.f32 %v183, %v323
    %v327 = vsub.f32 %v321, %v315
    %v328 = vsub.f32 %v322, %v316
    %v329 = vmax.f32 %v327, 0.0
    %v330 = vmax.f32 %v328, 0.0
    %v331 = vsub.f32 %v325, %v319
    %v332 = vsub.f32 %v326, %v320
    %v333 = vmax.f32 %v331, 0.0
    %v334 = vmax.f32 %v332, 0.0
    %v337 = vrot.slane %v333, 7
    %v338 = vrot.slane %v334, 7
    %v341 = vmul.f32 %v329, %v337
    %v342 = vmul.f32 %v330, %v338
    %v343 = vrot.slane %v311, 5
    %v345 = vadd.f32 %v192, %v343
    %v346 = vadd.f32 %v193, %v343
    %v347 = vsub.f32 %v345, %v341
    %v348 = vsub.f32 %v346, %v342
    %v349 = vmax.f32 %v347, 1e-09
    %v350 = vmax.f32 %v348, 1e-09
    %v351 = vrcp.pop %v349
    %v352 = vmul.f32 %v341, %v351
    %v353 = vrcp.pop %v350
    %v354 = vmul.f32 %v342, %v353
    %vm355 = vcmp.gt.f32.partialorder %v352, 0.45
    %vm356 = vcmp.gt.f32.partialorder %v354, 0.45
    %vm357 = vmor %vm355, %vm301
    %vm358 = vmor %vm356, %vm302
    %s359 = scalar_select %p262, 1, 0
    %v360 = vstv %s359
    %vm361 = vcmp.eq.s32.totalorder %v360, 1
    %vm362 = vmand %vm361, %vm357
    %vm363 = vmand %vm361, %vm358
    %v366 = vrot.slane %v196, 3
    %v367 = vrot.slane %v197, 3
    %v370 = vsel %vm362, -1.0, %v366
    %v371 = vsel %vm363, -1.0, %v367
    %vm372 = vcmp.eq.s32.totalorder %v245, 0
    %vm373 = vmand %vm372, %vm361
    %v374 = vsel %vm373, %v311, %v248
    %vm375 = vcmask 1041409
    %v376 = vsel %vm375, %v370, -inf
    %v377 = vsel %vm375, %v371, -inf
    %v378 = vmax.f32 %v376, %v377
    %379 = vmax.xlane.f32.xlu0 %v378
    %v380 = vpop.xlane.xlu0 %379
    %v381 = vrot.slane %v380, 4
    %v382 = vmax.f32 %v380, %v381
    %v383 = vrot.slane %v382, 2
    %v384 = vmax.f32 %v382, %v383
    %v385 = vrot.slane %v384, 1
    %v386 = vmax.f32 %v384, %v385
    %s387 = vtos %v386
    %p388 = scmp.gt.f32.partialorder %s387, 0.0
    %v389 = vstv %s387
    %vm390 = vcmp.eq.f32.partialorder %v370, %v389
    %vm391 = vcmp.eq.f32.partialorder %v371, %v389
    %vm392 = vcmp.gt.f32.partialorder %v370, 0.0
    %vm393 = vcmp.gt.f32.partialorder %v371, 0.0
    %vm394 = vmand %vm390, %vm392
    %vm395 = vmand %vm391, %vm393
    %v396 = vsel %vm394, %v245, 256
    %v397 = vsel %vm395, %v246, 256
    %v398 = vsel %vm375, %v396, 2147483647
    %v399 = vsel %vm375, %v397, 2147483647
    %vm400 = vcmp.lt.s32.totalorder %v398, %v399
    %v401 = vsel %vm400, %v398, %v399
    %v402 = vand.u32 %v401, 65535
    %v403 = vshra.s32 %v401, 16
    %v404 = vcvt.s32.f32 %v402
    %v405 = vcvt.s32.f32 %v403
    %406 = vmin.xlane.f32.xlu0 %v405
    %v407 = vpop.xlane.xlu0 %406
    %vm408 = vcmp.eq.f32.partialorder %v405, %v407
    %v409 = vsel %vm408, %v404, inf
    %410 = vmin.xlane.f32.xlu0 %v409
    %v411 = vpop.xlane.xlu0 %410
    %v412 = vcvt.f32.s32 %v411
    %v413 = vcvt.f32.s32 %v407
    %v414 = vshll.u32 %v413, 16
    %v415 = vadd.s32 %v414, %v412
    %v416 = vrot.slane %v415, 4
    %vm417 = vcmp.lt.s32.totalorder %v415, %v416
    %v418 = vsel %vm417, %v415, %v416
    %v419 = vrot.slane %v418, 2
    %vm420 = vcmp.lt.s32.totalorder %v418, %v419
    %v421 = vsel %vm420, %v418, %v419
    %v422 = vrot.slane %v421, 1
    %vm423 = vcmp.lt.s32.totalorder %v421, %v422
    %v424 = vsel %vm423, %v421, %v422
    %s425 = vtos %v424
    %v426 = vstv %s425
    %vm427 = vcmp.eq.s32.totalorder %v245, %v426
    %vm428 = vcmp.eq.s32.totalorder %v246, %v426
    %v429 = vsel %vm427, 1, 0
    %v430 = vsel %vm428, 1, 0
    %vm431 = vcmp.eq.s32.totalorder %v429, 1
    %vm432 = vcmp.eq.s32.totalorder %v430, 1
    %v433 = vsel %vm431, %v242, 0.0
    %v434 = vsel %vm432, %v243, 0.0
    %v435 = vadd.f32 %v433, %v434
    %436 = vadd.xlane.f32.xlu0 %v435
    %v437 = vpop.xlane.xlu0 %436
    %v439 = vrot.slane %v437, 7
    %v441 = vmax.f32 %v180, %v439
    %v442 = vmax.f32 %v181, %v439
    %v443 = vrot.slane %v437, 1
    %v445 = vmax.f32 %v180, %v443
    %v446 = vmax.f32 %v181, %v443
    %v447 = vmin.f32 %v182, %v443
    %v448 = vmin.f32 %v183, %v443
    %v449 = vrot.slane %v437, 3
    %v451 = vmin.f32 %v182, %v449
    %v452 = vmin.f32 %v183, %v449
    %v453 = vsub.f32 %v447, %v441
    %v454 = vsub.f32 %v448, %v442
    %v455 = vmax.f32 %v453, 0.0
    %v456 = vmax.f32 %v454, 0.0
    %v457 = vsub.f32 %v451, %v445
    %v458 = vsub.f32 %v452, %v446
    %v459 = vmax.f32 %v457, 0.0
    %v460 = vmax.f32 %v458, 0.0
    %v463 = vrot.slane %v459, 7
    %v464 = vrot.slane %v460, 7
    %v467 = vmul.f32 %v455, %v463
    %v468 = vmul.f32 %v456, %v464
    %v469 = vrot.slane %v437, 5
    %v471 = vadd.f32 %v192, %v469
    %v472 = vadd.f32 %v193, %v469
    %v473 = vsub.f32 %v471, %v467
    %v474 = vsub.f32 %v472, %v468
    %v475 = vmax.f32 %v473, 1e-09
    %v476 = vmax.f32 %v474, 1e-09
    %v477 = vrcp.pop %v475
    %v478 = vmul.f32 %v467, %v477
    %v479 = vrcp.pop %v476
    %v480 = vmul.f32 %v468, %v479
    %vm481 = vcmp.gt.f32.partialorder %v478, 0.45
    %vm482 = vcmp.gt.f32.partialorder %v480, 0.45
    %vm483 = vmor %vm481, %vm427
    %vm484 = vmor %vm482, %vm428
    %s485 = scalar_select %p388, 1, 0
    %v486 = vstv %s485
    %vm487 = vcmp.eq.s32.totalorder %v486, 1
    %vm488 = vmand %vm487, %vm483
    %vm489 = vmand %vm487, %vm484
    %v490 = vsel %vm488, -1.0, %v370
    %v491 = vsel %vm489, -1.0, %v371
    %vm492 = vcmp.eq.s32.totalorder %v245, 1
    %vm493 = vmand %vm492, %vm487
    %v494 = vsel %vm493, %v437, %v374
    %v495 = vsel %vm375, %v490, -inf
    %v496 = vsel %vm375, %v491, -inf
    %v497 = vmax.f32 %v495, %v496
    %498 = vmax.xlane.f32.xlu0 %v497
    %v499 = vpop.xlane.xlu0 %498
    %v500 = vrot.slane %v499, 4
    %v501 = vmax.f32 %v499, %v500
    %v502 = vrot.slane %v501, 2
    %v503 = vmax.f32 %v501, %v502
    %v504 = vrot.slane %v503, 1
    %v505 = vmax.f32 %v503, %v504
    %s506 = vtos %v505
    %p507 = scmp.gt.f32.partialorder %s506, 0.0
    %v508 = vstv %s506
    %vm509 = vcmp.eq.f32.partialorder %v490, %v508
    %vm510 = vcmp.eq.f32.partialorder %v491, %v508
    %vm511 = vcmp.gt.f32.partialorder %v490, 0.0
    %vm512 = vcmp.gt.f32.partialorder %v491, 0.0
    %vm513 = vmand %vm509, %vm511
    %vm514 = vmand %vm510, %vm512
    %v515 = vsel %vm513, %v245, 256
    %v516 = vsel %vm514, %v246, 256
    %v517 = vsel %vm375, %v515, 2147483647
    %v518 = vsel %vm375, %v516, 2147483647
    %vm519 = vcmp.lt.s32.totalorder %v517, %v518
    %v520 = vsel %vm519, %v517, %v518
    %v521 = vand.u32 %v520, 65535
    %v522 = vshra.s32 %v520, 16
    %v523 = vcvt.s32.f32 %v521
    %v524 = vcvt.s32.f32 %v522
    %525 = vmin.xlane.f32.xlu0 %v524
    %v526 = vpop.xlane.xlu0 %525
    %vm527 = vcmp.eq.f32.partialorder %v524, %v526
    %v528 = vsel %vm527, %v523, inf
    %529 = vmin.xlane.f32.xlu0 %v528
    %v530 = vpop.xlane.xlu0 %529
    %v531 = vcvt.f32.s32 %v530
    %v532 = vcvt.f32.s32 %v526
    %v533 = vshll.u32 %v532, 16
    %v534 = vadd.s32 %v533, %v531
    %v535 = vrot.slane %v534, 4
    %vm536 = vcmp.lt.s32.totalorder %v534, %v535
    %v537 = vsel %vm536, %v534, %v535
    %v538 = vrot.slane %v537, 2
    %vm539 = vcmp.lt.s32.totalorder %v537, %v538
    %v540 = vsel %vm539, %v537, %v538
    %v541 = vrot.slane %v540, 1
    %vm542 = vcmp.lt.s32.totalorder %v540, %v541
    %v543 = vsel %vm542, %v540, %v541
    %s544 = vtos %v543
    %v545 = vstv %s544
    %vm546 = vcmp.eq.s32.totalorder %v245, %v545
    %vm547 = vcmp.eq.s32.totalorder %v246, %v545
    %v548 = vsel %vm546, 1, 0
    %v549 = vsel %vm547, 1, 0
    %vm550 = vcmp.eq.s32.totalorder %v548, 1
    %vm551 = vcmp.eq.s32.totalorder %v549, 1
    %v552 = vsel %vm550, %v242, 0.0
    %v553 = vsel %vm551, %v243, 0.0
    %v554 = vadd.f32 %v552, %v553
    %555 = vadd.xlane.f32.xlu0 %v554
    %v556 = vpop.xlane.xlu0 %555
    %v558 = vrot.slane %v556, 7
    %v560 = vmax.f32 %v180, %v558
    %v561 = vmax.f32 %v181, %v558
    %v562 = vrot.slane %v556, 1
    %v564 = vmax.f32 %v180, %v562
    %v565 = vmax.f32 %v181, %v562
    %v566 = vmin.f32 %v182, %v562
    %v567 = vmin.f32 %v183, %v562
    %v568 = vrot.slane %v556, 3
    %v570 = vmin.f32 %v182, %v568
    %v571 = vmin.f32 %v183, %v568
    %v572 = vsub.f32 %v566, %v560
    %v573 = vsub.f32 %v567, %v561
    %v574 = vmax.f32 %v572, 0.0
    %v575 = vmax.f32 %v573, 0.0
    %v576 = vsub.f32 %v570, %v564
    %v577 = vsub.f32 %v571, %v565
    %v578 = vmax.f32 %v576, 0.0
    %v579 = vmax.f32 %v577, 0.0
    %v582 = vrot.slane %v578, 7
    %v583 = vrot.slane %v579, 7
    %v586 = vmul.f32 %v574, %v582
    %v587 = vmul.f32 %v575, %v583
    %v588 = vrot.slane %v556, 5
    %v590 = vadd.f32 %v192, %v588
    %v591 = vadd.f32 %v193, %v588
    %v592 = vsub.f32 %v590, %v586
    %v593 = vsub.f32 %v591, %v587
    %v594 = vmax.f32 %v592, 1e-09
    %v595 = vmax.f32 %v593, 1e-09
    %v596 = vrcp.pop %v594
    %v597 = vmul.f32 %v586, %v596
    %v598 = vrcp.pop %v595
    %v599 = vmul.f32 %v587, %v598
    %vm600 = vcmp.gt.f32.partialorder %v597, 0.45
    %vm601 = vcmp.gt.f32.partialorder %v599, 0.45
    %vm602 = vmor %vm600, %vm546
    %vm603 = vmor %vm601, %vm547
    %s604 = scalar_select %p507, 1, 0
    %v605 = vstv %s604
    %vm606 = vcmp.eq.s32.totalorder %v605, 1
    %vm607 = vmand %vm606, %vm602
    %vm608 = vmand %vm606, %vm603
    %v609 = vsel %vm607, -1.0, %v490
    %v610 = vsel %vm608, -1.0, %v491
    %vm611 = vcmp.eq.s32.totalorder %v245, 2
    %vm612 = vmand %vm611, %vm606
    %v613 = vsel %vm612, %v556, %v494
    %v614 = vsel %vm375, %v609, -inf
    %v615 = vsel %vm375, %v610, -inf
    %v616 = vmax.f32 %v614, %v615
    %617 = vmax.xlane.f32.xlu0 %v616
    %v618 = vpop.xlane.xlu0 %617
    %v619 = vrot.slane %v618, 4
    %v620 = vmax.f32 %v618, %v619
    %v621 = vrot.slane %v620, 2
    %v622 = vmax.f32 %v620, %v621
    %v623 = vrot.slane %v622, 1
    %v624 = vmax.f32 %v622, %v623
    %s625 = vtos %v624
    %p626 = scmp.gt.f32.partialorder %s625, 0.0
    %v627 = vstv %s625
    %vm628 = vcmp.eq.f32.partialorder %v609, %v627
    %vm629 = vcmp.eq.f32.partialorder %v610, %v627
    %vm630 = vcmp.gt.f32.partialorder %v609, 0.0
    %vm631 = vcmp.gt.f32.partialorder %v610, 0.0
    %vm632 = vmand %vm628, %vm630
    %vm633 = vmand %vm629, %vm631
    %v634 = vsel %vm632, %v245, 256
    %v635 = vsel %vm633, %v246, 256
    %v636 = vsel %vm375, %v634, 2147483647
    %v637 = vsel %vm375, %v635, 2147483647
    %vm638 = vcmp.lt.s32.totalorder %v636, %v637
    %v639 = vsel %vm638, %v636, %v637
    %v640 = vand.u32 %v639, 65535
    %v641 = vshra.s32 %v639, 16
    %v642 = vcvt.s32.f32 %v640
    %v643 = vcvt.s32.f32 %v641
    %644 = vmin.xlane.f32.xlu0 %v643
    %v645 = vpop.xlane.xlu0 %644
    %vm646 = vcmp.eq.f32.partialorder %v643, %v645
    %v647 = vsel %vm646, %v642, inf
    %648 = vmin.xlane.f32.xlu0 %v647
    %v649 = vpop.xlane.xlu0 %648
    %v650 = vcvt.f32.s32 %v649
    %v651 = vcvt.f32.s32 %v645
    %v652 = vshll.u32 %v651, 16
    %v653 = vadd.s32 %v652, %v650
    %v654 = vrot.slane %v653, 4
    %vm655 = vcmp.lt.s32.totalorder %v653, %v654
    %v656 = vsel %vm655, %v653, %v654
    %v657 = vrot.slane %v656, 2
    %vm658 = vcmp.lt.s32.totalorder %v656, %v657
    %v659 = vsel %vm658, %v656, %v657
    %v660 = vrot.slane %v659, 1
    %vm661 = vcmp.lt.s32.totalorder %v659, %v660
    %v662 = vsel %vm661, %v659, %v660
    %s663 = vtos %v662
    %v664 = vstv %s663
    %vm665 = vcmp.eq.s32.totalorder %v245, %v664
    %vm666 = vcmp.eq.s32.totalorder %v246, %v664
    %v667 = vsel %vm665, 1, 0
    %v668 = vsel %vm666, 1, 0
    %vm669 = vcmp.eq.s32.totalorder %v667, 1
    %vm670 = vcmp.eq.s32.totalorder %v668, 1
    %v671 = vsel %vm669, %v242, 0.0
    %v672 = vsel %vm670, %v243, 0.0
    %v673 = vadd.f32 %v671, %v672
    %674 = vadd.xlane.f32.xlu0 %v673
    %v675 = vpop.xlane.xlu0 %674
    %v677 = vrot.slane %v675, 7
    %v679 = vmax.f32 %v180, %v677
    %v680 = vmax.f32 %v181, %v677
    %v681 = vrot.slane %v675, 1
    %v683 = vmax.f32 %v180, %v681
    %v684 = vmax.f32 %v181, %v681
    %v685 = vmin.f32 %v182, %v681
    %v686 = vmin.f32 %v183, %v681
    %v687 = vrot.slane %v675, 3
    %v689 = vmin.f32 %v182, %v687
    %v690 = vmin.f32 %v183, %v687
    %v691 = vsub.f32 %v685, %v679
    %v692 = vsub.f32 %v686, %v680
    %v693 = vmax.f32 %v691, 0.0
    %v694 = vmax.f32 %v692, 0.0
    %v695 = vsub.f32 %v689, %v683
    %v696 = vsub.f32 %v690, %v684
    %v697 = vmax.f32 %v695, 0.0
    %v698 = vmax.f32 %v696, 0.0
    %v701 = vrot.slane %v697, 7
    %v702 = vrot.slane %v698, 7
    %v705 = vmul.f32 %v693, %v701
    %v706 = vmul.f32 %v694, %v702
    %v707 = vrot.slane %v675, 5
    %v709 = vadd.f32 %v192, %v707
    %v710 = vadd.f32 %v193, %v707
    %v711 = vsub.f32 %v709, %v705
    %v712 = vsub.f32 %v710, %v706
    %v713 = vmax.f32 %v711, 1e-09
    %v714 = vmax.f32 %v712, 1e-09
    %v715 = vrcp.pop %v713
    %v716 = vmul.f32 %v705, %v715
    %v717 = vrcp.pop %v714
    %v718 = vmul.f32 %v706, %v717
    %vm719 = vcmp.gt.f32.partialorder %v716, 0.45
    %vm720 = vcmp.gt.f32.partialorder %v718, 0.45
    %vm721 = vmor %vm719, %vm665
    %vm722 = vmor %vm720, %vm666
    %s723 = scalar_select %p626, 1, 0
    %v724 = vstv %s723
    %vm725 = vcmp.eq.s32.totalorder %v724, 1
    %vm726 = vmand %vm725, %vm721
    %vm727 = vmand %vm725, %vm722
    %v728 = vsel %vm726, -1.0, %v609
    %v729 = vsel %vm727, -1.0, %v610
    %vm730 = vcmp.eq.s32.totalorder %v245, 3
    %vm731 = vmand %vm730, %vm725
    %v732 = vsel %vm731, %v675, %v613
    %v733 = vsel %vm375, %v728, -inf
    %v734 = vsel %vm375, %v729, -inf
    %v735 = vmax.f32 %v733, %v734
    %736 = vmax.xlane.f32.xlu0 %v735
    %v737 = vpop.xlane.xlu0 %736
    %v738 = vrot.slane %v737, 4
    %v739 = vmax.f32 %v737, %v738
    %v740 = vrot.slane %v739, 2
    %v741 = vmax.f32 %v739, %v740
    %v742 = vrot.slane %v741, 1
    %v743 = vmax.f32 %v741, %v742
    %s744 = vtos %v743
    %p745 = scmp.gt.f32.partialorder %s744, 0.0
    %v746 = vstv %s744
    %vm747 = vcmp.eq.f32.partialorder %v728, %v746
    %vm748 = vcmp.eq.f32.partialorder %v729, %v746
    %vm749 = vcmp.gt.f32.partialorder %v728, 0.0
    %vm750 = vcmp.gt.f32.partialorder %v729, 0.0
    %vm751 = vmand %vm747, %vm749
    %vm752 = vmand %vm748, %vm750
    %v753 = vsel %vm751, %v245, 256
    %v754 = vsel %vm752, %v246, 256
    %v755 = vsel %vm375, %v753, 2147483647
    %v756 = vsel %vm375, %v754, 2147483647
    %vm757 = vcmp.lt.s32.totalorder %v755, %v756
    %v758 = vsel %vm757, %v755, %v756
    %v759 = vand.u32 %v758, 65535
    %v760 = vshra.s32 %v758, 16
    %v761 = vcvt.s32.f32 %v759
    %v762 = vcvt.s32.f32 %v760
    %763 = vmin.xlane.f32.xlu0 %v762
    %v764 = vpop.xlane.xlu0 %763
    %vm765 = vcmp.eq.f32.partialorder %v762, %v764
    %v766 = vsel %vm765, %v761, inf
    %767 = vmin.xlane.f32.xlu0 %v766
    %v768 = vpop.xlane.xlu0 %767
    %v769 = vcvt.f32.s32 %v768
    %v770 = vcvt.f32.s32 %v764
    %v771 = vshll.u32 %v770, 16
    %v772 = vadd.s32 %v771, %v769
    %v773 = vrot.slane %v772, 4
    %vm774 = vcmp.lt.s32.totalorder %v772, %v773
    %v775 = vsel %vm774, %v772, %v773
    %v776 = vrot.slane %v775, 2
    %vm777 = vcmp.lt.s32.totalorder %v775, %v776
    %v778 = vsel %vm777, %v775, %v776
    %v779 = vrot.slane %v778, 1
    %vm780 = vcmp.lt.s32.totalorder %v778, %v779
    %v781 = vsel %vm780, %v778, %v779
    %s782 = vtos %v781
    %v783 = vstv %s782
    %vm784 = vcmp.eq.s32.totalorder %v245, %v783
    %vm785 = vcmp.eq.s32.totalorder %v246, %v783
    %v786 = vsel %vm784, 1, 0
    %v787 = vsel %vm785, 1, 0
    %vm788 = vcmp.eq.s32.totalorder %v786, 1
    %vm789 = vcmp.eq.s32.totalorder %v787, 1
    %v790 = vsel %vm788, %v242, 0.0
    %v791 = vsel %vm789, %v243, 0.0
    %v792 = vadd.f32 %v790, %v791
    %793 = vadd.xlane.f32.xlu0 %v792
    %v794 = vpop.xlane.xlu0 %793
    %v796 = vrot.slane %v794, 7
    %v798 = vmax.f32 %v180, %v796
    %v799 = vmax.f32 %v181, %v796
    %v800 = vrot.slane %v794, 1
    %v802 = vmax.f32 %v180, %v800
    %v803 = vmax.f32 %v181, %v800
    %v804 = vmin.f32 %v182, %v800
    %v805 = vmin.f32 %v183, %v800
    %v806 = vrot.slane %v794, 3
    %v808 = vmin.f32 %v182, %v806
    %v809 = vmin.f32 %v183, %v806
    %v810 = vsub.f32 %v804, %v798
    %v811 = vsub.f32 %v805, %v799
    %v812 = vmax.f32 %v810, 0.0
    %v813 = vmax.f32 %v811, 0.0
    %v814 = vsub.f32 %v808, %v802
    %v815 = vsub.f32 %v809, %v803
    %v816 = vmax.f32 %v814, 0.0
    %v817 = vmax.f32 %v815, 0.0
    %v820 = vrot.slane %v816, 7
    %v821 = vrot.slane %v817, 7
    %v824 = vmul.f32 %v812, %v820
    %v825 = vmul.f32 %v813, %v821
    %v826 = vrot.slane %v794, 5
    %v828 = vadd.f32 %v192, %v826
    %v829 = vadd.f32 %v193, %v826
    %v830 = vsub.f32 %v828, %v824
    %v831 = vsub.f32 %v829, %v825
    %v832 = vmax.f32 %v830, 1e-09
    %v833 = vmax.f32 %v831, 1e-09
    %v834 = vrcp.pop %v832
    %v835 = vmul.f32 %v824, %v834
    %v836 = vrcp.pop %v833
    %v837 = vmul.f32 %v825, %v836
    %vm838 = vcmp.gt.f32.partialorder %v835, 0.45
    %vm839 = vcmp.gt.f32.partialorder %v837, 0.45
    %vm840 = vmor %vm838, %vm784
    %vm841 = vmor %vm839, %vm785
    %s842 = scalar_select %p745, 1, 0
    %v843 = vstv %s842
    %vm844 = vcmp.eq.s32.totalorder %v843, 1
    %vm845 = vmand %vm844, %vm840
    %vm846 = vmand %vm844, %vm841
    %v847 = vsel %vm845, -1.0, %v728
    %v848 = vsel %vm846, -1.0, %v729
    %vm849 = vcmp.eq.s32.totalorder %v245, 4
    %vm850 = vmand %vm849, %vm844
    %v851 = vsel %vm850, %v794, %v732
    %v852 = vsel %vm375, %v847, -inf
    %v853 = vsel %vm375, %v848, -inf
    %v854 = vmax.f32 %v852, %v853
    %855 = vmax.xlane.f32.xlu0 %v854
    %v856 = vpop.xlane.xlu0 %855
    %v857 = vrot.slane %v856, 4
    %v858 = vmax.f32 %v856, %v857
    %v859 = vrot.slane %v858, 2
    %v860 = vmax.f32 %v858, %v859
    %v861 = vrot.slane %v860, 1
    %v862 = vmax.f32 %v860, %v861
    %s863 = vtos %v862
    %p864 = scmp.gt.f32.partialorder %s863, 0.0
    %v865 = vstv %s863
    %vm866 = vcmp.eq.f32.partialorder %v847, %v865
    %vm867 = vcmp.eq.f32.partialorder %v848, %v865
    %vm868 = vcmp.gt.f32.partialorder %v847, 0.0
    %vm869 = vcmp.gt.f32.partialorder %v848, 0.0
    %vm870 = vmand %vm866, %vm868
    %vm871 = vmand %vm867, %vm869
    %v872 = vsel %vm870, %v245, 256
    %v873 = vsel %vm871, %v246, 256
    %v874 = vsel %vm375, %v872, 2147483647
    %v875 = vsel %vm375, %v873, 2147483647
    %vm876 = vcmp.lt.s32.totalorder %v874, %v875
    %v877 = vsel %vm876, %v874, %v875
    %v878 = vand.u32 %v877, 65535
    %v879 = vshra.s32 %v877, 16
    %v880 = vcvt.s32.f32 %v878
    %v881 = vcvt.s32.f32 %v879
    %882 = vmin.xlane.f32.xlu0 %v881
    %v883 = vpop.xlane.xlu0 %882
    %vm884 = vcmp.eq.f32.partialorder %v881, %v883
    %v885 = vsel %vm884, %v880, inf
    %886 = vmin.xlane.f32.xlu0 %v885
    %v887 = vpop.xlane.xlu0 %886
    %v888 = vcvt.f32.s32 %v887
    %v889 = vcvt.f32.s32 %v883
    %v890 = vshll.u32 %v889, 16
    %v891 = vadd.s32 %v890, %v888
    %v892 = vrot.slane %v891, 4
    %vm893 = vcmp.lt.s32.totalorder %v891, %v892
    %v894 = vsel %vm893, %v891, %v892
    %v895 = vrot.slane %v894, 2
    %vm896 = vcmp.lt.s32.totalorder %v894, %v895
    %v897 = vsel %vm896, %v894, %v895
    %v898 = vrot.slane %v897, 1
    %vm899 = vcmp.lt.s32.totalorder %v897, %v898
    %v900 = vsel %vm899, %v897, %v898
    %s901 = vtos %v900
    %v902 = vstv %s901
    %vm903 = vcmp.eq.s32.totalorder %v245, %v902
    %vm904 = vcmp.eq.s32.totalorder %v246, %v902
    %v905 = vsel %vm903, 1, 0
    %v906 = vsel %vm904, 1, 0
    %vm907 = vcmp.eq.s32.totalorder %v905, 1
    %vm908 = vcmp.eq.s32.totalorder %v906, 1
    %v909 = vsel %vm907, %v242, 0.0
    %v910 = vsel %vm908, %v243, 0.0
    %v911 = vadd.f32 %v909, %v910
    %912 = vadd.xlane.f32.xlu0 %v911
    %v913 = vpop.xlane.xlu0 %912
    %v915 = vrot.slane %v913, 7
    %v917 = vmax.f32 %v180, %v915
    %v918 = vmax.f32 %v181, %v915
    %v919 = vrot.slane %v913, 1
    %v921 = vmax.f32 %v180, %v919
    %v922 = vmax.f32 %v181, %v919
    %v923 = vmin.f32 %v182, %v919
    %v924 = vmin.f32 %v183, %v919
    %v925 = vrot.slane %v913, 3
    %v927 = vmin.f32 %v182, %v925
    %v928 = vmin.f32 %v183, %v925
    %v929 = vsub.f32 %v923, %v917
    %v930 = vsub.f32 %v924, %v918
    %v931 = vmax.f32 %v929, 0.0
    %v932 = vmax.f32 %v930, 0.0
    %v933 = vsub.f32 %v927, %v921
    %v934 = vsub.f32 %v928, %v922
    %v935 = vmax.f32 %v933, 0.0
    %v936 = vmax.f32 %v934, 0.0
    %v939 = vrot.slane %v935, 7
    %v940 = vrot.slane %v936, 7
    %v943 = vmul.f32 %v931, %v939
    %v944 = vmul.f32 %v932, %v940
    %v945 = vrot.slane %v913, 5
    %v947 = vadd.f32 %v192, %v945
    %v948 = vadd.f32 %v193, %v945
    %v949 = vsub.f32 %v947, %v943
    %v950 = vsub.f32 %v948, %v944
    %v951 = vmax.f32 %v949, 1e-09
    %v952 = vmax.f32 %v950, 1e-09
    %v953 = vrcp.pop %v951
    %v954 = vmul.f32 %v943, %v953
    %v955 = vrcp.pop %v952
    %v956 = vmul.f32 %v944, %v955
    %vm957 = vcmp.gt.f32.partialorder %v954, 0.45
    %vm958 = vcmp.gt.f32.partialorder %v956, 0.45
    %vm959 = vmor %vm957, %vm903
    %vm960 = vmor %vm958, %vm904
    %s961 = scalar_select %p864, 1, 0
    %v962 = vstv %s961
    %vm963 = vcmp.eq.s32.totalorder %v962, 1
    %vm964 = vmand %vm963, %vm959
    %vm965 = vmand %vm963, %vm960
    %v966 = vsel %vm964, -1.0, %v847
    %v967 = vsel %vm965, -1.0, %v848
    %vm968 = vcmp.eq.s32.totalorder %v245, 5
    %vm969 = vmand %vm968, %vm963
    %v970 = vsel %vm969, %v913, %v851
    %v971 = vsel %vm375, %v966, -inf
    %v972 = vsel %vm375, %v967, -inf
    %v973 = vmax.f32 %v971, %v972
    %974 = vmax.xlane.f32.xlu0 %v973
    %v975 = vpop.xlane.xlu0 %974
    %v976 = vrot.slane %v975, 4
    %v977 = vmax.f32 %v975, %v976
    %v978 = vrot.slane %v977, 2
    %v979 = vmax.f32 %v977, %v978
    %v980 = vrot.slane %v979, 1
    %v981 = vmax.f32 %v979, %v980
    %s982 = vtos %v981
    %p983 = scmp.gt.f32.partialorder %s982, 0.0
    %v984 = vstv %s982
    %vm985 = vcmp.eq.f32.partialorder %v966, %v984
    %vm986 = vcmp.eq.f32.partialorder %v967, %v984
    %vm987 = vcmp.gt.f32.partialorder %v966, 0.0
    %vm988 = vcmp.gt.f32.partialorder %v967, 0.0
    %vm989 = vmand %vm985, %vm987
    %vm990 = vmand %vm986, %vm988
    %v991 = vsel %vm989, %v245, 256
    %v992 = vsel %vm990, %v246, 256
    %v993 = vsel %vm375, %v991, 2147483647
    %v994 = vsel %vm375, %v992, 2147483647
    %vm995 = vcmp.lt.s32.totalorder %v993, %v994
    %v996 = vsel %vm995, %v993, %v994
    %v997 = vand.u32 %v996, 65535
    %v998 = vshra.s32 %v996, 16
    %v999 = vcvt.s32.f32 %v997
    %v1000 = vcvt.s32.f32 %v998
    %1001 = vmin.xlane.f32.xlu0 %v1000
    %v1002 = vpop.xlane.xlu0 %1001
    %vm1003 = vcmp.eq.f32.partialorder %v1000, %v1002
    %v1004 = vsel %vm1003, %v999, inf
    %1005 = vmin.xlane.f32.xlu0 %v1004
    %v1006 = vpop.xlane.xlu0 %1005
    %v1007 = vcvt.f32.s32 %v1006
    %v1008 = vcvt.f32.s32 %v1002
    %v1009 = vshll.u32 %v1008, 16
    %v1010 = vadd.s32 %v1009, %v1007
    %v1011 = vrot.slane %v1010, 4
    %vm1012 = vcmp.lt.s32.totalorder %v1010, %v1011
    %v1013 = vsel %vm1012, %v1010, %v1011
    %v1014 = vrot.slane %v1013, 2
    %vm1015 = vcmp.lt.s32.totalorder %v1013, %v1014
    %v1016 = vsel %vm1015, %v1013, %v1014
    %v1017 = vrot.slane %v1016, 1
    %vm1018 = vcmp.lt.s32.totalorder %v1016, %v1017
    %v1019 = vsel %vm1018, %v1016, %v1017
    %s1020 = vtos %v1019
    %v1021 = vstv %s1020
    %vm1022 = vcmp.eq.s32.totalorder %v245, %v1021
    %vm1023 = vcmp.eq.s32.totalorder %v246, %v1021
    %v1024 = vsel %vm1022, 1, 0
    %v1025 = vsel %vm1023, 1, 0
    %vm1026 = vcmp.eq.s32.totalorder %v1024, 1
    %vm1027 = vcmp.eq.s32.totalorder %v1025, 1
    %v1028 = vsel %vm1026, %v242, 0.0
    %v1029 = vsel %vm1027, %v243, 0.0
    %v1030 = vadd.f32 %v1028, %v1029
    %1031 = vadd.xlane.f32.xlu0 %v1030
    %v1032 = vpop.xlane.xlu0 %1031
    %v1034 = vrot.slane %v1032, 7
    %v1036 = vmax.f32 %v180, %v1034
    %v1037 = vmax.f32 %v181, %v1034
    %v1038 = vrot.slane %v1032, 1
    %v1040 = vmax.f32 %v180, %v1038
    %v1041 = vmax.f32 %v181, %v1038
    %v1042 = vmin.f32 %v182, %v1038
    %v1043 = vmin.f32 %v183, %v1038
    %v1044 = vrot.slane %v1032, 3
    %v1046 = vmin.f32 %v182, %v1044
    %v1047 = vmin.f32 %v183, %v1044
    %v1048 = vsub.f32 %v1042, %v1036
    %v1049 = vsub.f32 %v1043, %v1037
    %v1050 = vmax.f32 %v1048, 0.0
    %v1051 = vmax.f32 %v1049, 0.0
    %v1052 = vsub.f32 %v1046, %v1040
    %v1053 = vsub.f32 %v1047, %v1041
    %v1054 = vmax.f32 %v1052, 0.0
    %v1055 = vmax.f32 %v1053, 0.0
    %v1058 = vrot.slane %v1054, 7
    %v1059 = vrot.slane %v1055, 7
    %v1062 = vmul.f32 %v1050, %v1058
    %v1063 = vmul.f32 %v1051, %v1059
    %v1064 = vrot.slane %v1032, 5
    %v1066 = vadd.f32 %v192, %v1064
    %v1067 = vadd.f32 %v193, %v1064
    %v1068 = vsub.f32 %v1066, %v1062
    %v1069 = vsub.f32 %v1067, %v1063
    %v1070 = vmax.f32 %v1068, 1e-09
    %v1071 = vmax.f32 %v1069, 1e-09
    %v1072 = vrcp.pop %v1070
    %v1073 = vmul.f32 %v1062, %v1072
    %v1074 = vrcp.pop %v1071
    %v1075 = vmul.f32 %v1063, %v1074
    %vm1076 = vcmp.gt.f32.partialorder %v1073, 0.45
    %vm1077 = vcmp.gt.f32.partialorder %v1075, 0.45
    %vm1078 = vmor %vm1076, %vm1022
    %vm1079 = vmor %vm1077, %vm1023
    %s1080 = scalar_select %p983, 1, 0
    %v1081 = vstv %s1080
    %vm1082 = vcmp.eq.s32.totalorder %v1081, 1
    %vm1083 = vmand %vm1082, %vm1078
    %vm1084 = vmand %vm1082, %vm1079
    %v1085 = vsel %vm1083, -1.0, %v966
    %v1086 = vsel %vm1084, -1.0, %v967
    %vm1087 = vcmp.eq.s32.totalorder %v245, 6
    %vm1088 = vmand %vm1087, %vm1082
    %v1089 = vsel %vm1088, %v1032, %v970
    %v1090 = vsel %vm375, %v1085, -inf
    %v1091 = vsel %vm375, %v1086, -inf
    %v1092 = vmax.f32 %v1090, %v1091
    %1093 = vmax.xlane.f32.xlu0 %v1092
    %v1094 = vpop.xlane.xlu0 %1093
    %v1095 = vrot.slane %v1094, 4
    %v1096 = vmax.f32 %v1094, %v1095
    %v1097 = vrot.slane %v1096, 2
    %v1098 = vmax.f32 %v1096, %v1097
    %v1099 = vrot.slane %v1098, 1
    %v1100 = vmax.f32 %v1098, %v1099
    %s1101 = vtos %v1100
    %p1102 = scmp.gt.f32.partialorder %s1101, 0.0
    %v1103 = vstv %s1101
    %vm1104 = vcmp.eq.f32.partialorder %v1085, %v1103
    %vm1105 = vcmp.eq.f32.partialorder %v1086, %v1103
    %vm1106 = vcmp.gt.f32.partialorder %v1085, 0.0
    %vm1107 = vcmp.gt.f32.partialorder %v1086, 0.0
    %vm1108 = vmand %vm1104, %vm1106
    %vm1109 = vmand %vm1105, %vm1107
    %v1110 = vsel %vm1108, %v245, 256
    %v1111 = vsel %vm1109, %v246, 256
    %v1112 = vsel %vm375, %v1110, 2147483647
    %v1113 = vsel %vm375, %v1111, 2147483647
    %vm1114 = vcmp.lt.s32.totalorder %v1112, %v1113
    %v1115 = vsel %vm1114, %v1112, %v1113
    %v1116 = vand.u32 %v1115, 65535
    %v1117 = vshra.s32 %v1115, 16
    %v1118 = vcvt.s32.f32 %v1116
    %v1119 = vcvt.s32.f32 %v1117
    %1120 = vmin.xlane.f32.xlu0 %v1119
    %v1121 = vpop.xlane.xlu0 %1120
    %vm1122 = vcmp.eq.f32.partialorder %v1119, %v1121
    %v1123 = vsel %vm1122, %v1118, inf
    %1124 = vmin.xlane.f32.xlu0 %v1123
    %v1125 = vpop.xlane.xlu0 %1124
    %v1126 = vcvt.f32.s32 %v1125
    %v1127 = vcvt.f32.s32 %v1121
    %v1128 = vshll.u32 %v1127, 16
    %v1129 = vadd.s32 %v1128, %v1126
    %v1130 = vrot.slane %v1129, 4
    %vm1131 = vcmp.lt.s32.totalorder %v1129, %v1130
    %v1132 = vsel %vm1131, %v1129, %v1130
    %v1133 = vrot.slane %v1132, 2
    %vm1134 = vcmp.lt.s32.totalorder %v1132, %v1133
    %v1135 = vsel %vm1134, %v1132, %v1133
    %v1136 = vrot.slane %v1135, 1
    %vm1137 = vcmp.lt.s32.totalorder %v1135, %v1136
    %v1138 = vsel %vm1137, %v1135, %v1136
    %s1139 = vtos %v1138
    %v1140 = vstv %s1139
    %vm1141 = vcmp.eq.s32.totalorder %v245, %v1140
    %vm1142 = vcmp.eq.s32.totalorder %v246, %v1140
    %v1143 = vsel %vm1141, 1, 0
    %v1144 = vsel %vm1142, 1, 0
    %vm1145 = vcmp.eq.s32.totalorder %v1143, 1
    %vm1146 = vcmp.eq.s32.totalorder %v1144, 1
    %v1147 = vsel %vm1145, %v242, 0.0
    %v1148 = vsel %vm1146, %v243, 0.0
    %v1149 = vadd.f32 %v1147, %v1148
    %1150 = vadd.xlane.f32.xlu0 %v1149
    %v1151 = vpop.xlane.xlu0 %1150
    %v1153 = vrot.slane %v1151, 7
    %v1155 = vmax.f32 %v180, %v1153
    %v1156 = vmax.f32 %v181, %v1153
    %v1157 = vrot.slane %v1151, 1
    %v1159 = vmax.f32 %v180, %v1157
    %v1160 = vmax.f32 %v181, %v1157
    %v1161 = vmin.f32 %v182, %v1157
    %v1162 = vmin.f32 %v183, %v1157
    %v1163 = vrot.slane %v1151, 3
    %v1165 = vmin.f32 %v182, %v1163
    %v1166 = vmin.f32 %v183, %v1163
    %v1167 = vsub.f32 %v1161, %v1155
    %v1168 = vsub.f32 %v1162, %v1156
    %v1169 = vmax.f32 %v1167, 0.0
    %v1170 = vmax.f32 %v1168, 0.0
    %v1171 = vsub.f32 %v1165, %v1159
    %v1172 = vsub.f32 %v1166, %v1160
    %v1173 = vmax.f32 %v1171, 0.0
    %v1174 = vmax.f32 %v1172, 0.0
    %v1177 = vrot.slane %v1173, 7
    %v1178 = vrot.slane %v1174, 7
    %v1181 = vmul.f32 %v1169, %v1177
    %v1182 = vmul.f32 %v1170, %v1178
    %v1183 = vrot.slane %v1151, 5
    %v1185 = vadd.f32 %v192, %v1183
    %v1186 = vadd.f32 %v193, %v1183
    %v1187 = vsub.f32 %v1185, %v1181
    %v1188 = vsub.f32 %v1186, %v1182
    %v1189 = vmax.f32 %v1187, 1e-09
    %v1190 = vmax.f32 %v1188, 1e-09
    %v1191 = vrcp.pop %v1189
    %v1192 = vmul.f32 %v1181, %v1191
    %v1193 = vrcp.pop %v1190
    %v1194 = vmul.f32 %v1182, %v1193
    %vm1195 = vcmp.gt.f32.partialorder %v1192, 0.45
    %vm1196 = vcmp.gt.f32.partialorder %v1194, 0.45
    %vm1197 = vmor %vm1195, %vm1141
    %vm1198 = vmor %vm1196, %vm1142
    %s1199 = scalar_select %p1102, 1, 0
    %v1200 = vstv %s1199
    %vm1201 = vcmp.eq.s32.totalorder %v1200, 1
    %vm1202 = vmand %vm1201, %vm1197
    %vm1203 = vmand %vm1201, %vm1198
    %v1204 = vsel %vm1202, -1.0, %v1085
    %v1205 = vsel %vm1203, -1.0, %v1086
    %vm1206 = vcmp.eq.s32.totalorder %v245, 7
    %vm1207 = vmand %vm1206, %vm1201
    %v1208 = vsel %vm1207, %v1151, %v1089
    %v1209 = vsel %vm375, %v1204, -inf
    %v1210 = vsel %vm375, %v1205, -inf
    %v1211 = vmax.f32 %v1209, %v1210
    %1212 = vmax.xlane.f32.xlu0 %v1211
    %v1213 = vpop.xlane.xlu0 %1212
    %v1214 = vrot.slane %v1213, 4
    %v1215 = vmax.f32 %v1213, %v1214
    %v1216 = vrot.slane %v1215, 2
    %v1217 = vmax.f32 %v1215, %v1216
    %v1218 = vrot.slane %v1217, 1
    %v1219 = vmax.f32 %v1217, %v1218
    %s1220 = vtos %v1219
    %p1221 = scmp.gt.f32.partialorder %s1220, 0.0
    %v1222 = vstv %s1220
    %vm1223 = vcmp.eq.f32.partialorder %v1204, %v1222
    %vm1224 = vcmp.eq.f32.partialorder %v1205, %v1222
    %vm1225 = vcmp.gt.f32.partialorder %v1204, 0.0
    %vm1226 = vcmp.gt.f32.partialorder %v1205, 0.0
    %vm1227 = vmand %vm1223, %vm1225
    %vm1228 = vmand %vm1224, %vm1226
    %v1229 = vsel %vm1227, %v245, 256
    %v1230 = vsel %vm1228, %v246, 256
    %v1231 = vsel %vm375, %v1229, 2147483647
    %v1232 = vsel %vm375, %v1230, 2147483647
    %vm1233 = vcmp.lt.s32.totalorder %v1231, %v1232
    %v1234 = vsel %vm1233, %v1231, %v1232
    %v1235 = vand.u32 %v1234, 65535
    %v1236 = vshra.s32 %v1234, 16
    %v1237 = vcvt.s32.f32 %v1235
    %v1238 = vcvt.s32.f32 %v1236
    %1239 = vmin.xlane.f32.xlu0 %v1238
    %v1240 = vpop.xlane.xlu0 %1239
    %vm1241 = vcmp.eq.f32.partialorder %v1238, %v1240
    %v1242 = vsel %vm1241, %v1237, inf
    %1243 = vmin.xlane.f32.xlu0 %v1242
    %v1244 = vpop.xlane.xlu0 %1243
    %v1245 = vcvt.f32.s32 %v1244
    %v1246 = vcvt.f32.s32 %v1240
    %v1247 = vshll.u32 %v1246, 16
    %v1248 = vadd.s32 %v1247, %v1245
    %v1249 = vrot.slane %v1248, 4
    %vm1250 = vcmp.lt.s32.totalorder %v1248, %v1249
    %v1251 = vsel %vm1250, %v1248, %v1249
    %v1252 = vrot.slane %v1251, 2
    %vm1253 = vcmp.lt.s32.totalorder %v1251, %v1252
    %v1254 = vsel %vm1253, %v1251, %v1252
    %v1255 = vrot.slane %v1254, 1
    %vm1256 = vcmp.lt.s32.totalorder %v1254, %v1255
    %v1257 = vsel %vm1256, %v1254, %v1255
    %s1258 = vtos %v1257
    %v1259 = vstv %s1258
    %vm1260 = vcmp.eq.s32.totalorder %v245, %v1259
    %vm1261 = vcmp.eq.s32.totalorder %v246, %v1259
    %v1262 = vsel %vm1260, 1, 0
    %v1263 = vsel %vm1261, 1, 0
    %vm1264 = vcmp.eq.s32.totalorder %v1262, 1
    %vm1265 = vcmp.eq.s32.totalorder %v1263, 1
    %v1266 = vsel %vm1264, %v242, 0.0
    %v1267 = vsel %vm1265, %v243, 0.0
    %v1268 = vadd.f32 %v1266, %v1267
    %1269 = vadd.xlane.f32.xlu0 %v1268
    %v1270 = vpop.xlane.xlu0 %1269
    %v1272 = vrot.slane %v1270, 7
    %v1274 = vmax.f32 %v180, %v1272
    %v1275 = vmax.f32 %v181, %v1272
    %v1276 = vrot.slane %v1270, 1
    %v1278 = vmax.f32 %v180, %v1276
    %v1279 = vmax.f32 %v181, %v1276
    %v1280 = vmin.f32 %v182, %v1276
    %v1281 = vmin.f32 %v183, %v1276
    %v1282 = vrot.slane %v1270, 3
    %v1284 = vmin.f32 %v182, %v1282
    %v1285 = vmin.f32 %v183, %v1282
    %v1286 = vsub.f32 %v1280, %v1274
    %v1287 = vsub.f32 %v1281, %v1275
    %v1288 = vmax.f32 %v1286, 0.0
    %v1289 = vmax.f32 %v1287, 0.0
    %v1290 = vsub.f32 %v1284, %v1278
    %v1291 = vsub.f32 %v1285, %v1279
    %v1292 = vmax.f32 %v1290, 0.0
    %v1293 = vmax.f32 %v1291, 0.0
    %v1296 = vrot.slane %v1292, 7
    %v1297 = vrot.slane %v1293, 7
    %v1300 = vmul.f32 %v1288, %v1296
    %v1301 = vmul.f32 %v1289, %v1297
    %v1302 = vrot.slane %v1270, 5
    %v1304 = vadd.f32 %v192, %v1302
    %v1305 = vadd.f32 %v193, %v1302
    %v1306 = vsub.f32 %v1304, %v1300
    %v1307 = vsub.f32 %v1305, %v1301
    %v1308 = vmax.f32 %v1306, 1e-09
    %v1309 = vmax.f32 %v1307, 1e-09
    %v1310 = vrcp.pop %v1308
    %v1311 = vmul.f32 %v1300, %v1310
    %v1312 = vrcp.pop %v1309
    %v1313 = vmul.f32 %v1301, %v1312
    %vm1314 = vcmp.gt.f32.partialorder %v1311, 0.45
    %vm1315 = vcmp.gt.f32.partialorder %v1313, 0.45
    %vm1316 = vmor %vm1314, %vm1260
    %vm1317 = vmor %vm1315, %vm1261
    %s1318 = scalar_select %p1221, 1, 0
    %v1319 = vstv %s1318
    %vm1320 = vcmp.eq.s32.totalorder %v1319, 1
    %vm1321 = vmand %vm1320, %vm1316
    %vm1322 = vmand %vm1320, %vm1317
    %v1323 = vsel %vm1321, -1.0, %v1204
    %v1324 = vsel %vm1322, -1.0, %v1205
    %vm1325 = vcmp.eq.s32.totalorder %v245, 8
    %vm1326 = vmand %vm1325, %vm1320
    %v1327 = vsel %vm1326, %v1270, %v1208
    %v1328 = vsel %vm375, %v1323, -inf
    %v1329 = vsel %vm375, %v1324, -inf
    %v1330 = vmax.f32 %v1328, %v1329
    %1331 = vmax.xlane.f32.xlu0 %v1330
    %v1332 = vpop.xlane.xlu0 %1331
    %v1333 = vrot.slane %v1332, 4
    %v1334 = vmax.f32 %v1332, %v1333
    %v1335 = vrot.slane %v1334, 2
    %v1336 = vmax.f32 %v1334, %v1335
    %v1337 = vrot.slane %v1336, 1
    %v1338 = vmax.f32 %v1336, %v1337
    %s1339 = vtos %v1338
    %p1340 = scmp.gt.f32.partialorder %s1339, 0.0
    %v1341 = vstv %s1339
    %vm1342 = vcmp.eq.f32.partialorder %v1323, %v1341
    %vm1343 = vcmp.eq.f32.partialorder %v1324, %v1341
    %vm1344 = vcmp.gt.f32.partialorder %v1323, 0.0
    %vm1345 = vcmp.gt.f32.partialorder %v1324, 0.0
    %vm1346 = vmand %vm1342, %vm1344
    %vm1347 = vmand %vm1343, %vm1345
    %v1348 = vsel %vm1346, %v245, 256
    %v1349 = vsel %vm1347, %v246, 256
    %v1350 = vsel %vm375, %v1348, 2147483647
    %v1351 = vsel %vm375, %v1349, 2147483647
    %vm1352 = vcmp.lt.s32.totalorder %v1350, %v1351
    %v1353 = vsel %vm1352, %v1350, %v1351
    %v1354 = vand.u32 %v1353, 65535
    %v1355 = vshra.s32 %v1353, 16
    %v1356 = vcvt.s32.f32 %v1354
    %v1357 = vcvt.s32.f32 %v1355
    %1358 = vmin.xlane.f32.xlu0 %v1357
    %v1359 = vpop.xlane.xlu0 %1358
    %vm1360 = vcmp.eq.f32.partialorder %v1357, %v1359
    %v1361 = vsel %vm1360, %v1356, inf
    %1362 = vmin.xlane.f32.xlu0 %v1361
    %v1363 = vpop.xlane.xlu0 %1362
    %v1364 = vcvt.f32.s32 %v1363
    %v1365 = vcvt.f32.s32 %v1359
    %v1366 = vshll.u32 %v1365, 16
    %v1367 = vadd.s32 %v1366, %v1364
    %v1368 = vrot.slane %v1367, 4
    %vm1369 = vcmp.lt.s32.totalorder %v1367, %v1368
    %v1370 = vsel %vm1369, %v1367, %v1368
    %v1371 = vrot.slane %v1370, 2
    %vm1372 = vcmp.lt.s32.totalorder %v1370, %v1371
    %v1373 = vsel %vm1372, %v1370, %v1371
    %v1374 = vrot.slane %v1373, 1
    %vm1375 = vcmp.lt.s32.totalorder %v1373, %v1374
    %v1376 = vsel %vm1375, %v1373, %v1374
    %s1377 = vtos %v1376
    %v1378 = vstv %s1377
    %vm1379 = vcmp.eq.s32.totalorder %v245, %v1378
    %vm1380 = vcmp.eq.s32.totalorder %v246, %v1378
    %v1381 = vsel %vm1379, 1, 0
    %v1382 = vsel %vm1380, 1, 0
    %vm1383 = vcmp.eq.s32.totalorder %v1381, 1
    %vm1384 = vcmp.eq.s32.totalorder %v1382, 1
    %v1385 = vsel %vm1383, %v242, 0.0
    %v1386 = vsel %vm1384, %v243, 0.0
    %v1387 = vadd.f32 %v1385, %v1386
    %1388 = vadd.xlane.f32.xlu0 %v1387
    %v1389 = vpop.xlane.xlu0 %1388
    %v1391 = vrot.slane %v1389, 7
    %v1393 = vmax.f32 %v180, %v1391
    %v1394 = vmax.f32 %v181, %v1391
    %v1395 = vrot.slane %v1389, 1
    %v1397 = vmax.f32 %v180, %v1395
    %v1398 = vmax.f32 %v181, %v1395
    %v1399 = vmin.f32 %v182, %v1395
    %v1400 = vmin.f32 %v183, %v1395
    %v1401 = vrot.slane %v1389, 3
    %v1403 = vmin.f32 %v182, %v1401
    %v1404 = vmin.f32 %v183, %v1401
    %v1405 = vsub.f32 %v1399, %v1393
    %v1406 = vsub.f32 %v1400, %v1394
    %v1407 = vmax.f32 %v1405, 0.0
    %v1408 = vmax.f32 %v1406, 0.0
    %v1409 = vsub.f32 %v1403, %v1397
    %v1410 = vsub.f32 %v1404, %v1398
    %v1411 = vmax.f32 %v1409, 0.0
    %v1412 = vmax.f32 %v1410, 0.0
    %v1415 = vrot.slane %v1411, 7
    %v1416 = vrot.slane %v1412, 7
    %v1419 = vmul.f32 %v1407, %v1415
    %v1420 = vmul.f32 %v1408, %v1416
    %v1421 = vrot.slane %v1389, 5
    %v1423 = vadd.f32 %v192, %v1421
    %v1424 = vadd.f32 %v193, %v1421
    %v1425 = vsub.f32 %v1423, %v1419
    %v1426 = vsub.f32 %v1424, %v1420
    %v1427 = vmax.f32 %v1425, 1e-09
    %v1428 = vmax.f32 %v1426, 1e-09
    %v1429 = vrcp.pop %v1427
    %v1430 = vmul.f32 %v1419, %v1429
    %v1431 = vrcp.pop %v1428
    %v1432 = vmul.f32 %v1420, %v1431
    %vm1433 = vcmp.gt.f32.partialorder %v1430, 0.45
    %vm1434 = vcmp.gt.f32.partialorder %v1432, 0.45
    %vm1435 = vmor %vm1433, %vm1379
    %vm1436 = vmor %vm1434, %vm1380
    %s1437 = scalar_select %p1340, 1, 0
    %v1438 = vstv %s1437
    %vm1439 = vcmp.eq.s32.totalorder %v1438, 1
    %vm1440 = vmand %vm1439, %vm1435
    %vm1441 = vmand %vm1439, %vm1436
    %v1442 = vsel %vm1440, -1.0, %v1323
    %v1443 = vsel %vm1441, -1.0, %v1324
    %vm1444 = vcmp.eq.s32.totalorder %v245, 9
    %vm1445 = vmand %vm1444, %vm1439
    %v1446 = vsel %vm1445, %v1389, %v1327
    %v1447 = vsel %vm375, %v1442, -inf
    %v1448 = vsel %vm375, %v1443, -inf
    %v1449 = vmax.f32 %v1447, %v1448
    %1450 = vmax.xlane.f32.xlu0 %v1449
    %v1451 = vpop.xlane.xlu0 %1450
    %v1452 = vrot.slane %v1451, 4
    %v1453 = vmax.f32 %v1451, %v1452
    %v1454 = vrot.slane %v1453, 2
    %v1455 = vmax.f32 %v1453, %v1454
    %v1456 = vrot.slane %v1455, 1
    %v1457 = vmax.f32 %v1455, %v1456
    %s1458 = vtos %v1457
    %p1459 = scmp.gt.f32.partialorder %s1458, 0.0
    %v1460 = vstv %s1458
    %vm1461 = vcmp.eq.f32.partialorder %v1442, %v1460
    %vm1462 = vcmp.eq.f32.partialorder %v1443, %v1460
    %vm1463 = vcmp.gt.f32.partialorder %v1442, 0.0
    %vm1464 = vcmp.gt.f32.partialorder %v1443, 0.0
    %vm1465 = vmand %vm1461, %vm1463
    %vm1466 = vmand %vm1462, %vm1464
    %v1467 = vsel %vm1465, %v245, 256
    %v1468 = vsel %vm1466, %v246, 256
    %v1469 = vsel %vm375, %v1467, 2147483647
    %v1470 = vsel %vm375, %v1468, 2147483647
    %vm1471 = vcmp.lt.s32.totalorder %v1469, %v1470
    %v1472 = vsel %vm1471, %v1469, %v1470
    %v1473 = vand.u32 %v1472, 65535
    %v1474 = vshra.s32 %v1472, 16
    %v1475 = vcvt.s32.f32 %v1473
    %v1476 = vcvt.s32.f32 %v1474
    %1477 = vmin.xlane.f32.xlu0 %v1476
    %v1478 = vpop.xlane.xlu0 %1477
    %vm1479 = vcmp.eq.f32.partialorder %v1476, %v1478
    %v1480 = vsel %vm1479, %v1475, inf
    %1481 = vmin.xlane.f32.xlu0 %v1480
    %v1482 = vpop.xlane.xlu0 %1481
    %v1483 = vcvt.f32.s32 %v1482
    %v1484 = vcvt.f32.s32 %v1478
    %v1485 = vshll.u32 %v1484, 16
    %v1486 = vadd.s32 %v1485, %v1483
    %v1487 = vrot.slane %v1486, 4
    %vm1488 = vcmp.lt.s32.totalorder %v1486, %v1487
    %v1489 = vsel %vm1488, %v1486, %v1487
    %v1490 = vrot.slane %v1489, 2
    %vm1491 = vcmp.lt.s32.totalorder %v1489, %v1490
    %v1492 = vsel %vm1491, %v1489, %v1490
    %v1493 = vrot.slane %v1492, 1
    %vm1494 = vcmp.lt.s32.totalorder %v1492, %v1493
    %v1495 = vsel %vm1494, %v1492, %v1493
    %s1496 = vtos %v1495
    %v1497 = vstv %s1496
    %vm1498 = vcmp.eq.s32.totalorder %v245, %v1497
    %vm1499 = vcmp.eq.s32.totalorder %v246, %v1497
    %v1500 = vsel %vm1498, 1, 0
    %v1501 = vsel %vm1499, 1, 0
    %vm1502 = vcmp.eq.s32.totalorder %v1500, 1
    %vm1503 = vcmp.eq.s32.totalorder %v1501, 1
    %v1504 = vsel %vm1502, %v242, 0.0
    %v1505 = vsel %vm1503, %v243, 0.0
    %v1506 = vadd.f32 %v1504, %v1505
    %1507 = vadd.xlane.f32.xlu0 %v1506
    %v1508 = vpop.xlane.xlu0 %1507
    %v1510 = vrot.slane %v1508, 7
    %v1512 = vmax.f32 %v180, %v1510
    %v1513 = vmax.f32 %v181, %v1510
    %v1514 = vrot.slane %v1508, 1
    %v1516 = vmax.f32 %v180, %v1514
    %v1517 = vmax.f32 %v181, %v1514
    %v1518 = vmin.f32 %v182, %v1514
    %v1519 = vmin.f32 %v183, %v1514
    %v1520 = vrot.slane %v1508, 3
    %v1522 = vmin.f32 %v182, %v1520
    %v1523 = vmin.f32 %v183, %v1520
    %v1524 = vsub.f32 %v1518, %v1512
    %v1525 = vsub.f32 %v1519, %v1513
    %v1526 = vmax.f32 %v1524, 0.0
    %v1527 = vmax.f32 %v1525, 0.0
    %v1528 = vsub.f32 %v1522, %v1516
    %v1529 = vsub.f32 %v1523, %v1517
    %v1530 = vmax.f32 %v1528, 0.0
    %v1531 = vmax.f32 %v1529, 0.0
    %v1534 = vrot.slane %v1530, 7
    %v1535 = vrot.slane %v1531, 7
    %v1538 = vmul.f32 %v1526, %v1534
    %v1539 = vmul.f32 %v1527, %v1535
    %v1540 = vrot.slane %v1508, 5
    %v1542 = vadd.f32 %v192, %v1540
    %v1543 = vadd.f32 %v193, %v1540
    %v1544 = vsub.f32 %v1542, %v1538
    %v1545 = vsub.f32 %v1543, %v1539
    %v1546 = vmax.f32 %v1544, 1e-09
    %v1547 = vmax.f32 %v1545, 1e-09
    %v1548 = vrcp.pop %v1546
    %v1549 = vmul.f32 %v1538, %v1548
    %v1550 = vrcp.pop %v1547
    %v1551 = vmul.f32 %v1539, %v1550
    %vm1552 = vcmp.gt.f32.partialorder %v1549, 0.45
    %vm1553 = vcmp.gt.f32.partialorder %v1551, 0.45
    %vm1554 = vmor %vm1552, %vm1498
    %vm1555 = vmor %vm1553, %vm1499
    %s1556 = scalar_select %p1459, 1, 0
    %v1557 = vstv %s1556
    %vm1558 = vcmp.eq.s32.totalorder %v1557, 1
    %vm1559 = vmand %vm1558, %vm1554
    %vm1560 = vmand %vm1558, %vm1555
    %v1561 = vsel %vm1559, -1.0, %v1442
    %v1562 = vsel %vm1560, -1.0, %v1443
    %vm1563 = vcmp.eq.s32.totalorder %v245, 10
    %vm1564 = vmand %vm1563, %vm1558
    %v1565 = vsel %vm1564, %v1508, %v1446
    %v1566 = vsel %vm375, %v1561, -inf
    %v1567 = vsel %vm375, %v1562, -inf
    %v1568 = vmax.f32 %v1566, %v1567
    %1569 = vmax.xlane.f32.xlu0 %v1568
    %v1570 = vpop.xlane.xlu0 %1569
    %v1571 = vrot.slane %v1570, 4
    %v1572 = vmax.f32 %v1570, %v1571
    %v1573 = vrot.slane %v1572, 2
    %v1574 = vmax.f32 %v1572, %v1573
    %v1575 = vrot.slane %v1574, 1
    %v1576 = vmax.f32 %v1574, %v1575
    %s1577 = vtos %v1576
    %p1578 = scmp.gt.f32.partialorder %s1577, 0.0
    %v1579 = vstv %s1577
    %vm1580 = vcmp.eq.f32.partialorder %v1561, %v1579
    %vm1581 = vcmp.eq.f32.partialorder %v1562, %v1579
    %vm1582 = vcmp.gt.f32.partialorder %v1561, 0.0
    %vm1583 = vcmp.gt.f32.partialorder %v1562, 0.0
    %vm1584 = vmand %vm1580, %vm1582
    %vm1585 = vmand %vm1581, %vm1583
    %v1586 = vsel %vm1584, %v245, 256
    %v1587 = vsel %vm1585, %v246, 256
    %v1588 = vsel %vm375, %v1586, 2147483647
    %v1589 = vsel %vm375, %v1587, 2147483647
    %vm1590 = vcmp.lt.s32.totalorder %v1588, %v1589
    %v1591 = vsel %vm1590, %v1588, %v1589
    %v1592 = vand.u32 %v1591, 65535
    %v1593 = vshra.s32 %v1591, 16
    %v1594 = vcvt.s32.f32 %v1592
    %v1595 = vcvt.s32.f32 %v1593
    %1596 = vmin.xlane.f32.xlu0 %v1595
    %v1597 = vpop.xlane.xlu0 %1596
    %vm1598 = vcmp.eq.f32.partialorder %v1595, %v1597
    %v1599 = vsel %vm1598, %v1594, inf
    %1600 = vmin.xlane.f32.xlu0 %v1599
    %v1601 = vpop.xlane.xlu0 %1600
    %v1602 = vcvt.f32.s32 %v1601
    %v1603 = vcvt.f32.s32 %v1597
    %v1604 = vshll.u32 %v1603, 16
    %v1605 = vadd.s32 %v1604, %v1602
    %v1606 = vrot.slane %v1605, 4
    %vm1607 = vcmp.lt.s32.totalorder %v1605, %v1606
    %v1608 = vsel %vm1607, %v1605, %v1606
    %v1609 = vrot.slane %v1608, 2
    %vm1610 = vcmp.lt.s32.totalorder %v1608, %v1609
    %v1611 = vsel %vm1610, %v1608, %v1609
    %v1612 = vrot.slane %v1611, 1
    %vm1613 = vcmp.lt.s32.totalorder %v1611, %v1612
    %v1614 = vsel %vm1613, %v1611, %v1612
    %s1615 = vtos %v1614
    %v1616 = vstv %s1615
    %vm1617 = vcmp.eq.s32.totalorder %v245, %v1616
    %vm1618 = vcmp.eq.s32.totalorder %v246, %v1616
    %v1619 = vsel %vm1617, 1, 0
    %v1620 = vsel %vm1618, 1, 0
    %vm1621 = vcmp.eq.s32.totalorder %v1619, 1
    %vm1622 = vcmp.eq.s32.totalorder %v1620, 1
    %v1623 = vsel %vm1621, %v242, 0.0
    %v1624 = vsel %vm1622, %v243, 0.0
    %v1625 = vadd.f32 %v1623, %v1624
    %1626 = vadd.xlane.f32.xlu0 %v1625
    %v1627 = vpop.xlane.xlu0 %1626
    %v1629 = vrot.slane %v1627, 7
    %v1631 = vmax.f32 %v180, %v1629
    %v1632 = vmax.f32 %v181, %v1629
    %v1633 = vrot.slane %v1627, 1
    %v1635 = vmax.f32 %v180, %v1633
    %v1636 = vmax.f32 %v181, %v1633
    %v1637 = vmin.f32 %v182, %v1633
    %v1638 = vmin.f32 %v183, %v1633
    %v1639 = vrot.slane %v1627, 3
    %v1641 = vmin.f32 %v182, %v1639
    %v1642 = vmin.f32 %v183, %v1639
    %v1643 = vsub.f32 %v1637, %v1631
    %v1644 = vsub.f32 %v1638, %v1632
    %v1645 = vmax.f32 %v1643, 0.0
    %v1646 = vmax.f32 %v1644, 0.0
    %v1647 = vsub.f32 %v1641, %v1635
    %v1648 = vsub.f32 %v1642, %v1636
    %v1649 = vmax.f32 %v1647, 0.0
    %v1650 = vmax.f32 %v1648, 0.0
    %v1653 = vrot.slane %v1649, 7
    %v1654 = vrot.slane %v1650, 7
    %v1657 = vmul.f32 %v1645, %v1653
    %v1658 = vmul.f32 %v1646, %v1654
    %v1659 = vrot.slane %v1627, 5
    %v1661 = vadd.f32 %v192, %v1659
    %v1662 = vadd.f32 %v193, %v1659
    %v1663 = vsub.f32 %v1661, %v1657
    %v1664 = vsub.f32 %v1662, %v1658
    %v1665 = vmax.f32 %v1663, 1e-09
    %v1666 = vmax.f32 %v1664, 1e-09
    %v1667 = vrcp.pop %v1665
    %v1668 = vmul.f32 %v1657, %v1667
    %v1669 = vrcp.pop %v1666
    %v1670 = vmul.f32 %v1658, %v1669
    %vm1671 = vcmp.gt.f32.partialorder %v1668, 0.45
    %vm1672 = vcmp.gt.f32.partialorder %v1670, 0.45
    %vm1673 = vmor %vm1671, %vm1617
    %vm1674 = vmor %vm1672, %vm1618
    %s1675 = scalar_select %p1578, 1, 0
    %v1676 = vstv %s1675
    %vm1677 = vcmp.eq.s32.totalorder %v1676, 1
    %vm1678 = vmand %vm1677, %vm1673
    %vm1679 = vmand %vm1677, %vm1674
    %v1680 = vsel %vm1678, -1.0, %v1561
    %v1681 = vsel %vm1679, -1.0, %v1562
    %vm1682 = vcmp.eq.s32.totalorder %v245, 11
    %vm1683 = vmand %vm1682, %vm1677
    %v1684 = vsel %vm1683, %v1627, %v1565
    %v1685 = vsel %vm375, %v1680, -inf
    %v1686 = vsel %vm375, %v1681, -inf
    %v1687 = vmax.f32 %v1685, %v1686
    %1688 = vmax.xlane.f32.xlu0 %v1687
    %v1689 = vpop.xlane.xlu0 %1688
    %v1690 = vrot.slane %v1689, 4
    %v1691 = vmax.f32 %v1689, %v1690
    %v1692 = vrot.slane %v1691, 2
    %v1693 = vmax.f32 %v1691, %v1692
    %v1694 = vrot.slane %v1693, 1
    %v1695 = vmax.f32 %v1693, %v1694
    %s1696 = vtos %v1695
    %p1697 = scmp.gt.f32.partialorder %s1696, 0.0
    %v1698 = vstv %s1696
    %vm1699 = vcmp.eq.f32.partialorder %v1680, %v1698
    %vm1700 = vcmp.eq.f32.partialorder %v1681, %v1698
    %vm1701 = vcmp.gt.f32.partialorder %v1680, 0.0
    %vm1702 = vcmp.gt.f32.partialorder %v1681, 0.0
    %vm1703 = vmand %vm1699, %vm1701
    %vm1704 = vmand %vm1700, %vm1702
    %v1705 = vsel %vm1703, %v245, 256
    %v1706 = vsel %vm1704, %v246, 256
    %v1707 = vsel %vm375, %v1705, 2147483647
    %v1708 = vsel %vm375, %v1706, 2147483647
    %vm1709 = vcmp.lt.s32.totalorder %v1707, %v1708
    %v1710 = vsel %vm1709, %v1707, %v1708
    %v1711 = vand.u32 %v1710, 65535
    %v1712 = vshra.s32 %v1710, 16
    %v1713 = vcvt.s32.f32 %v1711
    %v1714 = vcvt.s32.f32 %v1712
    %1715 = vmin.xlane.f32.xlu0 %v1714
    %v1716 = vpop.xlane.xlu0 %1715
    %vm1717 = vcmp.eq.f32.partialorder %v1714, %v1716
    %v1718 = vsel %vm1717, %v1713, inf
    %1719 = vmin.xlane.f32.xlu0 %v1718
    %v1720 = vpop.xlane.xlu0 %1719
    %v1721 = vcvt.f32.s32 %v1720
    %v1722 = vcvt.f32.s32 %v1716
    %v1723 = vshll.u32 %v1722, 16
    %v1724 = vadd.s32 %v1723, %v1721
    %v1725 = vrot.slane %v1724, 4
    %vm1726 = vcmp.lt.s32.totalorder %v1724, %v1725
    %v1727 = vsel %vm1726, %v1724, %v1725
    %v1728 = vrot.slane %v1727, 2
    %vm1729 = vcmp.lt.s32.totalorder %v1727, %v1728
    %v1730 = vsel %vm1729, %v1727, %v1728
    %v1731 = vrot.slane %v1730, 1
    %vm1732 = vcmp.lt.s32.totalorder %v1730, %v1731
    %v1733 = vsel %vm1732, %v1730, %v1731
    %s1734 = vtos %v1733
    %v1735 = vstv %s1734
    %vm1736 = vcmp.eq.s32.totalorder %v245, %v1735
    %vm1737 = vcmp.eq.s32.totalorder %v246, %v1735
    %v1738 = vsel %vm1736, 1, 0
    %v1739 = vsel %vm1737, 1, 0
    %vm1740 = vcmp.eq.s32.totalorder %v1738, 1
    %vm1741 = vcmp.eq.s32.totalorder %v1739, 1
    %v1742 = vsel %vm1740, %v242, 0.0
    %v1743 = vsel %vm1741, %v243, 0.0
    %v1744 = vadd.f32 %v1742, %v1743
    %1745 = vadd.xlane.f32.xlu0 %v1744
    %v1746 = vpop.xlane.xlu0 %1745
    %v1748 = vrot.slane %v1746, 7
    %v1750 = vmax.f32 %v180, %v1748
    %v1751 = vmax.f32 %v181, %v1748
    %v1752 = vrot.slane %v1746, 1
    %v1754 = vmax.f32 %v180, %v1752
    %v1755 = vmax.f32 %v181, %v1752
    %v1756 = vmin.f32 %v182, %v1752
    %v1757 = vmin.f32 %v183, %v1752
    %v1758 = vrot.slane %v1746, 3
    %v1760 = vmin.f32 %v182, %v1758
    %v1761 = vmin.f32 %v183, %v1758
    %v1762 = vsub.f32 %v1756, %v1750
    %v1763 = vsub.f32 %v1757, %v1751
    %v1764 = vmax.f32 %v1762, 0.0
    %v1765 = vmax.f32 %v1763, 0.0
    %v1766 = vsub.f32 %v1760, %v1754
    %v1767 = vsub.f32 %v1761, %v1755
    %v1768 = vmax.f32 %v1766, 0.0
    %v1769 = vmax.f32 %v1767, 0.0
    %v1772 = vrot.slane %v1768, 7
    %v1773 = vrot.slane %v1769, 7
    %v1776 = vmul.f32 %v1764, %v1772
    %v1777 = vmul.f32 %v1765, %v1773
    %v1778 = vrot.slane %v1746, 5
    %v1780 = vadd.f32 %v192, %v1778
    %v1781 = vadd.f32 %v193, %v1778
    %v1782 = vsub.f32 %v1780, %v1776
    %v1783 = vsub.f32 %v1781, %v1777
    %v1784 = vmax.f32 %v1782, 1e-09
    %v1785 = vmax.f32 %v1783, 1e-09
    %v1786 = vrcp.pop %v1784
    %v1787 = vmul.f32 %v1776, %v1786
    %v1788 = vrcp.pop %v1785
    %v1789 = vmul.f32 %v1777, %v1788
    %vm1790 = vcmp.gt.f32.partialorder %v1787, 0.45
    %vm1791 = vcmp.gt.f32.partialorder %v1789, 0.45
    %vm1792 = vmor %vm1790, %vm1736
    %vm1793 = vmor %vm1791, %vm1737
    %s1794 = scalar_select %p1697, 1, 0
    %v1795 = vstv %s1794
    %vm1796 = vcmp.eq.s32.totalorder %v1795, 1
    %vm1797 = vmand %vm1796, %vm1792
    %vm1798 = vmand %vm1796, %vm1793
    %v1799 = vsel %vm1797, -1.0, %v1680
    %v1800 = vsel %vm1798, -1.0, %v1681
    %vm1801 = vcmp.eq.s32.totalorder %v245, 12
    %vm1802 = vmand %vm1801, %vm1796
    %v1803 = vsel %vm1802, %v1746, %v1684
    %v1804 = vsel %vm375, %v1799, -inf
    %v1805 = vsel %vm375, %v1800, -inf
    %v1806 = vmax.f32 %v1804, %v1805
    %1807 = vmax.xlane.f32.xlu0 %v1806
    %v1808 = vpop.xlane.xlu0 %1807
    %v1809 = vrot.slane %v1808, 4
    %v1810 = vmax.f32 %v1808, %v1809
    %v1811 = vrot.slane %v1810, 2
    %v1812 = vmax.f32 %v1810, %v1811
    %v1813 = vrot.slane %v1812, 1
    %v1814 = vmax.f32 %v1812, %v1813
    %s1815 = vtos %v1814
    %p1816 = scmp.gt.f32.partialorder %s1815, 0.0
    %v1817 = vstv %s1815
    %vm1818 = vcmp.eq.f32.partialorder %v1799, %v1817
    %vm1819 = vcmp.eq.f32.partialorder %v1800, %v1817
    %vm1820 = vcmp.gt.f32.partialorder %v1799, 0.0
    %vm1821 = vcmp.gt.f32.partialorder %v1800, 0.0
    %vm1822 = vmand %vm1818, %vm1820
    %vm1823 = vmand %vm1819, %vm1821
    %v1824 = vsel %vm1822, %v245, 256
    %v1825 = vsel %vm1823, %v246, 256
    %v1826 = vsel %vm375, %v1824, 2147483647
    %v1827 = vsel %vm375, %v1825, 2147483647
    %vm1828 = vcmp.lt.s32.totalorder %v1826, %v1827
    %v1829 = vsel %vm1828, %v1826, %v1827
    %v1830 = vand.u32 %v1829, 65535
    %v1831 = vshra.s32 %v1829, 16
    %v1832 = vcvt.s32.f32 %v1830
    %v1833 = vcvt.s32.f32 %v1831
    %1834 = vmin.xlane.f32.xlu0 %v1833
    %v1835 = vpop.xlane.xlu0 %1834
    %vm1836 = vcmp.eq.f32.partialorder %v1833, %v1835
    %v1837 = vsel %vm1836, %v1832, inf
    %1838 = vmin.xlane.f32.xlu0 %v1837
    %v1839 = vpop.xlane.xlu0 %1838
    %v1840 = vcvt.f32.s32 %v1839
    %v1841 = vcvt.f32.s32 %v1835
    %v1842 = vshll.u32 %v1841, 16
    %v1843 = vadd.s32 %v1842, %v1840
    %v1844 = vrot.slane %v1843, 4
    %vm1845 = vcmp.lt.s32.totalorder %v1843, %v1844
    %v1846 = vsel %vm1845, %v1843, %v1844
    %v1847 = vrot.slane %v1846, 2
    %vm1848 = vcmp.lt.s32.totalorder %v1846, %v1847
    %v1849 = vsel %vm1848, %v1846, %v1847
    %v1850 = vrot.slane %v1849, 1
    %vm1851 = vcmp.lt.s32.totalorder %v1849, %v1850
    %v1852 = vsel %vm1851, %v1849, %v1850
    %s1853 = vtos %v1852
    %v1854 = vstv %s1853
    %vm1855 = vcmp.eq.s32.totalorder %v245, %v1854
    %vm1856 = vcmp.eq.s32.totalorder %v246, %v1854
    %v1857 = vsel %vm1855, 1, 0
    %v1858 = vsel %vm1856, 1, 0
    %vm1859 = vcmp.eq.s32.totalorder %v1857, 1
    %vm1860 = vcmp.eq.s32.totalorder %v1858, 1
    %v1861 = vsel %vm1859, %v242, 0.0
    %v1862 = vsel %vm1860, %v243, 0.0
    %v1863 = vadd.f32 %v1861, %v1862
    %1864 = vadd.xlane.f32.xlu0 %v1863
    %v1865 = vpop.xlane.xlu0 %1864
    %v1867 = vrot.slane %v1865, 7
    %v1869 = vmax.f32 %v180, %v1867
    %v1870 = vmax.f32 %v181, %v1867
    %v1871 = vrot.slane %v1865, 1
    %v1873 = vmax.f32 %v180, %v1871
    %v1874 = vmax.f32 %v181, %v1871
    %v1875 = vmin.f32 %v182, %v1871
    %v1876 = vmin.f32 %v183, %v1871
    %v1877 = vrot.slane %v1865, 3
    %v1879 = vmin.f32 %v182, %v1877
    %v1880 = vmin.f32 %v183, %v1877
    %v1881 = vsub.f32 %v1875, %v1869
    %v1882 = vsub.f32 %v1876, %v1870
    %v1883 = vmax.f32 %v1881, 0.0
    %v1884 = vmax.f32 %v1882, 0.0
    %v1885 = vsub.f32 %v1879, %v1873
    %v1886 = vsub.f32 %v1880, %v1874
    %v1887 = vmax.f32 %v1885, 0.0
    %v1888 = vmax.f32 %v1886, 0.0
    %v1891 = vrot.slane %v1887, 7
    %v1892 = vrot.slane %v1888, 7
    %v1895 = vmul.f32 %v1883, %v1891
    %v1896 = vmul.f32 %v1884, %v1892
    %v1897 = vrot.slane %v1865, 5
    %v1899 = vadd.f32 %v192, %v1897
    %v1900 = vadd.f32 %v193, %v1897
    %v1901 = vsub.f32 %v1899, %v1895
    %v1902 = vsub.f32 %v1900, %v1896
    %v1903 = vmax.f32 %v1901, 1e-09
    %v1904 = vmax.f32 %v1902, 1e-09
    %v1905 = vrcp.pop %v1903
    %v1906 = vmul.f32 %v1895, %v1905
    %v1907 = vrcp.pop %v1904
    %v1908 = vmul.f32 %v1896, %v1907
    %vm1909 = vcmp.gt.f32.partialorder %v1906, 0.45
    %vm1910 = vcmp.gt.f32.partialorder %v1908, 0.45
    %vm1911 = vmor %vm1909, %vm1855
    %vm1912 = vmor %vm1910, %vm1856
    %s1913 = scalar_select %p1816, 1, 0
    %v1914 = vstv %s1913
    %vm1915 = vcmp.eq.s32.totalorder %v1914, 1
    %vm1916 = vmand %vm1915, %vm1911
    %vm1917 = vmand %vm1915, %vm1912
    %v1918 = vsel %vm1916, -1.0, %v1799
    %v1919 = vsel %vm1917, -1.0, %v1800
    %vm1920 = vcmp.eq.s32.totalorder %v245, 13
    %vm1921 = vmand %vm1920, %vm1915
    %v1922 = vsel %vm1921, %v1865, %v1803
    %v1923 = vsel %vm375, %v1918, -inf
    %v1924 = vsel %vm375, %v1919, -inf
    %v1925 = vmax.f32 %v1923, %v1924
    %1926 = vmax.xlane.f32.xlu0 %v1925
    %v1927 = vpop.xlane.xlu0 %1926
    %v1928 = vrot.slane %v1927, 4
    %v1929 = vmax.f32 %v1927, %v1928
    %v1930 = vrot.slane %v1929, 2
    %v1931 = vmax.f32 %v1929, %v1930
    %v1932 = vrot.slane %v1931, 1
    %v1933 = vmax.f32 %v1931, %v1932
    %s1934 = vtos %v1933
    %p1935 = scmp.gt.f32.partialorder %s1934, 0.0
    %v1936 = vstv %s1934
    %vm1937 = vcmp.eq.f32.partialorder %v1918, %v1936
    %vm1938 = vcmp.eq.f32.partialorder %v1919, %v1936
    %vm1939 = vcmp.gt.f32.partialorder %v1918, 0.0
    %vm1940 = vcmp.gt.f32.partialorder %v1919, 0.0
    %vm1941 = vmand %vm1937, %vm1939
    %vm1942 = vmand %vm1938, %vm1940
    %v1943 = vsel %vm1941, %v245, 256
    %v1944 = vsel %vm1942, %v246, 256
    %v1945 = vsel %vm375, %v1943, 2147483647
    %v1946 = vsel %vm375, %v1944, 2147483647
    %vm1947 = vcmp.lt.s32.totalorder %v1945, %v1946
    %v1948 = vsel %vm1947, %v1945, %v1946
    %v1949 = vand.u32 %v1948, 65535
    %v1950 = vshra.s32 %v1948, 16
    %v1951 = vcvt.s32.f32 %v1949
    %v1952 = vcvt.s32.f32 %v1950
    %1953 = vmin.xlane.f32.xlu0 %v1952
    %v1954 = vpop.xlane.xlu0 %1953
    %vm1955 = vcmp.eq.f32.partialorder %v1952, %v1954
    %v1956 = vsel %vm1955, %v1951, inf
    %1957 = vmin.xlane.f32.xlu0 %v1956
    %v1958 = vpop.xlane.xlu0 %1957
    %v1959 = vcvt.f32.s32 %v1958
    %v1960 = vcvt.f32.s32 %v1954
    %v1961 = vshll.u32 %v1960, 16
    %v1962 = vadd.s32 %v1961, %v1959
    %v1963 = vrot.slane %v1962, 4
    %vm1964 = vcmp.lt.s32.totalorder %v1962, %v1963
    %v1965 = vsel %vm1964, %v1962, %v1963
    %v1966 = vrot.slane %v1965, 2
    %vm1967 = vcmp.lt.s32.totalorder %v1965, %v1966
    %v1968 = vsel %vm1967, %v1965, %v1966
    %v1969 = vrot.slane %v1968, 1
    %vm1970 = vcmp.lt.s32.totalorder %v1968, %v1969
    %v1971 = vsel %vm1970, %v1968, %v1969
    %s1972 = vtos %v1971
    %v1973 = vstv %s1972
    %vm1974 = vcmp.eq.s32.totalorder %v245, %v1973
    %vm1975 = vcmp.eq.s32.totalorder %v246, %v1973
    %v1976 = vsel %vm1974, 1, 0
    %v1977 = vsel %vm1975, 1, 0
    %vm1978 = vcmp.eq.s32.totalorder %v1976, 1
    %vm1979 = vcmp.eq.s32.totalorder %v1977, 1
    %v1980 = vsel %vm1978, %v242, 0.0
    %v1981 = vsel %vm1979, %v243, 0.0
    %v1982 = vadd.f32 %v1980, %v1981
    %1983 = vadd.xlane.f32.xlu0 %v1982
    %v1984 = vpop.xlane.xlu0 %1983
    %v1986 = vrot.slane %v1984, 7
    %v1988 = vmax.f32 %v180, %v1986
    %v1989 = vmax.f32 %v181, %v1986
    %v1990 = vrot.slane %v1984, 1
    %v1992 = vmax.f32 %v180, %v1990
    %v1993 = vmax.f32 %v181, %v1990
    %v1994 = vmin.f32 %v182, %v1990
    %v1995 = vmin.f32 %v183, %v1990
    %v1996 = vrot.slane %v1984, 3
    %v1998 = vmin.f32 %v182, %v1996
    %v1999 = vmin.f32 %v183, %v1996
    %v2000 = vsub.f32 %v1994, %v1988
    %v2001 = vsub.f32 %v1995, %v1989
    %v2002 = vmax.f32 %v2000, 0.0
    %v2003 = vmax.f32 %v2001, 0.0
    %v2004 = vsub.f32 %v1998, %v1992
    %v2005 = vsub.f32 %v1999, %v1993
    %v2006 = vmax.f32 %v2004, 0.0
    %v2007 = vmax.f32 %v2005, 0.0
    %v2010 = vrot.slane %v2006, 7
    %v2011 = vrot.slane %v2007, 7
    %v2014 = vmul.f32 %v2002, %v2010
    %v2015 = vmul.f32 %v2003, %v2011
    %v2016 = vrot.slane %v1984, 5
    %v2018 = vadd.f32 %v192, %v2016
    %v2019 = vadd.f32 %v193, %v2016
    %v2020 = vsub.f32 %v2018, %v2014
    %v2021 = vsub.f32 %v2019, %v2015
    %v2022 = vmax.f32 %v2020, 1e-09
    %v2023 = vmax.f32 %v2021, 1e-09
    %v2024 = vrcp.pop %v2022
    %v2025 = vmul.f32 %v2014, %v2024
    %v2026 = vrcp.pop %v2023
    %v2027 = vmul.f32 %v2015, %v2026
    %vm2028 = vcmp.gt.f32.partialorder %v2025, 0.45
    %vm2029 = vcmp.gt.f32.partialorder %v2027, 0.45
    %vm2030 = vmor %vm2028, %vm1974
    %vm2031 = vmor %vm2029, %vm1975
    %s2032 = scalar_select %p1935, 1, 0
    %v2033 = vstv %s2032
    %vm2034 = vcmp.eq.s32.totalorder %v2033, 1
    %vm2035 = vmand %vm2034, %vm2030
    %vm2036 = vmand %vm2034, %vm2031
    %v2037 = vsel %vm2035, -1.0, %v1918
    %v2038 = vsel %vm2036, -1.0, %v1919
    %vm2039 = vcmp.eq.s32.totalorder %v245, 14
    %vm2040 = vmand %vm2039, %vm2034
    %v2041 = vsel %vm2040, %v1984, %v1922
    %v2042 = vsel %vm375, %v2037, -inf
    %v2043 = vsel %vm375, %v2038, -inf
    %v2044 = vmax.f32 %v2042, %v2043
    %2045 = vmax.xlane.f32.xlu0 %v2044
    %v2046 = vpop.xlane.xlu0 %2045
    %v2047 = vrot.slane %v2046, 4
    %v2048 = vmax.f32 %v2046, %v2047
    %v2049 = vrot.slane %v2048, 2
    %v2050 = vmax.f32 %v2048, %v2049
    %v2051 = vrot.slane %v2050, 1
    %v2052 = vmax.f32 %v2050, %v2051
    %s2053 = vtos %v2052
    %p2054 = scmp.gt.f32.partialorder %s2053, 0.0
    %v2055 = vstv %s2053
    %vm2056 = vcmp.eq.f32.partialorder %v2037, %v2055
    %vm2057 = vcmp.eq.f32.partialorder %v2038, %v2055
    %vm2058 = vcmp.gt.f32.partialorder %v2037, 0.0
    %vm2059 = vcmp.gt.f32.partialorder %v2038, 0.0
    %vm2060 = vmand %vm2056, %vm2058
    %vm2061 = vmand %vm2057, %vm2059
    %v2062 = vsel %vm2060, %v245, 256
    %v2063 = vsel %vm2061, %v246, 256
    %v2064 = vsel %vm375, %v2062, 2147483647
    %v2065 = vsel %vm375, %v2063, 2147483647
    %vm2066 = vcmp.lt.s32.totalorder %v2064, %v2065
    %v2067 = vsel %vm2066, %v2064, %v2065
    %v2068 = vand.u32 %v2067, 65535
    %v2069 = vshra.s32 %v2067, 16
    %v2070 = vcvt.s32.f32 %v2068
    %v2071 = vcvt.s32.f32 %v2069
    %2072 = vmin.xlane.f32.xlu0 %v2071
    %v2073 = vpop.xlane.xlu0 %2072
    %vm2074 = vcmp.eq.f32.partialorder %v2071, %v2073
    %v2075 = vsel %vm2074, %v2070, inf
    %2076 = vmin.xlane.f32.xlu0 %v2075
    %v2077 = vpop.xlane.xlu0 %2076
    %v2078 = vcvt.f32.s32 %v2077
    %v2079 = vcvt.f32.s32 %v2073
    %v2080 = vshll.u32 %v2079, 16
    %v2081 = vadd.s32 %v2080, %v2078
    %v2082 = vrot.slane %v2081, 4
    %vm2083 = vcmp.lt.s32.totalorder %v2081, %v2082
    %v2084 = vsel %vm2083, %v2081, %v2082
    %v2085 = vrot.slane %v2084, 2
    %vm2086 = vcmp.lt.s32.totalorder %v2084, %v2085
    %v2087 = vsel %vm2086, %v2084, %v2085
    %v2088 = vrot.slane %v2087, 1
    %vm2089 = vcmp.lt.s32.totalorder %v2087, %v2088
    %v2090 = vsel %vm2089, %v2087, %v2088
    %s2091 = vtos %v2090
    %v2092 = vstv %s2091
    %vm2093 = vcmp.eq.s32.totalorder %v245, %v2092
    %vm2094 = vcmp.eq.s32.totalorder %v246, %v2092
    %v2095 = vsel %vm2093, 1, 0
    %v2096 = vsel %vm2094, 1, 0
    %vm2097 = vcmp.eq.s32.totalorder %v2095, 1
    %vm2098 = vcmp.eq.s32.totalorder %v2096, 1
    %v2099 = vsel %vm2097, %v242, 0.0
    %v2100 = vsel %vm2098, %v243, 0.0
    %v2101 = vadd.f32 %v2099, %v2100
    %2102 = vadd.xlane.f32.xlu0 %v2101
    %v2103 = vpop.xlane.xlu0 %2102
    %v2105 = vrot.slane %v2103, 7
    %v2107 = vmax.f32 %v180, %v2105
    %v2108 = vmax.f32 %v181, %v2105
    %v2109 = vrot.slane %v2103, 1
    %v2111 = vmax.f32 %v180, %v2109
    %v2112 = vmax.f32 %v181, %v2109
    %v2113 = vmin.f32 %v182, %v2109
    %v2114 = vmin.f32 %v183, %v2109
    %v2115 = vrot.slane %v2103, 3
    %v2117 = vmin.f32 %v182, %v2115
    %v2118 = vmin.f32 %v183, %v2115
    %v2119 = vsub.f32 %v2113, %v2107
    %v2120 = vsub.f32 %v2114, %v2108
    %v2121 = vmax.f32 %v2119, 0.0
    %v2122 = vmax.f32 %v2120, 0.0
    %v2123 = vsub.f32 %v2117, %v2111
    %v2124 = vsub.f32 %v2118, %v2112
    %v2125 = vmax.f32 %v2123, 0.0
    %v2126 = vmax.f32 %v2124, 0.0
    %v2129 = vrot.slane %v2125, 7
    %v2130 = vrot.slane %v2126, 7
    %v2133 = vmul.f32 %v2121, %v2129
    %v2134 = vmul.f32 %v2122, %v2130
    %v2135 = vrot.slane %v2103, 5
    %v2137 = vadd.f32 %v192, %v2135
    %v2138 = vadd.f32 %v193, %v2135
    %v2139 = vsub.f32 %v2137, %v2133
    %v2140 = vsub.f32 %v2138, %v2134
    %v2141 = vmax.f32 %v2139, 1e-09
    %v2142 = vmax.f32 %v2140, 1e-09
    %v2143 = vrcp.pop %v2141
    %v2144 = vmul.f32 %v2133, %v2143
    %v2145 = vrcp.pop %v2142
    %v2146 = vmul.f32 %v2134, %v2145
    %vm2147 = vcmp.gt.f32.partialorder %v2144, 0.45
    %vm2148 = vcmp.gt.f32.partialorder %v2146, 0.45
    %vm2149 = vmor %vm2147, %vm2093
    %vm2150 = vmor %vm2148, %vm2094
    %s2151 = scalar_select %p2054, 1, 0
    %v2152 = vstv %s2151
    %vm2153 = vcmp.eq.s32.totalorder %v2152, 1
    %vm2154 = vmand %vm2153, %vm2149
    %vm2155 = vmand %vm2153, %vm2150
    %v2156 = vsel %vm2154, -1.0, %v2037
    %v2157 = vsel %vm2155, -1.0, %v2038
    %vm2158 = vcmp.eq.s32.totalorder %v245, 15
    %vm2159 = vmand %vm2158, %vm2153
    %v2160 = vsel %vm2159, %v2103, %v2041
    %v2161 = vsel %vm375, %v2156, -inf
    %v2162 = vsel %vm375, %v2157, -inf
    %v2163 = vmax.f32 %v2161, %v2162
    %2164 = vmax.xlane.f32.xlu0 %v2163
    %v2165 = vpop.xlane.xlu0 %2164
    %v2166 = vrot.slane %v2165, 4
    %v2167 = vmax.f32 %v2165, %v2166
    %v2168 = vrot.slane %v2167, 2
    %v2169 = vmax.f32 %v2167, %v2168
    %v2170 = vrot.slane %v2169, 1
    %v2171 = vmax.f32 %v2169, %v2170
    %s2172 = vtos %v2171
    %p2173 = scmp.gt.f32.partialorder %s2172, 0.0
    %v2174 = vstv %s2172
    %vm2175 = vcmp.eq.f32.partialorder %v2156, %v2174
    %vm2176 = vcmp.eq.f32.partialorder %v2157, %v2174
    %vm2177 = vcmp.gt.f32.partialorder %v2156, 0.0
    %vm2178 = vcmp.gt.f32.partialorder %v2157, 0.0
    %vm2179 = vmand %vm2175, %vm2177
    %vm2180 = vmand %vm2176, %vm2178
    %v2181 = vsel %vm2179, %v245, 256
    %v2182 = vsel %vm2180, %v246, 256
    %v2183 = vsel %vm375, %v2181, 2147483647
    %v2184 = vsel %vm375, %v2182, 2147483647
    %vm2185 = vcmp.lt.s32.totalorder %v2183, %v2184
    %v2186 = vsel %vm2185, %v2183, %v2184
    %v2187 = vand.u32 %v2186, 65535
    %v2188 = vshra.s32 %v2186, 16
    %v2189 = vcvt.s32.f32 %v2187
    %v2190 = vcvt.s32.f32 %v2188
    %2191 = vmin.xlane.f32.xlu0 %v2190
    %v2192 = vpop.xlane.xlu0 %2191
    %vm2193 = vcmp.eq.f32.partialorder %v2190, %v2192
    %v2194 = vsel %vm2193, %v2189, inf
    %2195 = vmin.xlane.f32.xlu0 %v2194
    %v2196 = vpop.xlane.xlu0 %2195
    %v2197 = vcvt.f32.s32 %v2196
    %v2198 = vcvt.f32.s32 %v2192
    %v2199 = vshll.u32 %v2198, 16
    %v2200 = vadd.s32 %v2199, %v2197
    %v2201 = vrot.slane %v2200, 4
    %vm2202 = vcmp.lt.s32.totalorder %v2200, %v2201
    %v2203 = vsel %vm2202, %v2200, %v2201
    %v2204 = vrot.slane %v2203, 2
    %vm2205 = vcmp.lt.s32.totalorder %v2203, %v2204
    %v2206 = vsel %vm2205, %v2203, %v2204
    %v2207 = vrot.slane %v2206, 1
    %vm2208 = vcmp.lt.s32.totalorder %v2206, %v2207
    %v2209 = vsel %vm2208, %v2206, %v2207
    %s2210 = vtos %v2209
    %v2211 = vstv %s2210
    %vm2212 = vcmp.eq.s32.totalorder %v245, %v2211
    %vm2213 = vcmp.eq.s32.totalorder %v246, %v2211
    %v2214 = vsel %vm2212, 1, 0
    %v2215 = vsel %vm2213, 1, 0
    %vm2216 = vcmp.eq.s32.totalorder %v2214, 1
    %vm2217 = vcmp.eq.s32.totalorder %v2215, 1
    %v2218 = vsel %vm2216, %v242, 0.0
    %v2219 = vsel %vm2217, %v243, 0.0
    %v2220 = vadd.f32 %v2218, %v2219
    %2221 = vadd.xlane.f32.xlu0 %v2220
    %v2222 = vpop.xlane.xlu0 %2221
    %v2224 = vrot.slane %v2222, 7
    %v2226 = vmax.f32 %v180, %v2224
    %v2227 = vmax.f32 %v181, %v2224
    %v2228 = vrot.slane %v2222, 1
    %v2230 = vmax.f32 %v180, %v2228
    %v2231 = vmax.f32 %v181, %v2228
    %v2232 = vmin.f32 %v182, %v2228
    %v2233 = vmin.f32 %v183, %v2228
    %v2234 = vrot.slane %v2222, 3
    %v2236 = vmin.f32 %v182, %v2234
    %v2237 = vmin.f32 %v183, %v2234
    %v2238 = vsub.f32 %v2232, %v2226
    %v2239 = vsub.f32 %v2233, %v2227
    %v2240 = vmax.f32 %v2238, 0.0
    %v2241 = vmax.f32 %v2239, 0.0
    %v2242 = vsub.f32 %v2236, %v2230
    %v2243 = vsub.f32 %v2237, %v2231
    %v2244 = vmax.f32 %v2242, 0.0
    %v2245 = vmax.f32 %v2243, 0.0
    %v2248 = vrot.slane %v2244, 7
    %v2249 = vrot.slane %v2245, 7
    %v2252 = vmul.f32 %v2240, %v2248
    %v2253 = vmul.f32 %v2241, %v2249
    %v2254 = vrot.slane %v2222, 5
    %v2256 = vadd.f32 %v192, %v2254
    %v2257 = vadd.f32 %v193, %v2254
    %v2258 = vsub.f32 %v2256, %v2252
    %v2259 = vsub.f32 %v2257, %v2253
    %v2260 = vmax.f32 %v2258, 1e-09
    %v2261 = vmax.f32 %v2259, 1e-09
    %v2262 = vrcp.pop %v2260
    %v2263 = vmul.f32 %v2252, %v2262
    %v2264 = vrcp.pop %v2261
    %v2265 = vmul.f32 %v2253, %v2264
    %vm2266 = vcmp.gt.f32.partialorder %v2263, 0.45
    %vm2267 = vcmp.gt.f32.partialorder %v2265, 0.45
    %vm2268 = vmor %vm2266, %vm2212
    %vm2269 = vmor %vm2267, %vm2213
    %s2270 = scalar_select %p2173, 1, 0
    %v2271 = vstv %s2270
    %vm2272 = vcmp.eq.s32.totalorder %v2271, 1
    %vm2273 = vmand %vm2272, %vm2268
    %vm2274 = vmand %vm2272, %vm2269
    %v2275 = vsel %vm2273, -1.0, %v2156
    %v2276 = vsel %vm2274, -1.0, %v2157
    %vm2277 = vcmp.eq.s32.totalorder %v245, 16
    %vm2278 = vmand %vm2277, %vm2272
    %v2279 = vsel %vm2278, %v2222, %v2160
    %v2280 = vsel %vm375, %v2275, -inf
    %v2281 = vsel %vm375, %v2276, -inf
    %v2282 = vmax.f32 %v2280, %v2281
    %2283 = vmax.xlane.f32.xlu0 %v2282
    %v2284 = vpop.xlane.xlu0 %2283
    %v2285 = vrot.slane %v2284, 4
    %v2286 = vmax.f32 %v2284, %v2285
    %v2287 = vrot.slane %v2286, 2
    %v2288 = vmax.f32 %v2286, %v2287
    %v2289 = vrot.slane %v2288, 1
    %v2290 = vmax.f32 %v2288, %v2289
    %s2291 = vtos %v2290
    %p2292 = scmp.gt.f32.partialorder %s2291, 0.0
    %v2293 = vstv %s2291
    %vm2294 = vcmp.eq.f32.partialorder %v2275, %v2293
    %vm2295 = vcmp.eq.f32.partialorder %v2276, %v2293
    %vm2296 = vcmp.gt.f32.partialorder %v2275, 0.0
    %vm2297 = vcmp.gt.f32.partialorder %v2276, 0.0
    %vm2298 = vmand %vm2294, %vm2296
    %vm2299 = vmand %vm2295, %vm2297
    %v2300 = vsel %vm2298, %v245, 256
    %v2301 = vsel %vm2299, %v246, 256
    %v2302 = vsel %vm375, %v2300, 2147483647
    %v2303 = vsel %vm375, %v2301, 2147483647
    %vm2304 = vcmp.lt.s32.totalorder %v2302, %v2303
    %v2305 = vsel %vm2304, %v2302, %v2303
    %v2306 = vand.u32 %v2305, 65535
    %v2307 = vshra.s32 %v2305, 16
    %v2308 = vcvt.s32.f32 %v2306
    %v2309 = vcvt.s32.f32 %v2307
    %2310 = vmin.xlane.f32.xlu0 %v2309
    %v2311 = vpop.xlane.xlu0 %2310
    %vm2312 = vcmp.eq.f32.partialorder %v2309, %v2311
    %v2313 = vsel %vm2312, %v2308, inf
    %2314 = vmin.xlane.f32.xlu0 %v2313
    %v2315 = vpop.xlane.xlu0 %2314
    %v2316 = vcvt.f32.s32 %v2315
    %v2317 = vcvt.f32.s32 %v2311
    %v2318 = vshll.u32 %v2317, 16
    %v2319 = vadd.s32 %v2318, %v2316
    %v2320 = vrot.slane %v2319, 4
    %vm2321 = vcmp.lt.s32.totalorder %v2319, %v2320
    %v2322 = vsel %vm2321, %v2319, %v2320
    %v2323 = vrot.slane %v2322, 2
    %vm2324 = vcmp.lt.s32.totalorder %v2322, %v2323
    %v2325 = vsel %vm2324, %v2322, %v2323
    %v2326 = vrot.slane %v2325, 1
    %vm2327 = vcmp.lt.s32.totalorder %v2325, %v2326
    %v2328 = vsel %vm2327, %v2325, %v2326
    %s2329 = vtos %v2328
    %v2330 = vstv %s2329
    %vm2331 = vcmp.eq.s32.totalorder %v245, %v2330
    %vm2332 = vcmp.eq.s32.totalorder %v246, %v2330
    %v2333 = vsel %vm2331, 1, 0
    %v2334 = vsel %vm2332, 1, 0
    %vm2335 = vcmp.eq.s32.totalorder %v2333, 1
    %vm2336 = vcmp.eq.s32.totalorder %v2334, 1
    %v2337 = vsel %vm2335, %v242, 0.0
    %v2338 = vsel %vm2336, %v243, 0.0
    %v2339 = vadd.f32 %v2337, %v2338
    %2340 = vadd.xlane.f32.xlu0 %v2339
    %v2341 = vpop.xlane.xlu0 %2340
    %v2343 = vrot.slane %v2341, 7
    %v2345 = vmax.f32 %v180, %v2343
    %v2346 = vmax.f32 %v181, %v2343
    %v2347 = vrot.slane %v2341, 1
    %v2349 = vmax.f32 %v180, %v2347
    %v2350 = vmax.f32 %v181, %v2347
    %v2351 = vmin.f32 %v182, %v2347
    %v2352 = vmin.f32 %v183, %v2347
    %v2353 = vrot.slane %v2341, 3
    %v2355 = vmin.f32 %v182, %v2353
    %v2356 = vmin.f32 %v183, %v2353
    %v2357 = vsub.f32 %v2351, %v2345
    %v2358 = vsub.f32 %v2352, %v2346
    %v2359 = vmax.f32 %v2357, 0.0
    %v2360 = vmax.f32 %v2358, 0.0
    %v2361 = vsub.f32 %v2355, %v2349
    %v2362 = vsub.f32 %v2356, %v2350
    %v2363 = vmax.f32 %v2361, 0.0
    %v2364 = vmax.f32 %v2362, 0.0
    %v2367 = vrot.slane %v2363, 7
    %v2368 = vrot.slane %v2364, 7
    %v2371 = vmul.f32 %v2359, %v2367
    %v2372 = vmul.f32 %v2360, %v2368
    %v2373 = vrot.slane %v2341, 5
    %v2375 = vadd.f32 %v192, %v2373
    %v2376 = vadd.f32 %v193, %v2373
    %v2377 = vsub.f32 %v2375, %v2371
    %v2378 = vsub.f32 %v2376, %v2372
    %v2379 = vmax.f32 %v2377, 1e-09
    %v2380 = vmax.f32 %v2378, 1e-09
    %v2381 = vrcp.pop %v2379
    %v2382 = vmul.f32 %v2371, %v2381
    %v2383 = vrcp.pop %v2380
    %v2384 = vmul.f32 %v2372, %v2383
    %vm2385 = vcmp.gt.f32.partialorder %v2382, 0.45
    %vm2386 = vcmp.gt.f32.partialorder %v2384, 0.45
    %vm2387 = vmor %vm2385, %vm2331
    %vm2388 = vmor %vm2386, %vm2332
    %s2389 = scalar_select %p2292, 1, 0
    %v2390 = vstv %s2389
    %vm2391 = vcmp.eq.s32.totalorder %v2390, 1
    %vm2392 = vmand %vm2391, %vm2387
    %vm2393 = vmand %vm2391, %vm2388
    %v2394 = vsel %vm2392, -1.0, %v2275
    %v2395 = vsel %vm2393, -1.0, %v2276
    %vm2396 = vcmp.eq.s32.totalorder %v245, 17
    %vm2397 = vmand %vm2396, %vm2391
    %v2398 = vsel %vm2397, %v2341, %v2279
    %v2399 = vsel %vm375, %v2394, -inf
    %v2400 = vsel %vm375, %v2395, -inf
    %v2401 = vmax.f32 %v2399, %v2400
    %2402 = vmax.xlane.f32.xlu0 %v2401
    %v2403 = vpop.xlane.xlu0 %2402
    %v2404 = vrot.slane %v2403, 4
    %v2405 = vmax.f32 %v2403, %v2404
    %v2406 = vrot.slane %v2405, 2
    %v2407 = vmax.f32 %v2405, %v2406
    %v2408 = vrot.slane %v2407, 1
    %v2409 = vmax.f32 %v2407, %v2408
    %s2410 = vtos %v2409
    %p2411 = scmp.gt.f32.partialorder %s2410, 0.0
    %v2412 = vstv %s2410
    %vm2413 = vcmp.eq.f32.partialorder %v2394, %v2412
    %vm2414 = vcmp.eq.f32.partialorder %v2395, %v2412
    %vm2415 = vcmp.gt.f32.partialorder %v2394, 0.0
    %vm2416 = vcmp.gt.f32.partialorder %v2395, 0.0
    %vm2417 = vmand %vm2413, %vm2415
    %vm2418 = vmand %vm2414, %vm2416
    %v2419 = vsel %vm2417, %v245, 256
    %v2420 = vsel %vm2418, %v246, 256
    %v2421 = vsel %vm375, %v2419, 2147483647
    %v2422 = vsel %vm375, %v2420, 2147483647
    %vm2423 = vcmp.lt.s32.totalorder %v2421, %v2422
    %v2424 = vsel %vm2423, %v2421, %v2422
    %v2425 = vand.u32 %v2424, 65535
    %v2426 = vshra.s32 %v2424, 16
    %v2427 = vcvt.s32.f32 %v2425
    %v2428 = vcvt.s32.f32 %v2426
    %2429 = vmin.xlane.f32.xlu0 %v2428
    %v2430 = vpop.xlane.xlu0 %2429
    %vm2431 = vcmp.eq.f32.partialorder %v2428, %v2430
    %v2432 = vsel %vm2431, %v2427, inf
    %2433 = vmin.xlane.f32.xlu0 %v2432
    %v2434 = vpop.xlane.xlu0 %2433
    %v2435 = vcvt.f32.s32 %v2434
    %v2436 = vcvt.f32.s32 %v2430
    %v2437 = vshll.u32 %v2436, 16
    %v2438 = vadd.s32 %v2437, %v2435
    %v2439 = vrot.slane %v2438, 4
    %vm2440 = vcmp.lt.s32.totalorder %v2438, %v2439
    %v2441 = vsel %vm2440, %v2438, %v2439
    %v2442 = vrot.slane %v2441, 2
    %vm2443 = vcmp.lt.s32.totalorder %v2441, %v2442
    %v2444 = vsel %vm2443, %v2441, %v2442
    %v2445 = vrot.slane %v2444, 1
    %vm2446 = vcmp.lt.s32.totalorder %v2444, %v2445
    %v2447 = vsel %vm2446, %v2444, %v2445
    %s2448 = vtos %v2447
    %v2449 = vstv %s2448
    %vm2450 = vcmp.eq.s32.totalorder %v245, %v2449
    %vm2451 = vcmp.eq.s32.totalorder %v246, %v2449
    %v2452 = vsel %vm2450, 1, 0
    %v2453 = vsel %vm2451, 1, 0
    %vm2454 = vcmp.eq.s32.totalorder %v2452, 1
    %vm2455 = vcmp.eq.s32.totalorder %v2453, 1
    %v2456 = vsel %vm2454, %v242, 0.0
    %v2457 = vsel %vm2455, %v243, 0.0
    %v2458 = vadd.f32 %v2456, %v2457
    %2459 = vadd.xlane.f32.xlu0 %v2458
    %v2460 = vpop.xlane.xlu0 %2459
    %v2462 = vrot.slane %v2460, 7
    %v2464 = vmax.f32 %v180, %v2462
    %v2465 = vmax.f32 %v181, %v2462
    %v2466 = vrot.slane %v2460, 1
    %v2468 = vmax.f32 %v180, %v2466
    %v2469 = vmax.f32 %v181, %v2466
    %v2470 = vmin.f32 %v182, %v2466
    %v2471 = vmin.f32 %v183, %v2466
    %v2472 = vrot.slane %v2460, 3
    %v2474 = vmin.f32 %v182, %v2472
    %v2475 = vmin.f32 %v183, %v2472
    %v2476 = vsub.f32 %v2470, %v2464
    %v2477 = vsub.f32 %v2471, %v2465
    %v2478 = vmax.f32 %v2476, 0.0
    %v2479 = vmax.f32 %v2477, 0.0
    %v2480 = vsub.f32 %v2474, %v2468
    %v2481 = vsub.f32 %v2475, %v2469
    %v2482 = vmax.f32 %v2480, 0.0
    %v2483 = vmax.f32 %v2481, 0.0
    %v2486 = vrot.slane %v2482, 7
    %v2487 = vrot.slane %v2483, 7
    %v2490 = vmul.f32 %v2478, %v2486
    %v2491 = vmul.f32 %v2479, %v2487
    %v2492 = vrot.slane %v2460, 5
    %v2494 = vadd.f32 %v192, %v2492
    %v2495 = vadd.f32 %v193, %v2492
    %v2496 = vsub.f32 %v2494, %v2490
    %v2497 = vsub.f32 %v2495, %v2491
    %v2498 = vmax.f32 %v2496, 1e-09
    %v2499 = vmax.f32 %v2497, 1e-09
    %v2500 = vrcp.pop %v2498
    %v2501 = vmul.f32 %v2490, %v2500
    %v2502 = vrcp.pop %v2499
    %v2503 = vmul.f32 %v2491, %v2502
    %vm2504 = vcmp.gt.f32.partialorder %v2501, 0.45
    %vm2505 = vcmp.gt.f32.partialorder %v2503, 0.45
    %vm2506 = vmor %vm2504, %vm2450
    %vm2507 = vmor %vm2505, %vm2451
    %s2508 = scalar_select %p2411, 1, 0
    %v2509 = vstv %s2508
    %vm2510 = vcmp.eq.s32.totalorder %v2509, 1
    %vm2511 = vmand %vm2510, %vm2506
    %vm2512 = vmand %vm2510, %vm2507
    %v2513 = vsel %vm2511, -1.0, %v2394
    %v2514 = vsel %vm2512, -1.0, %v2395
    %vm2515 = vcmp.eq.s32.totalorder %v245, 18
    %vm2516 = vmand %vm2515, %vm2510
    %v2517 = vsel %vm2516, %v2460, %v2398
    %v2518 = vsel %vm375, %v2513, -inf
    %v2519 = vsel %vm375, %v2514, -inf
    %v2520 = vmax.f32 %v2518, %v2519
    %2521 = vmax.xlane.f32.xlu0 %v2520
    %v2522 = vpop.xlane.xlu0 %2521
    %v2523 = vrot.slane %v2522, 4
    %v2524 = vmax.f32 %v2522, %v2523
    %v2525 = vrot.slane %v2524, 2
    %v2526 = vmax.f32 %v2524, %v2525
    %v2527 = vrot.slane %v2526, 1
    %v2528 = vmax.f32 %v2526, %v2527
    %s2529 = vtos %v2528
    %p2530 = scmp.gt.f32.partialorder %s2529, 0.0
    %v2531 = vstv %s2529
    %vm2532 = vcmp.eq.f32.partialorder %v2513, %v2531
    %vm2533 = vcmp.eq.f32.partialorder %v2514, %v2531
    %vm2534 = vcmp.gt.f32.partialorder %v2513, 0.0
    %vm2535 = vcmp.gt.f32.partialorder %v2514, 0.0
    %vm2536 = vmand %vm2532, %vm2534
    %vm2537 = vmand %vm2533, %vm2535
    %v2538 = vsel %vm2536, %v245, 256
    %v2539 = vsel %vm2537, %v246, 256
    %v2540 = vsel %vm375, %v2538, 2147483647
    %v2541 = vsel %vm375, %v2539, 2147483647
    %vm2542 = vcmp.lt.s32.totalorder %v2540, %v2541
    %v2543 = vsel %vm2542, %v2540, %v2541
    %v2544 = vand.u32 %v2543, 65535
    %v2545 = vshra.s32 %v2543, 16
    %v2546 = vcvt.s32.f32 %v2544
    %v2547 = vcvt.s32.f32 %v2545
    %2548 = vmin.xlane.f32.xlu0 %v2547
    %v2549 = vpop.xlane.xlu0 %2548
    %vm2550 = vcmp.eq.f32.partialorder %v2547, %v2549
    %v2551 = vsel %vm2550, %v2546, inf
    %2552 = vmin.xlane.f32.xlu0 %v2551
    %v2553 = vpop.xlane.xlu0 %2552
    %v2554 = vcvt.f32.s32 %v2553
    %v2555 = vcvt.f32.s32 %v2549
    %v2556 = vshll.u32 %v2555, 16
    %v2557 = vadd.s32 %v2556, %v2554
    %v2558 = vrot.slane %v2557, 4
    %vm2559 = vcmp.lt.s32.totalorder %v2557, %v2558
    %v2560 = vsel %vm2559, %v2557, %v2558
    %v2561 = vrot.slane %v2560, 2
    %vm2562 = vcmp.lt.s32.totalorder %v2560, %v2561
    %v2563 = vsel %vm2562, %v2560, %v2561
    %v2564 = vrot.slane %v2563, 1
    %vm2565 = vcmp.lt.s32.totalorder %v2563, %v2564
    %v2566 = vsel %vm2565, %v2563, %v2564
    %s2567 = vtos %v2566
    %v2568 = vstv %s2567
    %vm2569 = vcmp.eq.s32.totalorder %v245, %v2568
    %vm2570 = vcmp.eq.s32.totalorder %v246, %v2568
    %v2571 = vsel %vm2569, 1, 0
    %v2572 = vsel %vm2570, 1, 0
    %vm2573 = vcmp.eq.s32.totalorder %v2571, 1
    %vm2574 = vcmp.eq.s32.totalorder %v2572, 1
    %v2575 = vsel %vm2573, %v242, 0.0
    %v2576 = vsel %vm2574, %v243, 0.0
    %v2577 = vadd.f32 %v2575, %v2576
    %2578 = vadd.xlane.f32.xlu0 %v2577
    %v2579 = vpop.xlane.xlu0 %2578
    %vm2580 = vcmp.eq.s32.totalorder %v245, 19
    %s2581 = scalar_select %p2530, 1, 0
    %v2582 = vstv %s2581
    %vm2583 = vcmp.eq.s32.totalorder %v2582, 1
    %vm2584 = vmand %vm2580, %vm2583
    %v2585 = vsel %vm2584, %v2579, %v2517
    %2586 = vst [vmem:[#allocation2] sm:$0xff] %v2585
    // Predicated region
    $region14: #{tpu_custom_call.1} parent=1 // pred_check
      _
    $region15: #{tpu_custom_call.1} parent=1 // pred_check_branch
      %2588 = sbr.rel (0) target = $region17
    $region16: #{tpu_custom_call.1} parent=1 // pred_region
      %s2590 = ssub.s32 128, 128
      %2591 = vsyncadd [#allocation3], %s2590
      %s2593 = sshll.u32 [#allocation2], 4
      %s2594 = int_to_ptr.vmem [resolvable:$true] %s2593
      %2596 = dma.vmem_to_hbm [thread:$0]  %s2594, 128, %s3, [#allocation3]
    $region17: #{tpu_custom_call.1} parent=1 // pred_fallthru
      _
    // Predicated region
    $region18: #{tpu_custom_call.1} parent=1 // pred_check
      _
    $region19: #{tpu_custom_call.1} parent=1 // pred_check_branch
      %2598 = sbr.rel (0) target = $region21
    $region20: #{tpu_custom_call.1} parent=1 // pred_region
      %2599 = dma.done [#allocation3], 128
    $region21: #{tpu_custom_call.1} parent=1 // pred_fallthru
      _
    %2600 = vsyncpa [#allocation3], 1

</llo_original>
